<compile_context>
chip_gen: v6e
topology: v6e:2x2x1
jax: 0.10.0
libtpu: 0.0.40
codegen_flags: <defaults>
</compile_context>

<pallas_src>
import math
import functools

import jax
import jax.numpy as jnp
from jax.experimental import pallas as pl

# ---- hyperparameters (the PyTorch module reads these as globals) ----
D_MODEL = 32
D_K = 16
D_V = 16
N_HEAD = 4
D_FF = 64
BATCH = 2
SEQ = 8


def encoder_layer_kernel(x_ref, mbias_ref, wqkv_ref, bqkv_ref, wo_ref,
                         w1_ref, b1_ref, w2_ref, vec_ref,
                         out_ref, attn_ref, *, batch, seq):
    """Whole EncoderLayer forward for the full (flattened) batch.

    x_ref    : (B*S, D_MODEL)       activations, rows ordered (b, s)
    mbias_ref: (B, S, S)            additive attention bias (0 / -1e9)
    wqkv_ref : (3*H, D_MODEL, D_K)  head-major Q|K|V projection weights
    bqkv_ref : (3*H, D_K)           head-major Q|K|V projection biases
    wo_ref   : (H, D_V, D_MODEL)    head-major output-projection weight
    w1_ref   : (D_MODEL, D_FF)      FFN fc1 weight
    b1_ref   : (1, D_FF)            FFN fc1 bias
    w2_ref   : (D_FF, D_MODEL)      FFN fc2 weight
    vec_ref  : (4, D_MODEL)         rows: [b_out, ln_gamma, ln_beta, b_fc2]
    out_ref  : (B*S, D_MODEL)
    attn_ref : (B, H, S, S)
    """
    x2 = x_ref[...]                      # (B*S, D)
    mbias = mbias_ref[...]               # (B, S, S)
    wqkv = wqkv_ref[...]                 # (3H, D, K)
    bqkv = bqkv_ref[...]                 # (3H, K)
    wo = wo_ref[...]                     # (H, V, D)
    vec = vec_ref[...]                   # (4, D)

    inv_sqrt_dk = 1.0 / math.sqrt(D_K)

    # residual + output-projection bias; per-head projections accumulate into it
    y = x2 + vec[0:1, :]
    attn_heads = []
    for h in range(N_HEAD):              # static unroll; leading-axis indexing only
        qh = jnp.dot(x2, wqkv[h],
                     preferred_element_type=jnp.float32) + bqkv[h:h + 1]
        kh = jnp.dot(x2, wqkv[N_HEAD + h],
                     preferred_element_type=jnp.float32) + bqkv[N_HEAD + h:N_HEAD + h + 1]
        vh = jnp.dot(x2, wqkv[2 * N_HEAD + h],
                     preferred_element_type=jnp.float32) + bqkv[2 * N_HEAD + h:2 * N_HEAD + h + 1]

        qh3 = qh.reshape(batch, seq, D_K)        # leading-dim split only (cheap)
        kh3 = kh.reshape(batch, seq, D_K)
        vh3 = vh.reshape(batch, seq, D_V)

        scores = jnp.einsum('bqc,bkc->bqk', qh3, kh3,
                            preferred_element_type=jnp.float32) * inv_sqrt_dk + mbias
        m = jnp.max(scores, axis=-1, keepdims=True)
        e = jnp.exp(scores - m)
        attn = e * pl.reciprocal(jnp.sum(e, axis=-1, keepdims=True), approx=True)
        attn_heads.append(attn)

        ctx = jnp.einsum('bqk,bkc->bqc', attn, vh3,
                         preferred_element_type=jnp.float32)        # (B, S, V)
        y = y + jnp.dot(ctx.reshape(batch * seq, D_V), wo[h],
                        preferred_element_type=jnp.float32)

    # single store for the whole attention map
    attn_ref[...] = jnp.stack(attn_heads, axis=1)                   # (B, H, S, S)

    # LayerNorm (eps matches nn.LayerNorm default)
    mu = jnp.mean(y, axis=-1, keepdims=True)
    var = jnp.mean((y - mu) * (y - mu), axis=-1, keepdims=True)
    y = (y - mu) * jax.lax.rsqrt(var + 1e-5)
    y = y * vec[1:2, :] + vec[2:3, :]

    # position-wise feed-forward (no residual / norm in the reference)
    h1 = jnp.maximum(
        jnp.dot(y, w1_ref[...], preferred_element_type=jnp.float32) + b1_ref[...], 0.0)
    out_ref[...] = jnp.dot(h1, w2_ref[...],
                           preferred_element_type=jnp.float32) + vec[3:4, :]


def encoder_layer(x, mask, params):
    """x: (B, S, D_MODEL) f32; mask: (B, S, S) int (nonzero == masked key)."""
    B, S, D = x.shape
    (wq, bq, wk, bk, wv, bv, wo, bo, lng, lnb, w1, b1, w2, b2) = params

    # --- wrapper-side packing (plain XLA ops, outside the kernel) ---
    x_flat = x.reshape(B * S, D)
    mask_bias = mask.astype(jnp.float32) * jnp.float32(-1e9)        # additive bias

    def head_major(w):                       # (D, H*dk) -> (H, D, dk)
        return w.reshape(D, N_HEAD, -1).transpose(1, 0, 2)

    wqkv = jnp.concatenate([head_major(wq), head_major(wk), head_major(wv)],
                           axis=0)                                  # (3H, D, dk)
    bqkv = jnp.concatenate([bq.reshape(N_HEAD, D_K),
                            bk.reshape(N_HEAD, D_K),
                            bv.reshape(N_HEAD, D_V)], axis=0)       # (3H, dk)
    wo_h = wo.reshape(N_HEAD, D_V, D)                               # (H, dv, D)
    vec = jnp.stack([bo, lng, lnb, b2], axis=0)                     # (4, D)
    b1_2d = b1.reshape(1, D_FF)

    kernel = functools.partial(encoder_layer_kernel, batch=B, seq=S)

    out_flat, attn = pl.pallas_call(
        kernel,
        out_shape=[
            jax.ShapeDtypeStruct((B * S, D), jnp.float32),
            jax.ShapeDtypeStruct((B, N_HEAD, S, S), jnp.float32),
        ],
    )(x_flat, mask_bias, wqkv, bqkv, wo_h, w1, b1_2d, w2, vec)

    return out_flat.reshape(B, S, D), attn


def init_params(key):
    ks = jax.random.split(key, 8)
    scale = 0.05
    wq = scale * jax.random.normal(ks[0], (D_MODEL, N_HEAD * D_K), jnp.float32)
    wk = scale * jax.random.normal(ks[1], (D_MODEL, N_HEAD * D_K), jnp.float32)
    wv = scale * jax.random.normal(ks[2], (D_MODEL, N_HEAD * D_V), jnp.float32)
    wo = scale * jax.random.normal(ks[3], (N_HEAD * D_V, D_MODEL), jnp.float32)
    w1 = scale * jax.random.normal(ks[4], (D_MODEL, D_FF), jnp.float32)
    w2 = scale * jax.random.normal(ks[5], (D_FF, D_MODEL), jnp.float32)
    bq = 0.01 * jax.random.normal(ks[6], (N_HEAD * D_K,), jnp.float32)
    bk = jnp.zeros((N_HEAD * D_K,), jnp.float32)
    bv = jnp.zeros((N_HEAD * D_V,), jnp.float32)
    bo = 0.01 * jax.random.normal(ks[7], (D_MODEL,), jnp.float32)
    lng = jnp.ones((D_MODEL,), jnp.float32)     # LayerNorm weight (default init)
    lnb = jnp.zeros((D_MODEL,), jnp.float32)    # LayerNorm bias   (default init)
    b1 = jnp.zeros((D_FF,), jnp.float32)
    b2 = jnp.zeros((D_MODEL,), jnp.float32)
    return (wq, bq, wk, bk, wv, bv, wo, bo, lng, lnb, w1, b1, w2, b2)


if __name__ == "__main__":
    key = jax.random.PRNGKey(0)
    kx, kp = jax.random.split(key)

    x = jax.random.normal(kx, (BATCH, SEQ, D_MODEL), jnp.float32)
    # Padding-style mask: mask out the last two key positions of batch 1.
    mask = jnp.zeros((BATCH, SEQ, SEQ), jnp.int32)
    mask = mask.at[1, :, SEQ - 2:].set(1)

    params = init_params(kp)

    enc_out, attn_map = encoder_layer(x, mask, params)
    jax.block_until_ready((enc_out, attn_map))

    assert enc_out.shape == (BATCH, SEQ, D_MODEL)
    assert attn_map.shape == (BATCH, N_HEAD, SEQ, SEQ)
    print("KERNEL_OK")
</pallas_src>

<mosaic_0001>
module attributes {stable_mosaic.version = 11 : i64} {
  func.func @encoder_layer_kernel(%arg0: memref<16x32xf32, #tpu.memory_space<vmem>>, %arg1: memref<2x8x8xf32, #tpu.memory_space<vmem>>, %arg2: memref<12x32x16xf32, #tpu.memory_space<vmem>>, %arg3: memref<12x16xf32, #tpu.memory_space<vmem>>, %arg4: memref<4x16x32xf32, #tpu.memory_space<vmem>>, %arg5: memref<32x64xf32, #tpu.memory_space<vmem>>, %arg6: memref<1x64xf32, #tpu.memory_space<vmem>>, %arg7: memref<64x32xf32, #tpu.memory_space<vmem>>, %arg8: memref<4x32xf32, #tpu.memory_space<vmem>>, %arg9: memref<16x32xf32, #tpu.memory_space<vmem>>, %arg10: memref<2x4x8x8xf32, #tpu.memory_space<vmem>>) attributes {dimension_semantics = [], scalar_prefetch = 0 : i64, scratch_operands = 0 : i64, tpu.core_type = #tpu.core_type<tc>} {
    %c0 = arith.constant 0 : index
    %c0_0 = arith.constant 0 : index
    %0 = vector.load %arg0[%c0, %c0_0] : memref<16x32xf32, #tpu.memory_space<vmem>>, vector<16x32xf32>
    %c0_1 = arith.constant 0 : index
    %c0_2 = arith.constant 0 : index
    %c0_3 = arith.constant 0 : index
    %1 = vector.load %arg1[%c0_1, %c0_2, %c0_3] : memref<2x8x8xf32, #tpu.memory_space<vmem>>, vector<2x8x8xf32>
    %c0_4 = arith.constant 0 : index
    %c0_5 = arith.constant 0 : index
    %c0_6 = arith.constant 0 : index
    %2 = vector.load %arg2[%c0_4, %c0_5, %c0_6] : memref<12x32x16xf32, #tpu.memory_space<vmem>>, vector<12x32x16xf32>
    %c0_7 = arith.constant 0 : index
    %c0_8 = arith.constant 0 : index
    %3 = vector.load %arg3[%c0_7, %c0_8] : memref<12x16xf32, #tpu.memory_space<vmem>>, vector<12x16xf32>
    %c0_9 = arith.constant 0 : index
    %c0_10 = arith.constant 0 : index
    %c0_11 = arith.constant 0 : index
    %4 = vector.load %arg4[%c0_9, %c0_10, %c0_11] : memref<4x16x32xf32, #tpu.memory_space<vmem>>, vector<4x16x32xf32>
    %c0_12 = arith.constant 0 : index
    %c0_13 = arith.constant 0 : index
    %5 = vector.load %arg8[%c0_12, %c0_13] : memref<4x32xf32, #tpu.memory_space<vmem>>, vector<4x32xf32>
    %6 = vector.extract_strided_slice %5 {offsets = [0, 0], sizes = [1, 32], strides = [1, 1]} : vector<4x32xf32> to vector<1x32xf32>
    %7 = vector.broadcast %6 : vector<1x32xf32> to vector<16x32xf32>
    %8 = arith.addf %0, %7 : vector<16x32xf32>
    %9 = vector.extract_strided_slice %2 {offsets = [0, 0, 0], sizes = [1, 32, 16], strides = [1, 1, 1]} : vector<12x32x16xf32> to vector<1x32x16xf32>
    %10 = vector.shape_cast %9 : vector<1x32x16xf32> to vector<32x16xf32>
    %cst = arith.constant dense<0.000000e+00> : vector<16x16xf32>
    %11 = tpu.matmul %0, %10, %cst {dimension_numbers = #tpu.dot_dimension_numbers<[1], [0], [0], [1], [0, 0, 1, 1], [], []>} : vector<16x32xf32>, vector<32x16xf32>, vector<16x16xf32> -> vector<16x16xf32>
    %12 = vector.extract_strided_slice %3 {offsets = [0, 0], sizes = [1, 16], strides = [1, 1]} : vector<12x16xf32> to vector<1x16xf32>
    %13 = vector.broadcast %12 : vector<1x16xf32> to vector<16x16xf32>
    %14 = arith.addf %11, %13 : vector<16x16xf32>
    %15 = vector.extract_strided_slice %2 {offsets = [4, 0, 0], sizes = [1, 32, 16], strides = [1, 1, 1]} : vector<12x32x16xf32> to vector<1x32x16xf32>
    %16 = vector.shape_cast %15 : vector<1x32x16xf32> to vector<32x16xf32>
    %cst_14 = arith.constant dense<0.000000e+00> : vector<16x16xf32>
    %17 = tpu.matmul %0, %16, %cst_14 {dimension_numbers = #tpu.dot_dimension_numbers<[1], [0], [0], [1], [0, 0, 1, 1], [], []>} : vector<16x32xf32>, vector<32x16xf32>, vector<16x16xf32> -> vector<16x16xf32>
    %18 = vector.extract_strided_slice %3 {offsets = [4, 0], sizes = [1, 16], strides = [1, 1]} : vector<12x16xf32> to vector<1x16xf32>
    %19 = vector.broadcast %18 : vector<1x16xf32> to vector<16x16xf32>
    %20 = arith.addf %17, %19 : vector<16x16xf32>
    %21 = vector.extract_strided_slice %2 {offsets = [8, 0, 0], sizes = [1, 32, 16], strides = [1, 1, 1]} : vector<12x32x16xf32> to vector<1x32x16xf32>
    %22 = vector.shape_cast %21 : vector<1x32x16xf32> to vector<32x16xf32>
    %cst_15 = arith.constant dense<0.000000e+00> : vector<16x16xf32>
    %23 = tpu.matmul %0, %22, %cst_15 {dimension_numbers = #tpu.dot_dimension_numbers<[1], [0], [0], [1], [0, 0, 1, 1], [], []>} : vector<16x32xf32>, vector<32x16xf32>, vector<16x16xf32> -> vector<16x16xf32>
    %24 = vector.extract_strided_slice %3 {offsets = [8, 0], sizes = [1, 16], strides = [1, 1]} : vector<12x16xf32> to vector<1x16xf32>
    %25 = vector.broadcast %24 : vector<1x16xf32> to vector<16x16xf32>
    %26 = arith.addf %23, %25 : vector<16x16xf32>
    %27 = vector.shape_cast %14 : vector<16x16xf32> to vector<2x8x16xf32>
    %28 = vector.shape_cast %20 : vector<16x16xf32> to vector<2x8x16xf32>
    %29 = vector.shape_cast %26 : vector<16x16xf32> to vector<2x8x16xf32>
    "tpu.trace_start"() <{level = 10 : i32, message = "bqc,bkc->bqk"}> : () -> ()
    %cst_16 = arith.constant dense<0.000000e+00> : vector<2x8x8xf32>
    %30 = tpu.matmul %27, %28, %cst_16 {dimension_numbers = #tpu.dot_dimension_numbers<[2], [2], [1], [1], [0, 0, 0, 1, 1, 1], [0], [0]>} : vector<2x8x16xf32>, vector<2x8x16xf32>, vector<2x8x8xf32> -> vector<2x8x8xf32>
    "tpu.trace_stop"() : () -> ()
    %cst_17 = arith.constant 2.500000e-01 : f32
    %31 = vector.broadcast %cst_17 : f32 to vector<2x8x8xf32>
    %32 = arith.mulf %30, %31 : vector<2x8x8xf32>
    %33 = arith.addf %32, %1 : vector<2x8x8xf32>
    %cst_18 = arith.constant dense<0xFF800000> : vector<2x8xf32>
    %34 = vector.multi_reduction <maximumf>, %33, %cst_18 [2] : vector<2x8x8xf32> to vector<2x8xf32>
    %35 = vector.shape_cast %34 : vector<2x8xf32> to vector<2x8x1xf32>
    %36 = vector.broadcast %35 : vector<2x8x1xf32> to vector<2x8x8xf32>
    %37 = arith.subf %33, %36 : vector<2x8x8xf32>
    %38 = math.exp %37 : vector<2x8x8xf32>
    %cst_19 = arith.constant dense<0.000000e+00> : vector<2x8xf32>
    %39 = vector.multi_reduction <add>, %38, %cst_19 [2] : vector<2x8x8xf32> to vector<2x8xf32>
    %40 = vector.shape_cast %39 : vector<2x8xf32> to vector<2x8x1xf32>
    %41 = tpu.reciprocal %40 {approx = true} : vector<2x8x1xf32> -> vector<2x8x1xf32>
    %42 = vector.broadcast %41 : vector<2x8x1xf32> to vector<2x8x8xf32>
    %43 = arith.mulf %38, %42 : vector<2x8x8xf32>
    "tpu.trace_start"() <{level = 10 : i32, message = "bqk,bkc->bqc"}> : () -> ()
    %cst_20 = arith.constant dense<0.000000e+00> : vector<2x8x16xf32>
    %44 = tpu.matmul %43, %29, %cst_20 {dimension_numbers = #tpu.dot_dimension_numbers<[2], [1], [1], [2], [0, 0, 0, 1, 1, 2], [0], [0]>} : vector<2x8x8xf32>, vector<2x8x16xf32>, vector<2x8x16xf32> -> vector<2x8x16xf32>
    "tpu.trace_stop"() : () -> ()
    %45 = vector.shape_cast %44 : vector<2x8x16xf32> to vector<16x16xf32>
    %46 = vector.extract_strided_slice %4 {offsets = [0, 0, 0], sizes = [1, 16, 32], strides = [1, 1, 1]} : vector<4x16x32xf32> to vector<1x16x32xf32>
    %47 = vector.shape_cast %46 : vector<1x16x32xf32> to vector<16x32xf32>
    %cst_21 = arith.constant dense<0.000000e+00> : vector<16x32xf32>
    %48 = tpu.matmul %45, %47, %cst_21 {dimension_numbers = #tpu.dot_dimension_numbers<[1], [0], [0], [1], [0, 0, 1, 1], [], []>} : vector<16x16xf32>, vector<16x32xf32>, vector<16x32xf32> -> vector<16x32xf32>
    %49 = arith.addf %8, %48 : vector<16x32xf32>
    %50 = vector.extract_strided_slice %2 {offsets = [1, 0, 0], sizes = [1, 32, 16], strides = [1, 1, 1]} : vector<12x32x16xf32> to vector<1x32x16xf32>
    %51 = vector.shape_cast %50 : vector<1x32x16xf32> to vector<32x16xf32>
    %cst_22 = arith.constant dense<0.000000e+00> : vector<16x16xf32>
    %52 = tpu.matmul %0, %51, %cst_22 {dimension_numbers = #tpu.dot_dimension_numbers<[1], [0], [0], [1], [0, 0, 1, 1], [], []>} : vector<16x32xf32>, vector<32x16xf32>, vector<16x16xf32> -> vector<16x16xf32>
    %53 = vector.extract_strided_slice %3 {offsets = [1, 0], sizes = [1, 16], strides = [1, 1]} : vector<12x16xf32> to vector<1x16xf32>
    %54 = vector.broadcast %53 : vector<1x16xf32> to vector<16x16xf32>
    %55 = arith.addf %52, %54 : vector<16x16xf32>
    %56 = vector.extract_strided_slice %2 {offsets = [5, 0, 0], sizes = [1, 32, 16], strides = [1, 1, 1]} : vector<12x32x16xf32> to vector<1x32x16xf32>
    %57 = vector.shape_cast %56 : vector<1x32x16xf32> to vector<32x16xf32>
    %cst_23 = arith.constant dense<0.000000e+00> : vector<16x16xf32>
    %58 = tpu.matmul %0, %57, %cst_23 {dimension_numbers = #tpu.dot_dimension_numbers<[1], [0], [0], [1], [0, 0, 1, 1], [], []>} : vector<16x32xf32>, vector<32x16xf32>, vector<16x16xf32> -> vector<16x16xf32>
    %59 = vector.extract_strided_slice %3 {offsets = [5, 0], sizes = [1, 16], strides = [1, 1]} : vector<12x16xf32> to vector<1x16xf32>
    %60 = vector.broadcast %59 : vector<1x16xf32> to vector<16x16xf32>
    %61 = arith.addf %58, %60 : vector<16x16xf32>
    %62 = vector.extract_strided_slice %2 {offsets = [9, 0, 0], sizes = [1, 32, 16], strides = [1, 1, 1]} : vector<12x32x16xf32> to vector<1x32x16xf32>
    %63 = vector.shape_cast %62 : vector<1x32x16xf32> to vector<32x16xf32>
    %cst_24 = arith.constant dense<0.000000e+00> : vector<16x16xf32>
    %64 = tpu.matmul %0, %63, %cst_24 {dimension_numbers = #tpu.dot_dimension_numbers<[1], [0], [0], [1], [0, 0, 1, 1], [], []>} : vector<16x32xf32>, vector<32x16xf32>, vector<16x16xf32> -> vector<16x16xf32>
    %65 = vector.extract_strided_slice %3 {offsets = [9, 0], sizes = [1, 16], strides = [1, 1]} : vector<12x16xf32> to vector<1x16xf32>
    %66 = vector.broadcast %65 : vector<1x16xf32> to vector<16x16xf32>
    %67 = arith.addf %64, %66 : vector<16x16xf32>
    %68 = vector.shape_cast %55 : vector<16x16xf32> to vector<2x8x16xf32>
    %69 = vector.shape_cast %61 : vector<16x16xf32> to vector<2x8x16xf32>
    %70 = vector.shape_cast %67 : vector<16x16xf32> to vector<2x8x16xf32>
    "tpu.trace_start"() <{level = 10 : i32, message = "bqc,bkc->bqk"}> : () -> ()
    %cst_25 = arith.constant dense<0.000000e+00> : vector<2x8x8xf32>
    %71 = tpu.matmul %68, %69, %cst_25 {dimension_numbers = #tpu.dot_dimension_numbers<[2], [2], [1], [1], [0, 0, 0, 1, 1, 1], [0], [0]>} : vector<2x8x16xf32>, vector<2x8x16xf32>, vector<2x8x8xf32> -> vector<2x8x8xf32>
    "tpu.trace_stop"() : () -> ()
    %cst_26 = arith.constant 2.500000e-01 : f32
    %72 = vector.broadcast %cst_26 : f32 to vector<2x8x8xf32>
    %73 = arith.mulf %71, %72 : vector<2x8x8xf32>
    %74 = arith.addf %73, %1 : vector<2x8x8xf32>
    %cst_27 = arith.constant dense<0xFF800000> : vector<2x8xf32>
    %75 = vector.multi_reduction <maximumf>, %74, %cst_27 [2] : vector<2x8x8xf32> to vector<2x8xf32>
    %76 = vector.shape_cast %75 : vector<2x8xf32> to vector<2x8x1xf32>
    %77 = vector.broadcast %76 : vector<2x8x1xf32> to vector<2x8x8xf32>
    %78 = arith.subf %74, %77 : vector<2x8x8xf32>
    %79 = math.exp %78 : vector<2x8x8xf32>
    %cst_28 = arith.constant dense<0.000000e+00> : vector<2x8xf32>
    %80 = vector.multi_reduction <add>, %79, %cst_28 [2] : vector<2x8x8xf32> to vector<2x8xf32>
    %81 = vector.shape_cast %80 : vector<2x8xf32> to vector<2x8x1xf32>
    %82 = tpu.reciprocal %81 {approx = true} : vector<2x8x1xf32> -> vector<2x8x1xf32>
    %83 = vector.broadcast %82 : vector<2x8x1xf32> to vector<2x8x8xf32>
    %84 = arith.mulf %79, %83 : vector<2x8x8xf32>
    "tpu.trace_start"() <{level = 10 : i32, message = "bqk,bkc->bqc"}> : () -> ()
    %cst_29 = arith.constant dense<0.000000e+00> : vector<2x8x16xf32>
    %85 = tpu.matmul %84, %70, %cst_29 {dimension_numbers = #tpu.dot_dimension_numbers<[2], [1], [1], [2], [0, 0, 0, 1, 1, 2], [0], [0]>} : vector<2x8x8xf32>, vector<2x8x16xf32>, vector<2x8x16xf32> -> vector<2x8x16xf32>
    "tpu.trace_stop"() : () -> ()
    %86 = vector.shape_cast %85 : vector<2x8x16xf32> to vector<16x16xf32>
    %87 = vector.extract_strided_slice %4 {offsets = [1, 0, 0], sizes = [1, 16, 32], strides = [1, 1, 1]} : vector<4x16x32xf32> to vector<1x16x32xf32>
    %88 = vector.shape_cast %87 : vector<1x16x32xf32> to vector<16x32xf32>
    %cst_30 = arith.constant dense<0.000000e+00> : vector<16x32xf32>
    %89 = tpu.matmul %86, %88, %cst_30 {dimension_numbers = #tpu.dot_dimension_numbers<[1], [0], [0], [1], [0, 0, 1, 1], [], []>} : vector<16x16xf32>, vector<16x32xf32>, vector<16x32xf32> -> vector<16x32xf32>
    %90 = arith.addf %49, %89 : vector<16x32xf32>
    %91 = vector.extract_strided_slice %2 {offsets = [2, 0, 0], sizes = [1, 32, 16], strides = [1, 1, 1]} : vector<12x32x16xf32> to vector<1x32x16xf32>
    %92 = vector.shape_cast %91 : vector<1x32x16xf32> to vector<32x16xf32>
    %cst_31 = arith.constant dense<0.000000e+00> : vector<16x16xf32>
    %93 = tpu.matmul %0, %92, %cst_31 {dimension_numbers = #tpu.dot_dimension_numbers<[1], [0], [0], [1], [0, 0, 1, 1], [], []>} : vector<16x32xf32>, vector<32x16xf32>, vector<16x16xf32> -> vector<16x16xf32>
    %94 = vector.extract_strided_slice %3 {offsets = [2, 0], sizes = [1, 16], strides = [1, 1]} : vector<12x16xf32> to vector<1x16xf32>
    %95 = vector.broadcast %94 : vector<1x16xf32> to vector<16x16xf32>
    %96 = arith.addf %93, %95 : vector<16x16xf32>
    %97 = vector.extract_strided_slice %2 {offsets = [6, 0, 0], sizes = [1, 32, 16], strides = [1, 1, 1]} : vector<12x32x16xf32> to vector<1x32x16xf32>
    %98 = vector.shape_cast %97 : vector<1x32x16xf32> to vector<32x16xf32>
    %cst_32 = arith.constant dense<0.000000e+00> : vector<16x16xf32>
    %99 = tpu.matmul %0, %98, %cst_32 {dimension_numbers = #tpu.dot_dimension_numbers<[1], [0], [0], [1], [0, 0, 1, 1], [], []>} : vector<16x32xf32>, vector<32x16xf32>, vector<16x16xf32> -> vector<16x16xf32>
    %100 = vector.extract_strided_slice %3 {offsets = [6, 0], sizes = [1, 16], strides = [1, 1]} : vector<12x16xf32> to vector<1x16xf32>
    %101 = vector.broadcast %100 : vector<1x16xf32> to vector<16x16xf32>
    %102 = arith.addf %99, %101 : vector<16x16xf32>
    %103 = vector.extract_strided_slice %2 {offsets = [10, 0, 0], sizes = [1, 32, 16], strides = [1, 1, 1]} : vector<12x32x16xf32> to vector<1x32x16xf32>
    %104 = vector.shape_cast %103 : vector<1x32x16xf32> to vector<32x16xf32>
    %cst_33 = arith.constant dense<0.000000e+00> : vector<16x16xf32>
    %105 = tpu.matmul %0, %104, %cst_33 {dimension_numbers = #tpu.dot_dimension_numbers<[1], [0], [0], [1], [0, 0, 1, 1], [], []>} : vector<16x32xf32>, vector<32x16xf32>, vector<16x16xf32> -> vector<16x16xf32>
    %106 = vector.extract_strided_slice %3 {offsets = [10, 0], sizes = [1, 16], strides = [1, 1]} : vector<12x16xf32> to vector<1x16xf32>
    %107 = vector.broadcast %106 : vector<1x16xf32> to vector<16x16xf32>
    %108 = arith.addf %105, %107 : vector<16x16xf32>
    %109 = vector.shape_cast %96 : vector<16x16xf32> to vector<2x8x16xf32>
    %110 = vector.shape_cast %102 : vector<16x16xf32> to vector<2x8x16xf32>
    %111 = vector.shape_cast %108 : vector<16x16xf32> to vector<2x8x16xf32>
    "tpu.trace_start"() <{level = 10 : i32, message = "bqc,bkc->bqk"}> : () -> ()
    %cst_34 = arith.constant dense<0.000000e+00> : vector<2x8x8xf32>
    %112 = tpu.matmul %109, %110, %cst_34 {dimension_numbers = #tpu.dot_dimension_numbers<[2], [2], [1], [1], [0, 0, 0, 1, 1, 1], [0], [0]>} : vector<2x8x16xf32>, vector<2x8x16xf32>, vector<2x8x8xf32> -> vector<2x8x8xf32>
    "tpu.trace_stop"() : () -> ()
    %cst_35 = arith.constant 2.500000e-01 : f32
    %113 = vector.broadcast %cst_35 : f32 to vector<2x8x8xf32>
    %114 = arith.mulf %112, %113 : vector<2x8x8xf32>
    %115 = arith.addf %114, %1 : vector<2x8x8xf32>
    %cst_36 = arith.constant dense<0xFF800000> : vector<2x8xf32>
    %116 = vector.multi_reduction <maximumf>, %115, %cst_36 [2] : vector<2x8x8xf32> to vector<2x8xf32>
    %117 = vector.shape_cast %116 : vector<2x8xf32> to vector<2x8x1xf32>
    %118 = vector.broadcast %117 : vector<2x8x1xf32> to vector<2x8x8xf32>
    %119 = arith.subf %115, %118 : vector<2x8x8xf32>
    %120 = math.exp %119 : vector<2x8x8xf32>
    %cst_37 = arith.constant dense<0.000000e+00> : vector<2x8xf32>
    %121 = vector.multi_reduction <add>, %120, %cst_37 [2] : vector<2x8x8xf32> to vector<2x8xf32>
    %122 = vector.shape_cast %121 : vector<2x8xf32> to vector<2x8x1xf32>
    %123 = tpu.reciprocal %122 {approx = true} : vector<2x8x1xf32> -> vector<2x8x1xf32>
    %124 = vector.broadcast %123 : vector<2x8x1xf32> to vector<2x8x8xf32>
    %125 = arith.mulf %120, %124 : vector<2x8x8xf32>
    "tpu.trace_start"() <{level = 10 : i32, message = "bqk,bkc->bqc"}> : () -> ()
    %cst_38 = arith.constant dense<0.000000e+00> : vector<2x8x16xf32>
    %126 = tpu.matmul %125, %111, %cst_38 {dimension_numbers = #tpu.dot_dimension_numbers<[2], [1], [1], [2], [0, 0, 0, 1, 1, 2], [0], [0]>} : vector<2x8x8xf32>, vector<2x8x16xf32>, vector<2x8x16xf32> -> vector<2x8x16xf32>
    "tpu.trace_stop"() : () -> ()
    %127 = vector.shape_cast %126 : vector<2x8x16xf32> to vector<16x16xf32>
    %128 = vector.extract_strided_slice %4 {offsets = [2, 0, 0], sizes = [1, 16, 32], strides = [1, 1, 1]} : vector<4x16x32xf32> to vector<1x16x32xf32>
    %129 = vector.shape_cast %128 : vector<1x16x32xf32> to vector<16x32xf32>
    %cst_39 = arith.constant dense<0.000000e+00> : vector<16x32xf32>
    %130 = tpu.matmul %127, %129, %cst_39 {dimension_numbers = #tpu.dot_dimension_numbers<[1], [0], [0], [1], [0, 0, 1, 1], [], []>} : vector<16x16xf32>, vector<16x32xf32>, vector<16x32xf32> -> vector<16x32xf32>
    %131 = arith.addf %90, %130 : vector<16x32xf32>
    %132 = vector.extract_strided_slice %2 {offsets = [3, 0, 0], sizes = [1, 32, 16], strides = [1, 1, 1]} : vector<12x32x16xf32> to vector<1x32x16xf32>
    %133 = vector.shape_cast %132 : vector<1x32x16xf32> to vector<32x16xf32>
    %cst_40 = arith.constant dense<0.000000e+00> : vector<16x16xf32>
    %134 = tpu.matmul %0, %133, %cst_40 {dimension_numbers = #tpu.dot_dimension_numbers<[1], [0], [0], [1], [0, 0, 1, 1], [], []>} : vector<16x32xf32>, vector<32x16xf32>, vector<16x16xf32> -> vector<16x16xf32>
    %135 = vector.extract_strided_slice %3 {offsets = [3, 0], sizes = [1, 16], strides = [1, 1]} : vector<12x16xf32> to vector<1x16xf32>
    %136 = vector.broadcast %135 : vector<1x16xf32> to vector<16x16xf32>
    %137 = arith.addf %134, %136 : vector<16x16xf32>
    %138 = vector.extract_strided_slice %2 {offsets = [7, 0, 0], sizes = [1, 32, 16], strides = [1, 1, 1]} : vector<12x32x16xf32> to vector<1x32x16xf32>
    %139 = vector.shape_cast %138 : vector<1x32x16xf32> to vector<32x16xf32>
    %cst_41 = arith.constant dense<0.000000e+00> : vector<16x16xf32>
    %140 = tpu.matmul %0, %139, %cst_41 {dimension_numbers = #tpu.dot_dimension_numbers<[1], [0], [0], [1], [0, 0, 1, 1], [], []>} : vector<16x32xf32>, vector<32x16xf32>, vector<16x16xf32> -> vector<16x16xf32>
    %141 = vector.extract_strided_slice %3 {offsets = [7, 0], sizes = [1, 16], strides = [1, 1]} : vector<12x16xf32> to vector<1x16xf32>
    %142 = vector.broadcast %141 : vector<1x16xf32> to vector<16x16xf32>
    %143 = arith.addf %140, %142 : vector<16x16xf32>
    %144 = vector.extract_strided_slice %2 {offsets = [11, 0, 0], sizes = [1, 32, 16], strides = [1, 1, 1]} : vector<12x32x16xf32> to vector<1x32x16xf32>
    %145 = vector.shape_cast %144 : vector<1x32x16xf32> to vector<32x16xf32>
    %cst_42 = arith.constant dense<0.000000e+00> : vector<16x16xf32>
    %146 = tpu.matmul %0, %145, %cst_42 {dimension_numbers = #tpu.dot_dimension_numbers<[1], [0], [0], [1], [0, 0, 1, 1], [], []>} : vector<16x32xf32>, vector<32x16xf32>, vector<16x16xf32> -> vector<16x16xf32>
    %147 = vector.extract_strided_slice %3 {offsets = [11, 0], sizes = [1, 16], strides = [1, 1]} : vector<12x16xf32> to vector<1x16xf32>
    %148 = vector.broadcast %147 : vector<1x16xf32> to vector<16x16xf32>
    %149 = arith.addf %146, %148 : vector<16x16xf32>
    %150 = vector.shape_cast %137 : vector<16x16xf32> to vector<2x8x16xf32>
    %151 = vector.shape_cast %143 : vector<16x16xf32> to vector<2x8x16xf32>
    %152 = vector.shape_cast %149 : vector<16x16xf32> to vector<2x8x16xf32>
    "tpu.trace_start"() <{level = 10 : i32, message = "bqc,bkc->bqk"}> : () -> ()
    %cst_43 = arith.constant dense<0.000000e+00> : vector<2x8x8xf32>
    %153 = tpu.matmul %150, %151, %cst_43 {dimension_numbers = #tpu.dot_dimension_numbers<[2], [2], [1], [1], [0, 0, 0, 1, 1, 1], [0], [0]>} : vector<2x8x16xf32>, vector<2x8x16xf32>, vector<2x8x8xf32> -> vector<2x8x8xf32>
    "tpu.trace_stop"() : () -> ()
    %cst_44 = arith.constant 2.500000e-01 : f32
    %154 = vector.broadcast %cst_44 : f32 to vector<2x8x8xf32>
    %155 = arith.mulf %153, %154 : vector<2x8x8xf32>
    %156 = arith.addf %155, %1 : vector<2x8x8xf32>
    %cst_45 = arith.constant dense<0xFF800000> : vector<2x8xf32>
    %157 = vector.multi_reduction <maximumf>, %156, %cst_45 [2] : vector<2x8x8xf32> to vector<2x8xf32>
    %158 = vector.shape_cast %157 : vector<2x8xf32> to vector<2x8x1xf32>
    %159 = vector.broadcast %158 : vector<2x8x1xf32> to vector<2x8x8xf32>
    %160 = arith.subf %156, %159 : vector<2x8x8xf32>
    %161 = math.exp %160 : vector<2x8x8xf32>
    %cst_46 = arith.constant dense<0.000000e+00> : vector<2x8xf32>
    %162 = vector.multi_reduction <add>, %161, %cst_46 [2] : vector<2x8x8xf32> to vector<2x8xf32>
    %163 = vector.shape_cast %162 : vector<2x8xf32> to vector<2x8x1xf32>
    %164 = tpu.reciprocal %163 {approx = true} : vector<2x8x1xf32> -> vector<2x8x1xf32>
    %165 = vector.broadcast %164 : vector<2x8x1xf32> to vector<2x8x8xf32>
    %166 = arith.mulf %161, %165 : vector<2x8x8xf32>
    "tpu.trace_start"() <{level = 10 : i32, message = "bqk,bkc->bqc"}> : () -> ()
    %cst_47 = arith.constant dense<0.000000e+00> : vector<2x8x16xf32>
    %167 = tpu.matmul %166, %152, %cst_47 {dimension_numbers = #tpu.dot_dimension_numbers<[2], [1], [1], [2], [0, 0, 0, 1, 1, 2], [0], [0]>} : vector<2x8x8xf32>, vector<2x8x16xf32>, vector<2x8x16xf32> -> vector<2x8x16xf32>
    "tpu.trace_stop"() : () -> ()
    %168 = vector.shape_cast %167 : vector<2x8x16xf32> to vector<16x16xf32>
    %169 = vector.extract_strided_slice %4 {offsets = [3, 0, 0], sizes = [1, 16, 32], strides = [1, 1, 1]} : vector<4x16x32xf32> to vector<1x16x32xf32>
    %170 = vector.shape_cast %169 : vector<1x16x32xf32> to vector<16x32xf32>
    %cst_48 = arith.constant dense<0.000000e+00> : vector<16x32xf32>
    %171 = tpu.matmul %168, %170, %cst_48 {dimension_numbers = #tpu.dot_dimension_numbers<[1], [0], [0], [1], [0, 0, 1, 1], [], []>} : vector<16x16xf32>, vector<16x32xf32>, vector<16x32xf32> -> vector<16x32xf32>
    %172 = arith.addf %131, %171 : vector<16x32xf32>
    %173 = vector.shape_cast %43 : vector<2x8x8xf32> to vector<2x1x8x8xf32>
    %174 = vector.shape_cast %84 : vector<2x8x8xf32> to vector<2x1x8x8xf32>
    %175 = vector.shape_cast %125 : vector<2x8x8xf32> to vector<2x1x8x8xf32>
    %176 = vector.shape_cast %166 : vector<2x8x8xf32> to vector<2x1x8x8xf32>
    %177 = tpu.concatenate %173, %174, %175, %176 in 1 : vector<2x1x8x8xf32>, vector<2x1x8x8xf32>, vector<2x1x8x8xf32>, vector<2x1x8x8xf32> -> vector<2x4x8x8xf32>
    %c0_49 = arith.constant 0 : index
    %c0_50 = arith.constant 0 : index
    %c0_51 = arith.constant 0 : index
    %c0_52 = arith.constant 0 : index
    %178 = vector.load %arg10[%c0_49, %c0_50, %c0_51, %c0_52] : memref<2x4x8x8xf32, #tpu.memory_space<vmem>>, vector<2x4x8x8xf32>
    tpu.vector_store %arg10[%c0_49, %c0_50, %c0_51, %c0_52], %177 {strides = array<i32>} : memref<2x4x8x8xf32, #tpu.memory_space<vmem>>, vector<2x4x8x8xf32>,
    %cst_53 = arith.constant dense<0.000000e+00> : vector<16xf32>
    %179 = vector.multi_reduction <add>, %172, %cst_53 [1] : vector<16x32xf32> to vector<16xf32>
    %180 = vector.shape_cast %179 : vector<16xf32> to vector<16x1xf32>
    %cst_54 = arith.constant 3.200000e+01 : f32
    %181 = vector.broadcast %cst_54 : f32 to vector<16x1xf32>
    %182 = arith.divf %180, %181 : vector<16x1xf32>
    %183 = vector.broadcast %182 : vector<16x1xf32> to vector<16x32xf32>
    %184 = arith.subf %172, %183 : vector<16x32xf32>
    %185 = vector.broadcast %182 : vector<16x1xf32> to vector<16x32xf32>
    %186 = arith.subf %172, %185 : vector<16x32xf32>
    %187 = arith.mulf %184, %186 : vector<16x32xf32>
    %cst_55 = arith.constant dense<0.000000e+00> : vector<16xf32>
    %188 = vector.multi_reduction <add>, %187, %cst_55 [1] : vector<16x32xf32> to vector<16xf32>
    %189 = vector.shape_cast %188 : vector<16xf32> to vector<16x1xf32>
    %cst_56 = arith.constant 3.200000e+01 : f32
    %190 = vector.broadcast %cst_56 : f32 to vector<16x1xf32>
    %191 = arith.divf %189, %190 : vector<16x1xf32>
    %192 = vector.broadcast %182 : vector<16x1xf32> to vector<16x32xf32>
    %193 = arith.subf %172, %192 : vector<16x32xf32>
    %cst_57 = arith.constant 9.99999974E-6 : f32
    %194 = vector.broadcast %cst_57 : f32 to vector<16x1xf32>
    %195 = arith.addf %191, %194 : vector<16x1xf32>
    %196 = math.rsqrt %195 : vector<16x1xf32>
    %197 = vector.broadcast %196 : vector<16x1xf32> to vector<16x32xf32>
    %198 = arith.mulf %193, %197 : vector<16x32xf32>
    %199 = vector.extract_strided_slice %5 {offsets = [1, 0], sizes = [1, 32], strides = [1, 1]} : vector<4x32xf32> to vector<1x32xf32>
    %200 = vector.broadcast %199 : vector<1x32xf32> to vector<16x32xf32>
    %201 = arith.mulf %198, %200 : vector<16x32xf32>
    %202 = vector.extract_strided_slice %5 {offsets = [2, 0], sizes = [1, 32], strides = [1, 1]} : vector<4x32xf32> to vector<1x32xf32>
    %203 = vector.broadcast %202 : vector<1x32xf32> to vector<16x32xf32>
    %204 = arith.addf %201, %203 : vector<16x32xf32>
    %c0_58 = arith.constant 0 : index
    %c0_59 = arith.constant 0 : index
    %205 = vector.load %arg5[%c0_58, %c0_59] : memref<32x64xf32, #tpu.memory_space<vmem>>, vector<32x64xf32>
    %cst_60 = arith.constant dense<0.000000e+00> : vector<16x64xf32>
    %206 = tpu.matmul %204, %205, %cst_60 {dimension_numbers = #tpu.dot_dimension_numbers<[1], [0], [0], [1], [0, 0, 1, 1], [], []>} : vector<16x32xf32>, vector<32x64xf32>, vector<16x64xf32> -> vector<16x64xf32>
    %c0_61 = arith.constant 0 : index
    %c0_62 = arith.constant 0 : index
    %207 = vector.load %arg6[%c0_61, %c0_62] : memref<1x64xf32, #tpu.memory_space<vmem>>, vector<1x64xf32>
    %208 = vector.broadcast %207 : vector<1x64xf32> to vector<16x64xf32>
    %209 = arith.addf %206, %208 : vector<16x64xf32>
    %cst_63 = arith.constant 0.000000e+00 : f32
    %210 = vector.broadcast %cst_63 : f32 to vector<16x64xf32>
    %211 = arith.maximumf %209, %210 : vector<16x64xf32>
    %c0_64 = arith.constant 0 : index
    %c0_65 = arith.constant 0 : index
    %212 = vector.load %arg7[%c0_64, %c0_65] : memref<64x32xf32, #tpu.memory_space<vmem>>, vector<64x32xf32>
    %cst_66 = arith.constant dense<0.000000e+00> : vector<16x32xf32>
    %213 = tpu.matmul %211, %212, %cst_66 {dimension_numbers = #tpu.dot_dimension_numbers<[1], [0], [0], [1], [0, 0, 1, 1], [], []>} : vector<16x64xf32>, vector<64x32xf32>, vector<16x32xf32> -> vector<16x32xf32>
    %214 = vector.extract_strided_slice %5 {offsets = [3, 0], sizes = [1, 32], strides = [1, 1]} : vector<4x32xf32> to vector<1x32xf32>
    %215 = vector.broadcast %214 : vector<1x32xf32> to vector<16x32xf32>
    %216 = arith.addf %213, %215 : vector<16x32xf32>
    %c0_67 = arith.constant 0 : index
    %c0_68 = arith.constant 0 : index
    %217 = vector.load %arg9[%c0_67, %c0_68] : memref<16x32xf32, #tpu.memory_space<vmem>>, vector<16x32xf32>
    tpu.vector_store %arg9[%c0_67, %c0_68], %216 {strides = array<i32>} : memref<16x32xf32, #tpu.memory_space<vmem>>, vector<16x32xf32>,
    return
  }
}

</mosaic_0001>

<llo_original>
// kernel: tpu_custom_call.1
$region0: #{tpu_custom_call.1}
  #allocation0 [shape = 'u32[]', space=smem, size = 0x4, offset = 0x4, fixed_abs, tag = 'smem constant byte address 0x4 - core index']
  #allocation1 [shape = 'u32[144,128]{1,0:T(1,128)}', space=vmem, size = 0x12000, scoped, tag = 'internal scratch']
  %s0 = inlined_call_operand.vmem [shape: f32[16,32], index: 0, kind: input, shape index: {}]
  %s1 = inlined_call_operand.vmem [shape: f32[2,8,8], index: 1, kind: input, shape index: {}]
  %s2 = inlined_call_operand.vmem [shape: f32[12,32,16], index: 2, kind: input, shape index: {}]
  %s3 = inlined_call_operand.vmem [shape: f32[12,16], index: 3, kind: input, shape index: {}]
  %s4 = inlined_call_operand.vmem [shape: f32[4,16,32], index: 4, kind: input, shape index: {}]
  %s5 = inlined_call_operand.vmem [shape: f32[32,64], index: 5, kind: input, shape index: {}]
  %s6 = inlined_call_operand.vmem [shape: f32[1,64], index: 6, kind: input, shape index: {}]
  %s7 = inlined_call_operand.vmem [shape: f32[64,32], index: 7, kind: input, shape index: {}]
  %s8 = inlined_call_operand.vmem [shape: f32[4,32], index: 8, kind: input, shape index: {}]
  %s9 = inlined_call_operand.hbm [shape: f32[16,32], index: 9, kind: output, shape index: {0}]
  %s10 = inlined_call_operand.hbm [shape: f32[2,4,8,8], index: 10, kind: output, shape index: {1}]
  %11 = xla_tuple %s9, %s10
  %s12 = sld [smem:[#allocation0]]
  $region54: #{tpu_custom_call.1} parent=0
    _
  %s14 = ssub.s32 1, %s12
  %s15 = scalar_select 0, %s14, %s12
  $region1: #{tpu_custom_call.1} parent=0
    #allocation2 [shape = 'u8[8192]{0}', space=vmem, size = 0x2000, scoped, tag = 'output window, operand 0, single buffered']
    #allocation3 [shape = 's32[1]{0}', space=sflag, size = 0x4, scoped, tag = 'scoped memory for tpu_custom_call.1']
    #allocation4 [shape = 'u8[32768]{0}', space=vmem, size = 0x8000, scoped, tag = 'output window, operand 1, single buffered']
    #allocation5 [shape = 's32[1]{0}', space=sflag, size = 0x4, scoped, tag = 'scoped memory for tpu_custom_call.1']
    %16 = vsyncpa [#allocation3], 0
    %17 = vsyncpa [#allocation5], 0
    // Predicated region
    $region2: #{tpu_custom_call.1} parent=1 // pred_check
      _
    $region3: #{tpu_custom_call.1} parent=1 // pred_check_branch
      %19 = sbr.rel (0) target = $region5
    $region4: #{tpu_custom_call.1} parent=1 // pred_region
      _
    $region5: #{tpu_custom_call.1} parent=1 // pred_fallthru
      _
    // Predicated region
    $region6: #{tpu_custom_call.1} parent=1 // pred_check
      _
    $region7: #{tpu_custom_call.1} parent=1 // pred_check_branch
      %21 = sbr.rel (0) target = $region9
    $region8: #{tpu_custom_call.1} parent=1 // pred_region
      _
    $region9: #{tpu_custom_call.1} parent=1 // pred_fallthru
      _
    // Predicated region
    $region10: #{tpu_custom_call.1} parent=1 // pred_check
      _
    $region11: #{tpu_custom_call.1} parent=1 // pred_check_branch
      %23 = sbr.rel (0) target = $region13
    $region12: #{tpu_custom_call.1} parent=1 // pred_region
      _
    $region13: #{tpu_custom_call.1} parent=1 // pred_fallthru
      _
    // Predicated region
    $region14: #{tpu_custom_call.1} parent=1 // pred_check
      _
    $region15: #{tpu_custom_call.1} parent=1 // pred_check_branch
      %25 = sbr.rel (0) target = $region17
    $region16: #{tpu_custom_call.1} parent=1 // pred_region
      _
    $region17: #{tpu_custom_call.1} parent=1 // pred_fallthru
      _
    // Predicated region
    $region18: #{tpu_custom_call.1} parent=1 // pred_check
      _
    $region19: #{tpu_custom_call.1} parent=1 // pred_check_branch
      %27 = sbr.rel (0) target = $region21
    $region20: #{tpu_custom_call.1} parent=1 // pred_region
      _
    $region21: #{tpu_custom_call.1} parent=1 // pred_fallthru
      _
    // Predicated region
    $region22: #{tpu_custom_call.1} parent=1 // pred_check
      _
    $region23: #{tpu_custom_call.1} parent=1 // pred_check_branch
      %29 = sbr.rel (0) target = $region25
    $region24: #{tpu_custom_call.1} parent=1 // pred_region
      _
    $region25: #{tpu_custom_call.1} parent=1 // pred_fallthru
      _
    // Predicated region
    $region26: #{tpu_custom_call.1} parent=1 // pred_check
      _
    $region27: #{tpu_custom_call.1} parent=1 // pred_check_branch
      %31 = sbr.rel (0) target = $region29
    $region28: #{tpu_custom_call.1} parent=1 // pred_region
      _
    $region29: #{tpu_custom_call.1} parent=1 // pred_fallthru
      _
    // Predicated region
    $region30: #{tpu_custom_call.1} parent=1 // pred_check
      _
    $region31: #{tpu_custom_call.1} parent=1 // pred_check_branch
      %33 = sbr.rel (0) target = $region33
    $region32: #{tpu_custom_call.1} parent=1 // pred_region
      _
    $region33: #{tpu_custom_call.1} parent=1 // pred_fallthru
      _
    // Predicated region
    $region34: #{tpu_custom_call.1} parent=1 // pred_check
      _
    $region35: #{tpu_custom_call.1} parent=1 // pred_check_branch
      %35 = sbr.rel (0) target = $region37
    $region36: #{tpu_custom_call.1} parent=1 // pred_region
      _
    $region37: #{tpu_custom_call.1} parent=1 // pred_fallthru
      _
    %v36 = vld [vmem:[%s0] sm:$0xff]
    %v37 = vld [vmem:[%s0 + $0x8] sm:$0xff]
    %v38 = vld [vmem:[%s1] sm:$0xff]
    %v39 = vld [vmem:[%s1 + $0x8] sm:$0xff]
    %v40 = vld [vmem:[%s2] sm:$0xff]
    %v41 = vld [vmem:[%s2 + $0x8] sm:$0xff]
    %v42 = vld [vmem:[%s2 + $0x10] sm:$0xff]
    %v43 = vld [vmem:[%s2 + $0x18] sm:$0xff]
    %v44 = vld [vmem:[%s2 + $0x20] sm:$0xff]
    %v45 = vld [vmem:[%s2 + $0x28] sm:$0xff]
    %v46 = vld [vmem:[%s2 + $0x30] sm:$0xff]
    %v47 = vld [vmem:[%s2 + $0x38] sm:$0xff]
    %v48 = vld [vmem:[%s2 + $0x40] sm:$0xff]
    %v49 = vld [vmem:[%s2 + $0x48] sm:$0xff]
    %v50 = vld [vmem:[%s2 + $0x50] sm:$0xff]
    %v51 = vld [vmem:[%s2 + $0x58] sm:$0xff]
    %v52 = vld [vmem:[%s2 + $0x60] sm:$0xff]
    %v53 = vld [vmem:[%s2 + $0x68] sm:$0xff]
    %v54 = vld [vmem:[%s2 + $0x70] sm:$0xff]
    %v55 = vld [vmem:[%s2 + $0x78] sm:$0xff]
    %v56 = vld [vmem:[%s2 + $0x80] sm:$0xff]
    %v57 = vld [vmem:[%s2 + $0x88] sm:$0xff]
    %v58 = vld [vmem:[%s2 + $0x90] sm:$0xff]
    %v59 = vld [vmem:[%s2 + $0x98] sm:$0xff]
    %v60 = vld [vmem:[%s2 + $0xa0] sm:$0xff]
    %v61 = vld [vmem:[%s2 + $0xa8] sm:$0xff]
    %v62 = vld [vmem:[%s2 + $0xb0] sm:$0xff]
    %v63 = vld [vmem:[%s2 + $0xb8] sm:$0xff]
    %v64 = vld [vmem:[%s2 + $0xc0] sm:$0xff]
    %v65 = vld [vmem:[%s2 + $0xc8] sm:$0xff]
    %v66 = vld [vmem:[%s2 + $0xd0] sm:$0xff]
    %v67 = vld [vmem:[%s2 + $0xd8] sm:$0xff]
    %v68 = vld [vmem:[%s2 + $0xe0] sm:$0xff]
    %v69 = vld [vmem:[%s2 + $0xe8] sm:$0xff]
    %v70 = vld [vmem:[%s2 + $0xf0] sm:$0xff]
    %v71 = vld [vmem:[%s2 + $0xf8] sm:$0xff]
    %v72 = vld [vmem:[%s2 + $0x100] sm:$0xff]
    %v73 = vld [vmem:[%s2 + $0x108] sm:$0xff]
    %v74 = vld [vmem:[%s2 + $0x110] sm:$0xff]
    %v75 = vld [vmem:[%s2 + $0x118] sm:$0xff]
    %v76 = vld [vmem:[%s2 + $0x120] sm:$0xff]
    %v77 = vld [vmem:[%s2 + $0x128] sm:$0xff]
    %v78 = vld [vmem:[%s2 + $0x130] sm:$0xff]
    %v79 = vld [vmem:[%s2 + $0x138] sm:$0xff]
    %v80 = vld [vmem:[%s2 + $0x140] sm:$0xff]
    %v81 = vld [vmem:[%s2 + $0x148] sm:$0xff]
    %v82 = vld [vmem:[%s2 + $0x150] sm:$0xff]
    %v83 = vld [vmem:[%s2 + $0x158] sm:$0xff]
    %v84 = vld [vmem:[%s2 + $0x160] sm:$0xff]
    %v85 = vld [vmem:[%s2 + $0x168] sm:$0xff]
    %v86 = vld [vmem:[%s2 + $0x170] sm:$0xff]
    %v87 = vld [vmem:[%s2 + $0x178] sm:$0xff]
    %v88 = vld [vmem:[%s3] sm:$0xff]
    %v89 = vld [vmem:[%s3 + $0x8] sm:$0xf]
    %v90 = vld [vmem:[%s4] sm:$0xff]
    %v91 = vld [vmem:[%s4 + $0x8] sm:$0xff]
    %v92 = vld [vmem:[%s4 + $0x10] sm:$0xff]
    %v93 = vld [vmem:[%s4 + $0x18] sm:$0xff]
    %v94 = vld [vmem:[%s4 + $0x20] sm:$0xff]
    %v95 = vld [vmem:[%s4 + $0x28] sm:$0xff]
    %v96 = vld [vmem:[%s4 + $0x30] sm:$0xff]
    %v97 = vld [vmem:[%s4 + $0x38] sm:$0xff]
    %v98 = vld [vmem:[%s8] sm:$0xf]
    %v99 = vlaneseq
    %v100 = vshrl.u32 %v99, 7
    %v101 = vsub.s32 0, %v100
    %v102 = vrot.slane %v98, %v101
    %v103 = vadd.f32 %v36, %v102
    %v104 = vadd.f32 %v37, %v102
    %v105 = vlaneseq
    %v106 = vshrl.u32 %v105, 7
    %v107 = vsub.s32 0, %v106
    %v108 = vrot.slane %v88, %v107
    %vm109 = vcmask 261120
    %v111 = vsel %vm109, %v36, 0
    %v114 = vsel %vm109, %v37, 0
    %116 = vmatprep.subr.mxu0 0.0
    %117 = vmatpush1.msra.mxu0 0.0
    %118 = vmatprep.subr.mxu0 0.0
    %119 = vmatpush1.msra.mxu0 0.0
    %120 = vmatprep.subr.mxu0 0.0
    %121 = vmatpush1.msra.mxu0 0.0
    %122 = vmatprep.subr.mxu0 0.0
    %123 = vmatpush1.msra.mxu0 0.0
    %124 = vmatprep.subr.mxu0 0.0
    %125 = vmatpush1.msra.mxu0 0.0
    %126 = vmatprep.subr.mxu0 0.0
    %127 = vmatpush1.msra.mxu0 0.0
    %128 = vmatprep.subr.mxu0 0.0
    %129 = vmatpush1.msra.mxu0 0.0
    %130 = vmatprep.subr.mxu0 0.0
    %131 = vmatpush1.msra.mxu0 0.0
    %132 = vmatprep.subr.mxu0 0.0
    %133 = vmatpush1.msra.mxu0 0.0
    %134 = vmatprep.subr.mxu0 0.0
    %135 = vmatpush1.msra.mxu0 0.0
    %136 = vmatprep.subr.mxu0 0.0
    %137 = vmatpush1.msra.mxu0 0.0
    %138 = vmatprep.subr.mxu0 0.0
    %139 = vmatpush1.msra.mxu0 0.0
    %140 = vmatprep.subr.mxu0 0.0
    %141 = vmatpush1.msra.mxu0 %v43
    %142 = vmatprep.subr.mxu0 0.0
    %143 = vmatpush1.msra.mxu0 %v42
    %144 = vmatprep.subr.mxu0 0.0
    %145 = vmatpush1.msra.mxu0 %v41
    %146 = vmatprep.subr.mxu0 0.0
    %147 = vmatpush1.msra.mxu0 %v40
    %148 = vmatprep.subr.mxu0 0.0
    %149 = vmatpush2.msra.mxu0 0.0
    %150 = vmatprep.subr.mxu0 0.0
    %151 = vmatpush2.msra.mxu0 0.0
    %152 = vmatprep.subr.mxu0 0.0
    %153 = vmatpush2.msra.mxu0 0.0
    %154 = vmatprep.subr.mxu0 0.0
    %155 = vmatpush2.msra.mxu0 0.0
    %156 = vmatprep.subr.mxu0 0.0
    %157 = vmatpush2.msra.mxu0 0.0
    %158 = vmatprep.subr.mxu0 0.0
    %159 = vmatpush2.msra.mxu0 0.0
    %160 = vmatprep.subr.mxu0 0.0
    %161 = vmatpush2.msra.mxu0 0.0
    %162 = vmatprep.subr.mxu0 0.0
    %163 = vmatpush2.msra.mxu0 0.0
    %164 = vmatprep.subr.mxu0 0.0
    %165 = vmatpush2.msra.mxu0 0.0
    %166 = vmatprep.subr.mxu0 0.0
    %167 = vmatpush2.msra.mxu0 0.0
    %168 = vmatprep.subr.mxu0 0.0
    %169 = vmatpush2.msra.mxu0 0.0
    %170 = vmatprep.subr.mxu0 0.0
    %171 = vmatpush2.msra.mxu0 0.0
    %172 = vmatprep.subr.mxu0 0.0
    %173 = vmatpush2.msra.mxu0 0.0
    %174 = vmatprep.subr.mxu0 0.0
    %175 = vmatpush2.msra.mxu0 0.0
    %176 = vmatprep.subr.mxu0 0.0
    %177 = vmatpush2.msra.mxu0 0.0
    %178 = vmatprep.subr.mxu0 0.0
    %179 = vmatpush2.msra.mxu0 0.0
    %180 = vmatprep.mubr.f32.mxu0 0.0
    %181 = vmatmul.mubr.f32.gmra.mxu0 %v111
    %v182 = vpop.f32.mrf.mxu0
    %v183 = vadd.f32 %v108, %v182
    %v184 = vpop.f32.mrf.mxu0
    %185 = vmatprep.mubr.f32.mxu0 0.0
    %186 = vmatmul.mubr.f32.gmra.mxu0 %v114
    %v187 = vpop.f32.mrf.mxu0
    %v188 = vadd.f32 %v108, %v187
    %v189 = vpop.f32.mrf.mxu0
    %190 = vdwg.mxu0
    %v191 = vlaneseq
    %v192 = vshrl.u32 %v191, 7
    %v193 = vsub.s32 4, %v192
    %v194 = vrot.slane %v88, %v193
    %195 = vmatprep.subr.mxu0 0.0
    %196 = vmatpush1.msra.mxu0 0.0
    %197 = vmatprep.subr.mxu0 0.0
    %198 = vmatpush1.msra.mxu0 0.0
    %199 = vmatprep.subr.mxu0 0.0
    %200 = vmatpush1.msra.mxu0 0.0
    %201 = vmatprep.subr.mxu0 0.0
    %202 = vmatpush1.msra.mxu0 0.0
    %203 = vmatprep.subr.mxu0 0.0
    %204 = vmatpush1.msra.mxu0 0.0
    %205 = vmatprep.subr.mxu0 0.0
    %206 = vmatpush1.msra.mxu0 0.0
    %207 = vmatprep.subr.mxu0 0.0
    %208 = vmatpush1.msra.mxu0 0.0
    %209 = vmatprep.subr.mxu0 0.0
    %210 = vmatpush1.msra.mxu0 0.0
    %211 = vmatprep.subr.mxu0 0.0
    %212 = vmatpush1.msra.mxu0 0.0
    %213 = vmatprep.subr.mxu0 0.0
    %214 = vmatpush1.msra.mxu0 0.0
    %215 = vmatprep.subr.mxu0 0.0
    %216 = vmatpush1.msra.mxu0 0.0
    %217 = vmatprep.subr.mxu0 0.0
    %218 = vmatpush1.msra.mxu0 0.0
    %219 = vmatprep.subr.mxu0 0.0
    %220 = vmatpush1.msra.mxu0 %v59
    %221 = vmatprep.subr.mxu0 0.0
    %222 = vmatpush1.msra.mxu0 %v58
    %223 = vmatprep.subr.mxu0 0.0
    %224 = vmatpush1.msra.mxu0 %v57
    %225 = vmatprep.subr.mxu0 0.0
    %226 = vmatpush1.msra.mxu0 %v56
    %227 = vmatprep.subr.mxu0 0.0
    %228 = vmatpush2.msra.mxu0 0.0
    %229 = vmatprep.subr.mxu0 0.0
    %230 = vmatpush2.msra.mxu0 0.0
    %231 = vmatprep.subr.mxu0 0.0
    %232 = vmatpush2.msra.mxu0 0.0
    %233 = vmatprep.subr.mxu0 0.0
    %234 = vmatpush2.msra.mxu0 0.0
    %235 = vmatprep.subr.mxu0 0.0
    %236 = vmatpush2.msra.mxu0 0.0
    %237 = vmatprep.subr.mxu0 0.0
    %238 = vmatpush2.msra.mxu0 0.0
    %239 = vmatprep.subr.mxu0 0.0
    %240 = vmatpush2.msra.mxu0 0.0
    %241 = vmatprep.subr.mxu0 0.0
    %242 = vmatpush2.msra.mxu0 0.0
    %243 = vmatprep.subr.mxu0 0.0
    %244 = vmatpush2.msra.mxu0 0.0
    %245 = vmatprep.subr.mxu0 0.0
    %246 = vmatpush2.msra.mxu0 0.0
    %247 = vmatprep.subr.mxu0 0.0
    %248 = vmatpush2.msra.mxu0 0.0
    %249 = vmatprep.subr.mxu0 0.0
    %250 = vmatpush2.msra.mxu0 0.0
    %251 = vmatprep.subr.mxu0 0.0
    %252 = vmatpush2.msra.mxu0 0.0
    %253 = vmatprep.subr.mxu0 0.0
    %254 = vmatpush2.msra.mxu0 0.0
    %255 = vmatprep.subr.mxu0 0.0
    %256 = vmatpush2.msra.mxu0 0.0
    %257 = vmatprep.subr.mxu0 0.0
    %258 = vmatpush2.msra.mxu0 0.0
    %259 = vmatprep.mubr.f32.mxu0 0.0
    %260 = vmatmul.mubr.f32.gmra.mxu0 %v111
    %v261 = vpop.f32.mrf.mxu0
    %v262 = vadd.f32 %v194, %v261
    %v263 = vpop.f32.mrf.mxu0
    %264 = vmatprep.mubr.f32.mxu0 0.0
    %265 = vmatmul.mubr.f32.gmra.mxu0 %v114
    %v266 = vpop.f32.mrf.mxu0
    %v267 = vadd.f32 %v194, %v266
    %v268 = vpop.f32.mrf.mxu0
    %269 = vdwg.mxu0
    %v270 = vlaneseq
    %v271 = vshrl.u32 %v270, 7
    %v272 = vsub.s32 0, %v271
    %v273 = vrot.slane %v89, %v272
    %274 = vmatprep.subr.mxu0 0.0
    %275 = vmatpush1.msra.mxu0 0.0
    %276 = vmatprep.subr.mxu0 0.0
    %277 = vmatpush1.msra.mxu0 0.0
    %278 = vmatprep.subr.mxu0 0.0
    %279 = vmatpush1.msra.mxu0 0.0
    %280 = vmatprep.subr.mxu0 0.0
    %281 = vmatpush1.msra.mxu0 0.0
    %282 = vmatprep.subr.mxu0 0.0
    %283 = vmatpush1.msra.mxu0 0.0
    %284 = vmatprep.subr.mxu0 0.0
    %285 = vmatpush1.msra.mxu0 0.0
    %286 = vmatprep.subr.mxu0 0.0
    %287 = vmatpush1.msra.mxu0 0.0
    %288 = vmatprep.subr.mxu0 0.0
    %289 = vmatpush1.msra.mxu0 0.0
    %290 = vmatprep.subr.mxu0 0.0
    %291 = vmatpush1.msra.mxu0 0.0
    %292 = vmatprep.subr.mxu0 0.0
    %293 = vmatpush1.msra.mxu0 0.0
    %294 = vmatprep.subr.mxu0 0.0
    %295 = vmatpush1.msra.mxu0 0.0
    %296 = vmatprep.subr.mxu0 0.0
    %297 = vmatpush1.msra.mxu0 0.0
    %298 = vmatprep.subr.mxu0 0.0
    %299 = vmatpush1.msra.mxu0 %v75
    %300 = vmatprep.subr.mxu0 0.0
    %301 = vmatpush1.msra.mxu0 %v74
    %302 = vmatprep.subr.mxu0 0.0
    %303 = vmatpush1.msra.mxu0 %v73
    %304 = vmatprep.subr.mxu0 0.0
    %305 = vmatpush1.msra.mxu0 %v72
    %306 = vmatprep.subr.mxu0 0.0
    %307 = vmatpush2.msra.mxu0 0.0
    %308 = vmatprep.subr.mxu0 0.0
    %309 = vmatpush2.msra.mxu0 0.0
    %310 = vmatprep.subr.mxu0 0.0
    %311 = vmatpush2.msra.mxu0 0.0
    %312 = vmatprep.subr.mxu0 0.0
    %313 = vmatpush2.msra.mxu0 0.0
    %314 = vmatprep.subr.mxu0 0.0
    %315 = vmatpush2.msra.mxu0 0.0
    %316 = vmatprep.subr.mxu0 0.0
    %317 = vmatpush2.msra.mxu0 0.0
    %318 = vmatprep.subr.mxu0 0.0
    %319 = vmatpush2.msra.mxu0 0.0
    %320 = vmatprep.subr.mxu0 0.0
    %321 = vmatpush2.msra.mxu0 0.0
    %322 = vmatprep.subr.mxu0 0.0
    %323 = vmatpush2.msra.mxu0 0.0
    %324 = vmatprep.subr.mxu0 0.0
    %325 = vmatpush2.msra.mxu0 0.0
    %326 = vmatprep.subr.mxu0 0.0
    %327 = vmatpush2.msra.mxu0 0.0
    %328 = vmatprep.subr.mxu0 0.0
    %329 = vmatpush2.msra.mxu0 0.0
    %330 = vmatprep.subr.mxu0 0.0
    %331 = vmatpush2.msra.mxu0 0.0
    %332 = vmatprep.subr.mxu0 0.0
    %333 = vmatpush2.msra.mxu0 0.0
    %334 = vmatprep.subr.mxu0 0.0
    %335 = vmatpush2.msra.mxu0 0.0
    %336 = vmatprep.subr.mxu0 0.0
    %337 = vmatpush2.msra.mxu0 0.0
    %338 = vmatprep.mubr.f32.mxu0 0.0
    %339 = vmatmul.mubr.f32.gmra.mxu0 %v111
    %v340 = vpop.f32.mrf.mxu0
    %v341 = vadd.f32 %v273, %v340
    %v342 = vpop.f32.mrf.mxu0
    %343 = vmatprep.mubr.f32.mxu0 0.0
    %344 = vmatmul.mubr.f32.gmra.mxu0 %v114
    %v345 = vpop.f32.mrf.mxu0
    %v346 = vadd.f32 %v273, %v345
    %v347 = vpop.f32.mrf.mxu0
    %348 = vdwg.mxu0
    %vm349 = vcmask 130048
    %v351 = vsel %vm349, %v183, 0
    %v354 = vsel %vm349, %v262, 0
    %356 = vmatprep.subr.mxu0 0.0
    %357 = vmatpush1.xpose.msra.mxu0 0.0
    %358 = vmatprep.subr.mxu0 0.0
    %359 = vmatpush1.xpose.msra.mxu0 0.0
    %360 = vmatprep.subr.mxu0 0.0
    %361 = vmatpush1.xpose.msra.mxu0 0.0
    %362 = vmatprep.subr.mxu0 0.0
    %363 = vmatpush1.xpose.msra.mxu0 0.0
    %364 = vmatprep.subr.mxu0 0.0
    %365 = vmatpush1.xpose.msra.mxu0 0.0
    %366 = vmatprep.subr.mxu0 0.0
    %367 = vmatpush1.xpose.msra.mxu0 0.0
    %368 = vmatprep.subr.mxu0 0.0
    %369 = vmatpush1.xpose.msra.mxu0 0.0
    %370 = vmatprep.subr.mxu0 0.0
    %371 = vmatpush1.xpose.msra.mxu0 0.0
    %372 = vmatprep.subr.mxu0 0.0
    %373 = vmatpush1.xpose.msra.mxu0 0.0
    %374 = vmatprep.subr.mxu0 0.0
    %375 = vmatpush1.xpose.msra.mxu0 0.0
    %376 = vmatprep.subr.mxu0 0.0
    %377 = vmatpush1.xpose.msra.mxu0 0.0
    %378 = vmatprep.subr.mxu0 0.0
    %379 = vmatpush1.xpose.msra.mxu0 0.0
    %380 = vmatprep.subr.mxu0 0.0
    %381 = vmatpush1.xpose.msra.mxu0 0.0
    %382 = vmatprep.subr.mxu0 0.0
    %383 = vmatpush1.xpose.msra.mxu0 0.0
    %384 = vmatprep.subr.mxu0 0.0
    %385 = vmatpush1.xpose.msra.mxu0 0.0
    %386 = vmatprep.subr.mxu0 0.0
    %387 = vmatpush1.xpose.msra.mxu0 %v354
    %388 = vmatprep.subr.mxu0 0.0
    %389 = vmatpush2.xpose.msra.mxu0 0.0
    %390 = vmatprep.subr.mxu0 0.0
    %391 = vmatpush2.xpose.msra.mxu0 0.0
    %392 = vmatprep.subr.mxu0 0.0
    %393 = vmatpush2.xpose.msra.mxu0 0.0
    %394 = vmatprep.subr.mxu0 0.0
    %395 = vmatpush2.xpose.msra.mxu0 0.0
    %396 = vmatprep.subr.mxu0 0.0
    %397 = vmatpush2.xpose.msra.mxu0 0.0
    %398 = vmatprep.subr.mxu0 0.0
    %399 = vmatpush2.xpose.msra.mxu0 0.0
    %400 = vmatprep.subr.mxu0 0.0
    %401 = vmatpush2.xpose.msra.mxu0 0.0
    %402 = vmatprep.subr.mxu0 0.0
    %403 = vmatpush2.xpose.msra.mxu0 0.0
    %404 = vmatprep.subr.mxu0 0.0
    %405 = vmatpush2.xpose.msra.mxu0 0.0
    %406 = vmatprep.subr.mxu0 0.0
    %407 = vmatpush2.xpose.msra.mxu0 0.0
    %408 = vmatprep.subr.mxu0 0.0
    %409 = vmatpush2.xpose.msra.mxu0 0.0
    %410 = vmatprep.subr.mxu0 0.0
    %411 = vmatpush2.xpose.msra.mxu0 0.0
    %412 = vmatprep.subr.mxu0 0.0
    %413 = vmatpush2.xpose.msra.mxu0 0.0
    %414 = vmatprep.subr.mxu0 0.0
    %415 = vmatpush2.xpose.msra.mxu0 0.0
    %416 = vmatprep.subr.mxu0 0.0
    %417 = vmatpush2.xpose.msra.mxu0 0.0
    %418 = vmatprep.subr.mxu0 0.0
    %419 = vmatpush2.xpose.msra.mxu0 0.0
    %420 = vmatprep.mubr.f32.mxu0 0.0
    %421 = vmatmul.mubr.f32.gmra.mxu0 %v351
    %v422 = vpop.f32.mrf.mxu0
    %v423 = vadd.f32 0.0, %v422
    %v424 = vpop.f32.mrf.mxu0
    %425 = vdwg.mxu0
    %v427 = vsel %vm349, %v188, 0
    %v430 = vsel %vm349, %v267, 0
    %432 = vmatprep.subr.mxu0 0.0
    %433 = vmatpush1.xpose.msra.mxu0 0.0
    %434 = vmatprep.subr.mxu0 0.0
    %435 = vmatpush1.xpose.msra.mxu0 0.0
    %436 = vmatprep.subr.mxu0 0.0
    %437 = vmatpush1.xpose.msra.mxu0 0.0
    %438 = vmatprep.subr.mxu0 0.0
    %439 = vmatpush1.xpose.msra.mxu0 0.0
    %440 = vmatprep.subr.mxu0 0.0
    %441 = vmatpush1.xpose.msra.mxu0 0.0
    %442 = vmatprep.subr.mxu0 0.0
    %443 = vmatpush1.xpose.msra.mxu0 0.0
    %444 = vmatprep.subr.mxu0 0.0
    %445 = vmatpush1.xpose.msra.mxu0 0.0
    %446 = vmatprep.subr.mxu0 0.0
    %447 = vmatpush1.xpose.msra.mxu0 0.0
    %448 = vmatprep.subr.mxu0 0.0
    %449 = vmatpush1.xpose.msra.mxu0 0.0
    %450 = vmatprep.subr.mxu0 0.0
    %451 = vmatpush1.xpose.msra.mxu0 0.0
    %452 = vmatprep.subr.mxu0 0.0
    %453 = vmatpush1.xpose.msra.mxu0 0.0
    %454 = vmatprep.subr.mxu0 0.0
    %455 = vmatpush1.xpose.msra.mxu0 0.0
    %456 = vmatprep.subr.mxu0 0.0
    %457 = vmatpush1.xpose.msra.mxu0 0.0
    %458 = vmatprep.subr.mxu0 0.0
    %459 = vmatpush1.xpose.msra.mxu0 0.0
    %460 = vmatprep.subr.mxu0 0.0
    %461 = vmatpush1.xpose.msra.mxu0 0.0
    %462 = vmatprep.subr.mxu0 0.0
    %463 = vmatpush1.xpose.msra.mxu0 %v430
    %464 = vmatprep.subr.mxu0 0.0
    %465 = vmatpush2.xpose.msra.mxu0 0.0
    %466 = vmatprep.subr.mxu0 0.0
    %467 = vmatpush2.xpose.msra.mxu0 0.0
    %468 = vmatprep.subr.mxu0 0.0
    %469 = vmatpush2.xpose.msra.mxu0 0.0
    %470 = vmatprep.subr.mxu0 0.0
    %471 = vmatpush2.xpose.msra.mxu0 0.0
    %472 = vmatprep.subr.mxu0 0.0
    %473 = vmatpush2.xpose.msra.mxu0 0.0
    %474 = vmatprep.subr.mxu0 0.0
    %475 = vmatpush2.xpose.msra.mxu0 0.0
    %476 = vmatprep.subr.mxu0 0.0
    %477 = vmatpush2.xpose.msra.mxu0 0.0
    %478 = vmatprep.subr.mxu0 0.0
    %479 = vmatpush2.xpose.msra.mxu0 0.0
    %480 = vmatprep.subr.mxu0 0.0
    %481 = vmatpush2.xpose.msra.mxu0 0.0
    %482 = vmatprep.subr.mxu0 0.0
    %483 = vmatpush2.xpose.msra.mxu0 0.0
    %484 = vmatprep.subr.mxu0 0.0
    %485 = vmatpush2.xpose.msra.mxu0 0.0
    %486 = vmatprep.subr.mxu0 0.0
    %487 = vmatpush2.xpose.msra.mxu0 0.0
    %488 = vmatprep.subr.mxu0 0.0
    %489 = vmatpush2.xpose.msra.mxu0 0.0
    %490 = vmatprep.subr.mxu0 0.0
    %491 = vmatpush2.xpose.msra.mxu0 0.0
    %492 = vmatprep.subr.mxu0 0.0
    %493 = vmatpush2.xpose.msra.mxu0 0.0
    %494 = vmatprep.subr.mxu0 0.0
    %495 = vmatpush2.xpose.msra.mxu0 0.0
    %496 = vmatprep.mubr.f32.mxu0 0.0
    %497 = vmatmul.mubr.f32.gmra.mxu0 %v427
    %v498 = vpop.f32.mrf.mxu0
    %v499 = vadd.f32 0.0, %v498
    %v500 = vpop.f32.mrf.mxu0
    %501 = vdwg.mxu0
    %v502 = vmul.f32 %v423, 0.25
    %v503 = vmul.f32 %v499, 0.25
    %v504 = vadd.f32 %v502, %v38
    %v505 = vadd.f32 %v503, %v39
    %vm506 = vcmask 64512
    %v507 = vsel %vm506, %v504, -inf
    %508 = vmax.xlane.f32.xlu0 %v507
    %v509 = vpop.xlane.xlu0 %508
    %v510 = vsel %vm506, %v505, -inf
    %511 = vmax.xlane.f32.xlu0 %v510
    %v512 = vpop.xlane.xlu0 %511
    %v513 = vsub.f32 %v504, %v509
    %v514 = vsub.f32 %v505, %v512
    %v515 = vmul.f32 %v513, 1.442695
    %v516 = vpow.pop %v515
    %v517 = vmul.f32 %v514, 1.442695
    %v518 = vpow.pop %v517
    %v519 = vsel %vm506, %v516, 0.0
    %520 = vadd.xlane.f32.xlu0 %v519
    %v521 = vpop.xlane.xlu0 %520
    %v522 = vsel %vm506, %v518, 0.0
    %523 = vadd.xlane.f32.xlu0 %v522
    %v524 = vpop.xlane.xlu0 %523
    %v525 = vrcp.pop %v521
    %v526 = vrcp.pop %v524
    %v527 = vmul.f32 %v516, %v525
    %v528 = vmul.f32 %v518, %v526
    %v530 = vsel %vm506, %v527, 0
    %532 = vmatprep.subr.mxu0 0.0
    %533 = vmatpush1.msra.mxu0 0.0
    %534 = vmatprep.subr.mxu0 0.0
    %535 = vmatpush1.msra.mxu0 0.0
    %536 = vmatprep.subr.mxu0 0.0
    %537 = vmatpush1.msra.mxu0 0.0
    %538 = vmatprep.subr.mxu0 0.0
    %539 = vmatpush1.msra.mxu0 0.0
    %540 = vmatprep.subr.mxu0 0.0
    %541 = vmatpush1.msra.mxu0 0.0
    %542 = vmatprep.subr.mxu0 0.0
    %543 = vmatpush1.msra.mxu0 0.0
    %544 = vmatprep.subr.mxu0 0.0
    %545 = vmatpush1.msra.mxu0 0.0
    %546 = vmatprep.subr.mxu0 0.0
    %547 = vmatpush1.msra.mxu0 0.0
    %548 = vmatprep.subr.mxu0 0.0
    %549 = vmatpush1.msra.mxu0 0.0
    %550 = vmatprep.subr.mxu0 0.0
    %551 = vmatpush1.msra.mxu0 0.0
    %552 = vmatprep.subr.mxu0 0.0
    %553 = vmatpush1.msra.mxu0 0.0
    %554 = vmatprep.subr.mxu0 0.0
    %555 = vmatpush1.msra.mxu0 0.0
    %556 = vmatprep.subr.mxu0 0.0
    %557 = vmatpush1.msra.mxu0 0.0
    %558 = vmatprep.subr.mxu0 0.0
    %559 = vmatpush1.msra.mxu0 0.0
    %560 = vmatprep.subr.mxu0 0.0
    %561 = vmatpush1.msra.mxu0 0.0
    %562 = vmatprep.subr.mxu0 0.0
    %563 = vmatpush1.msra.mxu0 %v341
    %564 = vmatprep.subr.mxu0 0.0
    %565 = vmatpush2.msra.mxu0 0.0
    %566 = vmatprep.subr.mxu0 0.0
    %567 = vmatpush2.msra.mxu0 0.0
    %568 = vmatprep.subr.mxu0 0.0
    %569 = vmatpush2.msra.mxu0 0.0
    %570 = vmatprep.subr.mxu0 0.0
    %571 = vmatpush2.msra.mxu0 0.0
    %572 = vmatprep.subr.mxu0 0.0
    %573 = vmatpush2.msra.mxu0 0.0
    %574 = vmatprep.subr.mxu0 0.0
    %575 = vmatpush2.msra.mxu0 0.0
    %576 = vmatprep.subr.mxu0 0.0
    %577 = vmatpush2.msra.mxu0 0.0
    %578 = vmatprep.subr.mxu0 0.0
    %579 = vmatpush2.msra.mxu0 0.0
    %580 = vmatprep.subr.mxu0 0.0
    %581 = vmatpush2.msra.mxu0 0.0
    %582 = vmatprep.subr.mxu0 0.0
    %583 = vmatpush2.msra.mxu0 0.0
    %584 = vmatprep.subr.mxu0 0.0
    %585 = vmatpush2.msra.mxu0 0.0
    %586 = vmatprep.subr.mxu0 0.0
    %587 = vmatpush2.msra.mxu0 0.0
    %588 = vmatprep.subr.mxu0 0.0
    %589 = vmatpush2.msra.mxu0 0.0
    %590 = vmatprep.subr.mxu0 0.0
    %591 = vmatpush2.msra.mxu0 0.0
    %592 = vmatprep.subr.mxu0 0.0
    %593 = vmatpush2.msra.mxu0 0.0
    %594 = vmatprep.subr.mxu0 0.0
    %595 = vmatpush2.msra.mxu0 0.0
    %596 = vmatprep.mubr.f32.mxu0 0.0
    %597 = vmatmul.mubr.f32.gmra.mxu0 %v530
    %v598 = vpop.f32.mrf.mxu0
    %v599 = vadd.f32 0.0, %v598
    %v600 = vpop.f32.mrf.mxu0
    %601 = vdwg.mxu0
    %v603 = vsel %vm506, %v528, 0
    %605 = vmatprep.subr.mxu0 0.0
    %606 = vmatpush1.msra.mxu0 0.0
    %607 = vmatprep.subr.mxu0 0.0
    %608 = vmatpush1.msra.mxu0 0.0
    %609 = vmatprep.subr.mxu0 0.0
    %610 = vmatpush1.msra.mxu0 0.0
    %611 = vmatprep.subr.mxu0 0.0
    %612 = vmatpush1.msra.mxu0 0.0
    %613 = vmatprep.subr.mxu0 0.0
    %614 = vmatpush1.msra.mxu0 0.0
    %615 = vmatprep.subr.mxu0 0.0
    %616 = vmatpush1.msra.mxu0 0.0
    %617 = vmatprep.subr.mxu0 0.0
    %618 = vmatpush1.msra.mxu0 0.0
    %619 = vmatprep.subr.mxu0 0.0
    %620 = vmatpush1.msra.mxu0 0.0
    %621 = vmatprep.subr.mxu0 0.0
    %622 = vmatpush1.msra.mxu0 0.0
    %623 = vmatprep.subr.mxu0 0.0
    %624 = vmatpush1.msra.mxu0 0.0
    %625 = vmatprep.subr.mxu0 0.0
    %626 = vmatpush1.msra.mxu0 0.0
    %627 = vmatprep.subr.mxu0 0.0
    %628 = vmatpush1.msra.mxu0 0.0
    %629 = vmatprep.subr.mxu0 0.0
    %630 = vmatpush1.msra.mxu0 0.0
    %631 = vmatprep.subr.mxu0 0.0
    %632 = vmatpush1.msra.mxu0 0.0
    %633 = vmatprep.subr.mxu0 0.0
    %634 = vmatpush1.msra.mxu0 0.0
    %635 = vmatprep.subr.mxu0 0.0
    %636 = vmatpush1.msra.mxu0 %v346
    %637 = vmatprep.subr.mxu0 0.0
    %638 = vmatpush2.msra.mxu0 0.0
    %639 = vmatprep.subr.mxu0 0.0
    %640 = vmatpush2.msra.mxu0 0.0
    %641 = vmatprep.subr.mxu0 0.0
    %642 = vmatpush2.msra.mxu0 0.0
    %643 = vmatprep.subr.mxu0 0.0
    %644 = vmatpush2.msra.mxu0 0.0
    %645 = vmatprep.subr.mxu0 0.0
    %646 = vmatpush2.msra.mxu0 0.0
    %647 = vmatprep.subr.mxu0 0.0
    %648 = vmatpush2.msra.mxu0 0.0
    %649 = vmatprep.subr.mxu0 0.0
    %650 = vmatpush2.msra.mxu0 0.0
    %651 = vmatprep.subr.mxu0 0.0
    %652 = vmatpush2.msra.mxu0 0.0
    %653 = vmatprep.subr.mxu0 0.0
    %654 = vmatpush2.msra.mxu0 0.0
    %655 = vmatprep.subr.mxu0 0.0
    %656 = vmatpush2.msra.mxu0 0.0
    %657 = vmatprep.subr.mxu0 0.0
    %658 = vmatpush2.msra.mxu0 0.0
    %659 = vmatprep.subr.mxu0 0.0
    %660 = vmatpush2.msra.mxu0 0.0
    %661 = vmatprep.subr.mxu0 0.0
    %662 = vmatpush2.msra.mxu0 0.0
    %663 = vmatprep.subr.mxu0 0.0
    %664 = vmatpush2.msra.mxu0 0.0
    %665 = vmatprep.subr.mxu0 0.0
    %666 = vmatpush2.msra.mxu0 0.0
    %667 = vmatprep.subr.mxu0 0.0
    %668 = vmatpush2.msra.mxu0 0.0
    %669 = vmatprep.mubr.f32.mxu0 0.0
    %670 = vmatmul.mubr.f32.gmra.mxu0 %v603
    %v671 = vpop.f32.mrf.mxu0
    %v672 = vadd.f32 0.0, %v671
    %v673 = vpop.f32.mrf.mxu0
    %674 = vdwg.mxu0
    %v676 = vsel %vm349, %v599, 0
    %v679 = vsel %vm349, %v672, 0
    %681 = vmatprep.subr.mxu0 0.0
    %682 = vmatpush1.msra.mxu0 0.0
    %683 = vmatprep.subr.mxu0 0.0
    %684 = vmatpush1.msra.mxu0 0.0
    %685 = vmatprep.subr.mxu0 0.0
    %686 = vmatpush1.msra.mxu0 0.0
    %687 = vmatprep.subr.mxu0 0.0
    %688 = vmatpush1.msra.mxu0 0.0
    %689 = vmatprep.subr.mxu0 0.0
    %690 = vmatpush1.msra.mxu0 0.0
    %691 = vmatprep.subr.mxu0 0.0
    %692 = vmatpush1.msra.mxu0 0.0
    %693 = vmatprep.subr.mxu0 0.0
    %694 = vmatpush1.msra.mxu0 0.0
    %695 = vmatprep.subr.mxu0 0.0
    %696 = vmatpush1.msra.mxu0 0.0
    %697 = vmatprep.subr.mxu0 0.0
    %698 = vmatpush1.msra.mxu0 0.0
    %699 = vmatprep.subr.mxu0 0.0
    %700 = vmatpush1.msra.mxu0 0.0
    %701 = vmatprep.subr.mxu0 0.0
    %702 = vmatpush1.msra.mxu0 0.0
    %703 = vmatprep.subr.mxu0 0.0
    %704 = vmatpush1.msra.mxu0 0.0
    %705 = vmatprep.subr.mxu0 0.0
    %706 = vmatpush1.msra.mxu0 0.0
    %707 = vmatprep.subr.mxu0 0.0
    %708 = vmatpush1.msra.mxu0 0.0
    %709 = vmatprep.subr.mxu0 0.0
    %710 = vmatpush1.msra.mxu0 %v91
    %711 = vmatprep.subr.mxu0 0.0
    %712 = vmatpush1.msra.mxu0 %v90
    %713 = vmatprep.subr.mxu0 0.0
    %714 = vmatpush2.msra.mxu0 0.0
    %715 = vmatprep.subr.mxu0 0.0
    %716 = vmatpush2.msra.mxu0 0.0
    %717 = vmatprep.subr.mxu0 0.0
    %718 = vmatpush2.msra.mxu0 0.0
    %719 = vmatprep.subr.mxu0 0.0
    %720 = vmatpush2.msra.mxu0 0.0
    %721 = vmatprep.subr.mxu0 0.0
    %722 = vmatpush2.msra.mxu0 0.0
    %723 = vmatprep.subr.mxu0 0.0
    %724 = vmatpush2.msra.mxu0 0.0
    %725 = vmatprep.subr.mxu0 0.0
    %726 = vmatpush2.msra.mxu0 0.0
    %727 = vmatprep.subr.mxu0 0.0
    %728 = vmatpush2.msra.mxu0 0.0
    %729 = vmatprep.subr.mxu0 0.0
    %730 = vmatpush2.msra.mxu0 0.0
    %731 = vmatprep.subr.mxu0 0.0
    %732 = vmatpush2.msra.mxu0 0.0
    %733 = vmatprep.subr.mxu0 0.0
    %734 = vmatpush2.msra.mxu0 0.0
    %735 = vmatprep.subr.mxu0 0.0
    %736 = vmatpush2.msra.mxu0 0.0
    %737 = vmatprep.subr.mxu0 0.0
    %738 = vmatpush2.msra.mxu0 0.0
    %739 = vmatprep.subr.mxu0 0.0
    %740 = vmatpush2.msra.mxu0 0.0
    %741 = vmatprep.subr.mxu0 0.0
    %742 = vmatpush2.msra.mxu0 0.0
    %743 = vmatprep.subr.mxu0 0.0
    %744 = vmatpush2.msra.mxu0 0.0
    %745 = vmatprep.mubr.f32.mxu0 0.0
    %746 = vmatmul.mubr.f32.gmra.mxu0 %v676
    %v747 = vpop.f32.mrf.mxu0
    %v748 = vadd.f32 0.0, %v747
    %v749 = vpop.f32.mrf.mxu0
    %750 = vmatprep.mubr.f32.mxu0 0.0
    %751 = vmatmul.mubr.f32.gmra.mxu0 %v679
    %v752 = vpop.f32.mrf.mxu0
    %v753 = vadd.f32 0.0, %v752
    %v754 = vpop.f32.mrf.mxu0
    %755 = vdwg.mxu0
    %v756 = vadd.f32 %v103, %v748
    %v757 = vadd.f32 %v104, %v753
    %v758 = vlaneseq
    %v759 = vshrl.u32 %v758, 7
    %v760 = vsub.s32 1, %v759
    %v761 = vrot.slane %v88, %v760
    %762 = vmatprep.subr.mxu0 0.0
    %763 = vmatpush1.msra.mxu0 0.0
    %764 = vmatprep.subr.mxu0 0.0
    %765 = vmatpush1.msra.mxu0 0.0
    %766 = vmatprep.subr.mxu0 0.0
    %767 = vmatpush1.msra.mxu0 0.0
    %768 = vmatprep.subr.mxu0 0.0
    %769 = vmatpush1.msra.mxu0 0.0
    %770 = vmatprep.subr.mxu0 0.0
    %771 = vmatpush1.msra.mxu0 0.0
    %772 = vmatprep.subr.mxu0 0.0
    %773 = vmatpush1.msra.mxu0 0.0
    %774 = vmatprep.subr.mxu0 0.0
    %775 = vmatpush1.msra.mxu0 0.0
    %776 = vmatprep.subr.mxu0 0.0
    %777 = vmatpush1.msra.mxu0 0.0
    %778 = vmatprep.subr.mxu0 0.0
    %779 = vmatpush1.msra.mxu0 0.0
    %780 = vmatprep.subr.mxu0 0.0
    %781 = vmatpush1.msra.mxu0 0.0
    %782 = vmatprep.subr.mxu0 0.0
    %783 = vmatpush1.msra.mxu0 0.0
    %784 = vmatprep.subr.mxu0 0.0
    %785 = vmatpush1.msra.mxu0 0.0
    %786 = vmatprep.subr.mxu0 0.0
    %787 = vmatpush1.msra.mxu0 %v47
    %788 = vmatprep.subr.mxu0 0.0
    %789 = vmatpush1.msra.mxu0 %v46
    %790 = vmatprep.subr.mxu0 0.0
    %791 = vmatpush1.msra.mxu0 %v45
    %792 = vmatprep.subr.mxu0 0.0
    %793 = vmatpush1.msra.mxu0 %v44
    %794 = vmatprep.subr.mxu0 0.0
    %795 = vmatpush2.msra.mxu0 0.0
    %796 = vmatprep.subr.mxu0 0.0
    %797 = vmatpush2.msra.mxu0 0.0
    %798 = vmatprep.subr.mxu0 0.0
    %799 = vmatpush2.msra.mxu0 0.0
    %800 = vmatprep.subr.mxu0 0.0
    %801 = vmatpush2.msra.mxu0 0.0
    %802 = vmatprep.subr.mxu0 0.0
    %803 = vmatpush2.msra.mxu0 0.0
    %804 = vmatprep.subr.mxu0 0.0
    %805 = vmatpush2.msra.mxu0 0.0
    %806 = vmatprep.subr.mxu0 0.0
    %807 = vmatpush2.msra.mxu0 0.0
    %808 = vmatprep.subr.mxu0 0.0
    %809 = vmatpush2.msra.mxu0 0.0
    %810 = vmatprep.subr.mxu0 0.0
    %811 = vmatpush2.msra.mxu0 0.0
    %812 = vmatprep.subr.mxu0 0.0
    %813 = vmatpush2.msra.mxu0 0.0
    %814 = vmatprep.subr.mxu0 0.0
    %815 = vmatpush2.msra.mxu0 0.0
    %816 = vmatprep.subr.mxu0 0.0
    %817 = vmatpush2.msra.mxu0 0.0
    %818 = vmatprep.subr.mxu0 0.0
    %819 = vmatpush2.msra.mxu0 0.0
    %820 = vmatprep.subr.mxu0 0.0
    %821 = vmatpush2.msra.mxu0 0.0
    %822 = vmatprep.subr.mxu0 0.0
    %823 = vmatpush2.msra.mxu0 0.0
    %824 = vmatprep.subr.mxu0 0.0
    %825 = vmatpush2.msra.mxu0 0.0
    %826 = vmatprep.mubr.f32.mxu0 0.0
    %827 = vmatmul.mubr.f32.gmra.mxu0 %v111
    %v828 = vpop.f32.mrf.mxu0
    %v829 = vadd.f32 %v761, %v828
    %v830 = vpop.f32.mrf.mxu0
    %831 = vmatprep.mubr.f32.mxu0 0.0
    %832 = vmatmul.mubr.f32.gmra.mxu0 %v114
    %v833 = vpop.f32.mrf.mxu0
    %v834 = vadd.f32 %v761, %v833
    %v835 = vpop.f32.mrf.mxu0
    %836 = vdwg.mxu0
    %v837 = vlaneseq
    %v838 = vshrl.u32 %v837, 7
    %v839 = vsub.s32 5, %v838
    %v840 = vrot.slane %v88, %v839
    %841 = vmatprep.subr.mxu0 0.0
    %842 = vmatpush1.msra.mxu0 0.0
    %843 = vmatprep.subr.mxu0 0.0
    %844 = vmatpush1.msra.mxu0 0.0
    %845 = vmatprep.subr.mxu0 0.0
    %846 = vmatpush1.msra.mxu0 0.0
    %847 = vmatprep.subr.mxu0 0.0
    %848 = vmatpush1.msra.mxu0 0.0
    %849 = vmatprep.subr.mxu0 0.0
    %850 = vmatpush1.msra.mxu0 0.0
    %851 = vmatprep.subr.mxu0 0.0
    %852 = vmatpush1.msra.mxu0 0.0
    %853 = vmatprep.subr.mxu0 0.0
    %854 = vmatpush1.msra.mxu0 0.0
    %855 = vmatprep.subr.mxu0 0.0
    %856 = vmatpush1.msra.mxu0 0.0
    %857 = vmatprep.subr.mxu0 0.0
    %858 = vmatpush1.msra.mxu0 0.0
    %859 = vmatprep.subr.mxu0 0.0
    %860 = vmatpush1.msra.mxu0 0.0
    %861 = vmatprep.subr.mxu0 0.0
    %862 = vmatpush1.msra.mxu0 0.0
    %863 = vmatprep.subr.mxu0 0.0
    %864 = vmatpush1.msra.mxu0 0.0
    %865 = vmatprep.subr.mxu0 0.0
    %866 = vmatpush1.msra.mxu0 %v63
    %867 = vmatprep.subr.mxu0 0.0
    %868 = vmatpush1.msra.mxu0 %v62
    %869 = vmatprep.subr.mxu0 0.0
    %870 = vmatpush1.msra.mxu0 %v61
    %871 = vmatprep.subr.mxu0 0.0
    %872 = vmatpush1.msra.mxu0 %v60
    %873 = vmatprep.subr.mxu0 0.0
    %874 = vmatpush2.msra.mxu0 0.0
    %875 = vmatprep.subr.mxu0 0.0
    %876 = vmatpush2.msra.mxu0 0.0
    %877 = vmatprep.subr.mxu0 0.0
    %878 = vmatpush2.msra.mxu0 0.0
    %879 = vmatprep.subr.mxu0 0.0
    %880 = vmatpush2.msra.mxu0 0.0
    %881 = vmatprep.subr.mxu0 0.0
    %882 = vmatpush2.msra.mxu0 0.0
    %883 = vmatprep.subr.mxu0 0.0
    %884 = vmatpush2.msra.mxu0 0.0
    %885 = vmatprep.subr.mxu0 0.0
    %886 = vmatpush2.msra.mxu0 0.0
    %887 = vmatprep.subr.mxu0 0.0
    %888 = vmatpush2.msra.mxu0 0.0
    %889 = vmatprep.subr.mxu0 0.0
    %890 = vmatpush2.msra.mxu0 0.0
    %891 = vmatprep.subr.mxu0 0.0
    %892 = vmatpush2.msra.mxu0 0.0
    %893 = vmatprep.subr.mxu0 0.0
    %894 = vmatpush2.msra.mxu0 0.0
    %895 = vmatprep.subr.mxu0 0.0
    %896 = vmatpush2.msra.mxu0 0.0
    %897 = vmatprep.subr.mxu0 0.0
    %898 = vmatpush2.msra.mxu0 0.0
    %899 = vmatprep.subr.mxu0 0.0
    %900 = vmatpush2.msra.mxu0 0.0
    %901 = vmatprep.subr.mxu0 0.0
    %902 = vmatpush2.msra.mxu0 0.0
    %903 = vmatprep.subr.mxu0 0.0
    %904 = vmatpush2.msra.mxu0 0.0
    %905 = vmatprep.mubr.f32.mxu0 0.0
    %906 = vmatmul.mubr.f32.gmra.mxu0 %v111
    %v907 = vpop.f32.mrf.mxu0
    %v908 = vadd.f32 %v840, %v907
    %v909 = vpop.f32.mrf.mxu0
    %910 = vmatprep.mubr.f32.mxu0 0.0
    %911 = vmatmul.mubr.f32.gmra.mxu0 %v114
    %v912 = vpop.f32.mrf.mxu0
    %v913 = vadd.f32 %v840, %v912
    %v914 = vpop.f32.mrf.mxu0
    %915 = vdwg.mxu0
    %v916 = vlaneseq
    %v917 = vshrl.u32 %v916, 7
    %v918 = vsub.s32 1, %v917
    %v919 = vrot.slane %v89, %v918
    %920 = vmatprep.subr.mxu0 0.0
    %921 = vmatpush1.msra.mxu0 0.0
    %922 = vmatprep.subr.mxu0 0.0
    %923 = vmatpush1.msra.mxu0 0.0
    %924 = vmatprep.subr.mxu0 0.0
    %925 = vmatpush1.msra.mxu0 0.0
    %926 = vmatprep.subr.mxu0 0.0
    %927 = vmatpush1.msra.mxu0 0.0
    %928 = vmatprep.subr.mxu0 0.0
    %929 = vmatpush1.msra.mxu0 0.0
    %930 = vmatprep.subr.mxu0 0.0
    %931 = vmatpush1.msra.mxu0 0.0
    %932 = vmatprep.subr.mxu0 0.0
    %933 = vmatpush1.msra.mxu0 0.0
    %934 = vmatprep.subr.mxu0 0.0
    %935 = vmatpush1.msra.mxu0 0.0
    %936 = vmatprep.subr.mxu0 0.0
    %937 = vmatpush1.msra.mxu0 0.0
    %938 = vmatprep.subr.mxu0 0.0
    %939 = vmatpush1.msra.mxu0 0.0
    %940 = vmatprep.subr.mxu0 0.0
    %941 = vmatpush1.msra.mxu0 0.0
    %942 = vmatprep.subr.mxu0 0.0
    %943 = vmatpush1.msra.mxu0 0.0
    %944 = vmatprep.subr.mxu0 0.0
    %945 = vmatpush1.msra.mxu0 %v79
    %946 = vmatprep.subr.mxu0 0.0
    %947 = vmatpush1.msra.mxu0 %v78
    %948 = vmatprep.subr.mxu0 0.0
    %949 = vmatpush1.msra.mxu0 %v77
    %950 = vmatprep.subr.mxu0 0.0
    %951 = vmatpush1.msra.mxu0 %v76
    %952 = vmatprep.subr.mxu0 0.0
    %953 = vmatpush2.msra.mxu0 0.0
    %954 = vmatprep.subr.mxu0 0.0
    %955 = vmatpush2.msra.mxu0 0.0
    %956 = vmatprep.subr.mxu0 0.0
    %957 = vmatpush2.msra.mxu0 0.0
    %958 = vmatprep.subr.mxu0 0.0
    %959 = vmatpush2.msra.mxu0 0.0
    %960 = vmatprep.subr.mxu0 0.0
    %961 = vmatpush2.msra.mxu0 0.0
    %962 = vmatprep.subr.mxu0 0.0
    %963 = vmatpush2.msra.mxu0 0.0
    %964 = vmatprep.subr.mxu0 0.0
    %965 = vmatpush2.msra.mxu0 0.0
    %966 = vmatprep.subr.mxu0 0.0
    %967 = vmatpush2.msra.mxu0 0.0
    %968 = vmatprep.subr.mxu0 0.0
    %969 = vmatpush2.msra.mxu0 0.0
    %970 = vmatprep.subr.mxu0 0.0
    %971 = vmatpush2.msra.mxu0 0.0
    %972 = vmatprep.subr.mxu0 0.0
    %973 = vmatpush2.msra.mxu0 0.0
    %974 = vmatprep.subr.mxu0 0.0
    %975 = vmatpush2.msra.mxu0 0.0
    %976 = vmatprep.subr.mxu0 0.0
    %977 = vmatpush2.msra.mxu0 0.0
    %978 = vmatprep.subr.mxu0 0.0
    %979 = vmatpush2.msra.mxu0 0.0
    %980 = vmatprep.subr.mxu0 0.0
    %981 = vmatpush2.msra.mxu0 0.0
    %982 = vmatprep.subr.mxu0 0.0
    %983 = vmatpush2.msra.mxu0 0.0
    %984 = vmatprep.mubr.f32.mxu0 0.0
    %985 = vmatmul.mubr.f32.gmra.mxu0 %v111
    %v986 = vpop.f32.mrf.mxu0
    %v987 = vadd.f32 %v919, %v986
    %v988 = vpop.f32.mrf.mxu0
    %989 = vmatprep.mubr.f32.mxu0 0.0
    %990 = vmatmul.mubr.f32.gmra.mxu0 %v114
    %v991 = vpop.f32.mrf.mxu0
    %v992 = vadd.f32 %v919, %v991
    %v993 = vpop.f32.mrf.mxu0
    %994 = vdwg.mxu0
    %v996 = vsel %vm349, %v829, 0
    %v999 = vsel %vm349, %v908, 0
    %1001 = vmatprep.subr.mxu0 0.0
    %1002 = vmatpush1.xpose.msra.mxu0 0.0
    %1003 = vmatprep.subr.mxu0 0.0
    %1004 = vmatpush1.xpose.msra.mxu0 0.0
    %1005 = vmatprep.subr.mxu0 0.0
    %1006 = vmatpush1.xpose.msra.mxu0 0.0
    %1007 = vmatprep.subr.mxu0 0.0
    %1008 = vmatpush1.xpose.msra.mxu0 0.0
    %1009 = vmatprep.subr.mxu0 0.0
    %1010 = vmatpush1.xpose.msra.mxu0 0.0
    %1011 = vmatprep.subr.mxu0 0.0
    %1012 = vmatpush1.xpose.msra.mxu0 0.0
    %1013 = vmatprep.subr.mxu0 0.0
    %1014 = vmatpush1.xpose.msra.mxu0 0.0
    %1015 = vmatprep.subr.mxu0 0.0
    %1016 = vmatpush1.xpose.msra.mxu0 0.0
    %1017 = vmatprep.subr.mxu0 0.0
    %1018 = vmatpush1.xpose.msra.mxu0 0.0
    %1019 = vmatprep.subr.mxu0 0.0
    %1020 = vmatpush1.xpose.msra.mxu0 0.0
    %1021 = vmatprep.subr.mxu0 0.0
    %1022 = vmatpush1.xpose.msra.mxu0 0.0
    %1023 = vmatprep.subr.mxu0 0.0
    %1024 = vmatpush1.xpose.msra.mxu0 0.0
    %1025 = vmatprep.subr.mxu0 0.0
    %1026 = vmatpush1.xpose.msra.mxu0 0.0
    %1027 = vmatprep.subr.mxu0 0.0
    %1028 = vmatpush1.xpose.msra.mxu0 0.0
    %1029 = vmatprep.subr.mxu0 0.0
    %1030 = vmatpush1.xpose.msra.mxu0 0.0
    %1031 = vmatprep.subr.mxu0 0.0
    %1032 = vmatpush1.xpose.msra.mxu0 %v999
    %1033 = vmatprep.subr.mxu0 0.0
    %1034 = vmatpush2.xpose.msra.mxu0 0.0
    %1035 = vmatprep.subr.mxu0 0.0
    %1036 = vmatpush2.xpose.msra.mxu0 0.0
    %1037 = vmatprep.subr.mxu0 0.0
    %1038 = vmatpush2.xpose.msra.mxu0 0.0
    %1039 = vmatprep.subr.mxu0 0.0
    %1040 = vmatpush2.xpose.msra.mxu0 0.0
    %1041 = vmatprep.subr.mxu0 0.0
    %1042 = vmatpush2.xpose.msra.mxu0 0.0
    %1043 = vmatprep.subr.mxu0 0.0
    %1044 = vmatpush2.xpose.msra.mxu0 0.0
    %1045 = vmatprep.subr.mxu0 0.0
    %1046 = vmatpush2.xpose.msra.mxu0 0.0
    %1047 = vmatprep.subr.mxu0 0.0
    %1048 = vmatpush2.xpose.msra.mxu0 0.0
    %1049 = vmatprep.subr.mxu0 0.0
    %1050 = vmatpush2.xpose.msra.mxu0 0.0
    %1051 = vmatprep.subr.mxu0 0.0
    %1052 = vmatpush2.xpose.msra.mxu0 0.0
    %1053 = vmatprep.subr.mxu0 0.0
    %1054 = vmatpush2.xpose.msra.mxu0 0.0
    %1055 = vmatprep.subr.mxu0 0.0
    %1056 = vmatpush2.xpose.msra.mxu0 0.0
    %1057 = vmatprep.subr.mxu0 0.0
    %1058 = vmatpush2.xpose.msra.mxu0 0.0
    %1059 = vmatprep.subr.mxu0 0.0
    %1060 = vmatpush2.xpose.msra.mxu0 0.0
    %1061 = vmatprep.subr.mxu0 0.0
    %1062 = vmatpush2.xpose.msra.mxu0 0.0
    %1063 = vmatprep.subr.mxu0 0.0
    %1064 = vmatpush2.xpose.msra.mxu0 0.0
    %1065 = vmatprep.mubr.f32.mxu0 0.0
    %1066 = vmatmul.mubr.f32.gmra.mxu0 %v996
    %v1067 = vpop.f32.mrf.mxu0
    %v1068 = vadd.f32 0.0, %v1067
    %v1069 = vpop.f32.mrf.mxu0
    %1070 = vdwg.mxu0
    %v1072 = vsel %vm349, %v834, 0
    %v1075 = vsel %vm349, %v913, 0
    %1077 = vmatprep.subr.mxu0 0.0
    %1078 = vmatpush1.xpose.msra.mxu0 0.0
    %1079 = vmatprep.subr.mxu0 0.0
    %1080 = vmatpush1.xpose.msra.mxu0 0.0
    %1081 = vmatprep.subr.mxu0 0.0
    %1082 = vmatpush1.xpose.msra.mxu0 0.0
    %1083 = vmatprep.subr.mxu0 0.0
    %1084 = vmatpush1.xpose.msra.mxu0 0.0
    %1085 = vmatprep.subr.mxu0 0.0
    %1086 = vmatpush1.xpose.msra.mxu0 0.0
    %1087 = vmatprep.subr.mxu0 0.0
    %1088 = vmatpush1.xpose.msra.mxu0 0.0
    %1089 = vmatprep.subr.mxu0 0.0
    %1090 = vmatpush1.xpose.msra.mxu0 0.0
    %1091 = vmatprep.subr.mxu0 0.0
    %1092 = vmatpush1.xpose.msra.mxu0 0.0
    %1093 = vmatprep.subr.mxu0 0.0
    %1094 = vmatpush1.xpose.msra.mxu0 0.0
    %1095 = vmatprep.subr.mxu0 0.0
    %1096 = vmatpush1.xpose.msra.mxu0 0.0
    %1097 = vmatprep.subr.mxu0 0.0
    %1098 = vmatpush1.xpose.msra.mxu0 0.0
    %1099 = vmatprep.subr.mxu0 0.0
    %1100 = vmatpush1.xpose.msra.mxu0 0.0
    %1101 = vmatprep.subr.mxu0 0.0
    %1102 = vmatpush1.xpose.msra.mxu0 0.0
    %1103 = vmatprep.subr.mxu0 0.0
    %1104 = vmatpush1.xpose.msra.mxu0 0.0
    %1105 = vmatprep.subr.mxu0 0.0
    %1106 = vmatpush1.xpose.msra.mxu0 0.0
    %1107 = vmatprep.subr.mxu0 0.0
    %1108 = vmatpush1.xpose.msra.mxu0 %v1075
    %1109 = vmatprep.subr.mxu0 0.0
    %1110 = vmatpush2.xpose.msra.mxu0 0.0
    %1111 = vmatprep.subr.mxu0 0.0
    %1112 = vmatpush2.xpose.msra.mxu0 0.0
    %1113 = vmatprep.subr.mxu0 0.0
    %1114 = vmatpush2.xpose.msra.mxu0 0.0
    %1115 = vmatprep.subr.mxu0 0.0
    %1116 = vmatpush2.xpose.msra.mxu0 0.0
    %1117 = vmatprep.subr.mxu0 0.0
    %1118 = vmatpush2.xpose.msra.mxu0 0.0
    %1119 = vmatprep.subr.mxu0 0.0
    %1120 = vmatpush2.xpose.msra.mxu0 0.0
    %1121 = vmatprep.subr.mxu0 0.0
    %1122 = vmatpush2.xpose.msra.mxu0 0.0
    %1123 = vmatprep.subr.mxu0 0.0
    %1124 = vmatpush2.xpose.msra.mxu0 0.0
    %1125 = vmatprep.subr.mxu0 0.0
    %1126 = vmatpush2.xpose.msra.mxu0 0.0
    %1127 = vmatprep.subr.mxu0 0.0
    %1128 = vmatpush2.xpose.msra.mxu0 0.0
    %1129 = vmatprep.subr.mxu0 0.0
    %1130 = vmatpush2.xpose.msra.mxu0 0.0
    %1131 = vmatprep.subr.mxu0 0.0
    %1132 = vmatpush2.xpose.msra.mxu0 0.0
    %1133 = vmatprep.subr.mxu0 0.0
    %1134 = vmatpush2.xpose.msra.mxu0 0.0
    %1135 = vmatprep.subr.mxu0 0.0
    %1136 = vmatpush2.xpose.msra.mxu0 0.0
    %1137 = vmatprep.subr.mxu0 0.0
    %1138 = vmatpush2.xpose.msra.mxu0 0.0
    %1139 = vmatprep.subr.mxu0 0.0
    %1140 = vmatpush2.xpose.msra.mxu0 0.0
    %1141 = vmatprep.mubr.f32.mxu0 0.0
    %1142 = vmatmul.mubr.f32.gmra.mxu0 %v1072
    %v1143 = vpop.f32.mrf.mxu0
    %v1144 = vadd.f32 0.0, %v1143
    %v1145 = vpop.f32.mrf.mxu0
    %1146 = vdwg.mxu0
    %v1147 = vmul.f32 %v1068, 0.25
    %v1148 = vmul.f32 %v1144, 0.25
    %v1149 = vadd.f32 %v1147, %v38
    %v1150 = vadd.f32 %v1148, %v39
    %v1151 = vsel %vm506, %v1149, -inf
    %1152 = vmax.xlane.f32.xlu0 %v1151
    %v1153 = vpop.xlane.xlu0 %1152
    %v1154 = vsel %vm506, %v1150, -inf
    %1155 = vmax.xlane.f32.xlu0 %v1154
    %v1156 = vpop.xlane.xlu0 %1155
    %v1157 = vsub.f32 %v1149, %v1153
    %v1158 = vsub.f32 %v1150, %v1156
    %v1159 = vmul.f32 %v1157, 1.442695
    %v1160 = vpow.pop %v1159
    %v1161 = vmul.f32 %v1158, 1.442695
    %v1162 = vpow.pop %v1161
    %v1163 = vsel %vm506, %v1160, 0.0
    %1164 = vadd.xlane.f32.xlu0 %v1163
    %v1165 = vpop.xlane.xlu0 %1164
    %v1166 = vsel %vm506, %v1162, 0.0
    %1167 = vadd.xlane.f32.xlu0 %v1166
    %v1168 = vpop.xlane.xlu0 %1167
    %v1169 = vrcp.pop %v1165
    %v1170 = vrcp.pop %v1168
    %v1171 = vmul.f32 %v1160, %v1169
    %v1172 = vmul.f32 %v1162, %v1170
    %v1174 = vsel %vm506, %v1171, 0
    %1176 = vmatprep.subr.mxu0 0.0
    %1177 = vmatpush1.msra.mxu0 0.0
    %1178 = vmatprep.subr.mxu0 0.0
    %1179 = vmatpush1.msra.mxu0 0.0
    %1180 = vmatprep.subr.mxu0 0.0
    %1181 = vmatpush1.msra.mxu0 0.0
    %1182 = vmatprep.subr.mxu0 0.0
    %1183 = vmatpush1.msra.mxu0 0.0
    %1184 = vmatprep.subr.mxu0 0.0
    %1185 = vmatpush1.msra.mxu0 0.0
    %1186 = vmatprep.subr.mxu0 0.0
    %1187 = vmatpush1.msra.mxu0 0.0
    %1188 = vmatprep.subr.mxu0 0.0
    %1189 = vmatpush1.msra.mxu0 0.0
    %1190 = vmatprep.subr.mxu0 0.0
    %1191 = vmatpush1.msra.mxu0 0.0
    %1192 = vmatprep.subr.mxu0 0.0
    %1193 = vmatpush1.msra.mxu0 0.0
    %1194 = vmatprep.subr.mxu0 0.0
    %1195 = vmatpush1.msra.mxu0 0.0
    %1196 = vmatprep.subr.mxu0 0.0
    %1197 = vmatpush1.msra.mxu0 0.0
    %1198 = vmatprep.subr.mxu0 0.0
    %1199 = vmatpush1.msra.mxu0 0.0
    %1200 = vmatprep.subr.mxu0 0.0
    %1201 = vmatpush1.msra.mxu0 0.0
    %1202 = vmatprep.subr.mxu0 0.0
    %1203 = vmatpush1.msra.mxu0 0.0
    %1204 = vmatprep.subr.mxu0 0.0
    %1205 = vmatpush1.msra.mxu0 0.0
    %1206 = vmatprep.subr.mxu0 0.0
    %1207 = vmatpush1.msra.mxu0 %v987
    %1208 = vmatprep.subr.mxu0 0.0
    %1209 = vmatpush2.msra.mxu0 0.0
    %1210 = vmatprep.subr.mxu0 0.0
    %1211 = vmatpush2.msra.mxu0 0.0
    %1212 = vmatprep.subr.mxu0 0.0
    %1213 = vmatpush2.msra.mxu0 0.0
    %1214 = vmatprep.subr.mxu0 0.0
    %1215 = vmatpush2.msra.mxu0 0.0
    %1216 = vmatprep.subr.mxu0 0.0
    %1217 = vmatpush2.msra.mxu0 0.0
    %1218 = vmatprep.subr.mxu0 0.0
    %1219 = vmatpush2.msra.mxu0 0.0
    %1220 = vmatprep.subr.mxu0 0.0
    %1221 = vmatpush2.msra.mxu0 0.0
    %1222 = vmatprep.subr.mxu0 0.0
    %1223 = vmatpush2.msra.mxu0 0.0
    %1224 = vmatprep.subr.mxu0 0.0
    %1225 = vmatpush2.msra.mxu0 0.0
    %1226 = vmatprep.subr.mxu0 0.0
    %1227 = vmatpush2.msra.mxu0 0.0
    %1228 = vmatprep.subr.mxu0 0.0
    %1229 = vmatpush2.msra.mxu0 0.0
    %1230 = vmatprep.subr.mxu0 0.0
    %1231 = vmatpush2.msra.mxu0 0.0
    %1232 = vmatprep.subr.mxu0 0.0
    %1233 = vmatpush2.msra.mxu0 0.0
    %1234 = vmatprep.subr.mxu0 0.0
    %1235 = vmatpush2.msra.mxu0 0.0
    %1236 = vmatprep.subr.mxu0 0.0
    %1237 = vmatpush2.msra.mxu0 0.0
    %1238 = vmatprep.subr.mxu0 0.0
    %1239 = vmatpush2.msra.mxu0 0.0
    %1240 = vmatprep.mubr.f32.mxu0 0.0
    %1241 = vmatmul.mubr.f32.gmra.mxu0 %v1174
    %v1242 = vpop.f32.mrf.mxu0
    %v1243 = vadd.f32 0.0, %v1242
    %v1244 = vpop.f32.mrf.mxu0
    %1245 = vdwg.mxu0
    %v1247 = vsel %vm506, %v1172, 0
    %1249 = vmatprep.subr.mxu0 0.0
    %1250 = vmatpush1.msra.mxu0 0.0
    %1251 = vmatprep.subr.mxu0 0.0
    %1252 = vmatpush1.msra.mxu0 0.0
    %1253 = vmatprep.subr.mxu0 0.0
    %1254 = vmatpush1.msra.mxu0 0.0
    %1255 = vmatprep.subr.mxu0 0.0
    %1256 = vmatpush1.msra.mxu0 0.0
    %1257 = vmatprep.subr.mxu0 0.0
    %1258 = vmatpush1.msra.mxu0 0.0
    %1259 = vmatprep.subr.mxu0 0.0
    %1260 = vmatpush1.msra.mxu0 0.0
    %1261 = vmatprep.subr.mxu0 0.0
    %1262 = vmatpush1.msra.mxu0 0.0
    %1263 = vmatprep.subr.mxu0 0.0
    %1264 = vmatpush1.msra.mxu0 0.0
    %1265 = vmatprep.subr.mxu0 0.0
    %1266 = vmatpush1.msra.mxu0 0.0
    %1267 = vmatprep.subr.mxu0 0.0
    %1268 = vmatpush1.msra.mxu0 0.0
    %1269 = vmatprep.subr.mxu0 0.0
    %1270 = vmatpush1.msra.mxu0 0.0
    %1271 = vmatprep.subr.mxu0 0.0
    %1272 = vmatpush1.msra.mxu0 0.0
    %1273 = vmatprep.subr.mxu0 0.0
    %1274 = vmatpush1.msra.mxu0 0.0
    %1275 = vmatprep.subr.mxu0 0.0
    %1276 = vmatpush1.msra.mxu0 0.0
    %1277 = vmatprep.subr.mxu0 0.0
    %1278 = vmatpush1.msra.mxu0 0.0
    %1279 = vmatprep.subr.mxu0 0.0
    %1280 = vmatpush1.msra.mxu0 %v992
    %1281 = vmatprep.subr.mxu0 0.0
    %1282 = vmatpush2.msra.mxu0 0.0
    %1283 = vmatprep.subr.mxu0 0.0
    %1284 = vmatpush2.msra.mxu0 0.0
    %1285 = vmatprep.subr.mxu0 0.0
    %1286 = vmatpush2.msra.mxu0 0.0
    %1287 = vmatprep.subr.mxu0 0.0
    %1288 = vmatpush2.msra.mxu0 0.0
    %1289 = vmatprep.subr.mxu0 0.0
    %1290 = vmatpush2.msra.mxu0 0.0
    %1291 = vmatprep.subr.mxu0 0.0
    %1292 = vmatpush2.msra.mxu0 0.0
    %1293 = vmatprep.subr.mxu0 0.0
    %1294 = vmatpush2.msra.mxu0 0.0
    %1295 = vmatprep.subr.mxu0 0.0
    %1296 = vmatpush2.msra.mxu0 0.0
    %1297 = vmatprep.subr.mxu0 0.0
    %1298 = vmatpush2.msra.mxu0 0.0
    %1299 = vmatprep.subr.mxu0 0.0
    %1300 = vmatpush2.msra.mxu0 0.0
    %1301 = vmatprep.subr.mxu0 0.0
    %1302 = vmatpush2.msra.mxu0 0.0
    %1303 = vmatprep.subr.mxu0 0.0
    %1304 = vmatpush2.msra.mxu0 0.0
    %1305 = vmatprep.subr.mxu0 0.0
    %1306 = vmatpush2.msra.mxu0 0.0
    %1307 = vmatprep.subr.mxu0 0.0
    %1308 = vmatpush2.msra.mxu0 0.0
    %1309 = vmatprep.subr.mxu0 0.0
    %1310 = vmatpush2.msra.mxu0 0.0
    %1311 = vmatprep.subr.mxu0 0.0
    %1312 = vmatpush2.msra.mxu0 0.0
    %1313 = vmatprep.mubr.f32.mxu0 0.0
    %1314 = vmatmul.mubr.f32.gmra.mxu0 %v1247
    %v1315 = vpop.f32.mrf.mxu0
    %v1316 = vadd.f32 0.0, %v1315
    %v1317 = vpop.f32.mrf.mxu0
    %1318 = vdwg.mxu0
    %v1320 = vsel %vm349, %v1243, 0
    %v1323 = vsel %vm349, %v1316, 0
    %1325 = vmatprep.subr.mxu0 0.0
    %1326 = vmatpush1.msra.mxu0 0.0
    %1327 = vmatprep.subr.mxu0 0.0
    %1328 = vmatpush1.msra.mxu0 0.0
    %1329 = vmatprep.subr.mxu0 0.0
    %1330 = vmatpush1.msra.mxu0 0.0
    %1331 = vmatprep.subr.mxu0 0.0
    %1332 = vmatpush1.msra.mxu0 0.0
    %1333 = vmatprep.subr.mxu0 0.0
    %1334 = vmatpush1.msra.mxu0 0.0
    %1335 = vmatprep.subr.mxu0 0.0
    %1336 = vmatpush1.msra.mxu0 0.0
    %1337 = vmatprep.subr.mxu0 0.0
    %1338 = vmatpush1.msra.mxu0 0.0
    %1339 = vmatprep.subr.mxu0 0.0
    %1340 = vmatpush1.msra.mxu0 0.0
    %1341 = vmatprep.subr.mxu0 0.0
    %1342 = vmatpush1.msra.mxu0 0.0
    %1343 = vmatprep.subr.mxu0 0.0
    %1344 = vmatpush1.msra.mxu0 0.0
    %1345 = vmatprep.subr.mxu0 0.0
    %1346 = vmatpush1.msra.mxu0 0.0
    %1347 = vmatprep.subr.mxu0 0.0
    %1348 = vmatpush1.msra.mxu0 0.0
    %1349 = vmatprep.subr.mxu0 0.0
    %1350 = vmatpush1.msra.mxu0 0.0
    %1351 = vmatprep.subr.mxu0 0.0
    %1352 = vmatpush1.msra.mxu0 0.0
    %1353 = vmatprep.subr.mxu0 0.0
    %1354 = vmatpush1.msra.mxu0 %v93
    %1355 = vmatprep.subr.mxu0 0.0
    %1356 = vmatpush1.msra.mxu0 %v92
    %1357 = vmatprep.subr.mxu0 0.0
    %1358 = vmatpush2.msra.mxu0 0.0
    %1359 = vmatprep.subr.mxu0 0.0
    %1360 = vmatpush2.msra.mxu0 0.0
    %1361 = vmatprep.subr.mxu0 0.0
    %1362 = vmatpush2.msra.mxu0 0.0
    %1363 = vmatprep.subr.mxu0 0.0
    %1364 = vmatpush2.msra.mxu0 0.0
    %1365 = vmatprep.subr.mxu0 0.0
    %1366 = vmatpush2.msra.mxu0 0.0
    %1367 = vmatprep.subr.mxu0 0.0
    %1368 = vmatpush2.msra.mxu0 0.0
    %1369 = vmatprep.subr.mxu0 0.0
    %1370 = vmatpush2.msra.mxu0 0.0
    %1371 = vmatprep.subr.mxu0 0.0
    %1372 = vmatpush2.msra.mxu0 0.0
    %1373 = vmatprep.subr.mxu0 0.0
    %1374 = vmatpush2.msra.mxu0 0.0
    %1375 = vmatprep.subr.mxu0 0.0
    %1376 = vmatpush2.msra.mxu0 0.0
    %1377 = vmatprep.subr.mxu0 0.0
    %1378 = vmatpush2.msra.mxu0 0.0
    %1379 = vmatprep.subr.mxu0 0.0
    %1380 = vmatpush2.msra.mxu0 0.0
    %1381 = vmatprep.subr.mxu0 0.0
    %1382 = vmatpush2.msra.mxu0 0.0
    %1383 = vmatprep.subr.mxu0 0.0
    %1384 = vmatpush2.msra.mxu0 0.0
    %1385 = vmatprep.subr.mxu0 0.0
    %1386 = vmatpush2.msra.mxu0 0.0
    %1387 = vmatprep.subr.mxu0 0.0
    %1388 = vmatpush2.msra.mxu0 0.0
    %1389 = vmatprep.mubr.f32.mxu0 0.0
    %1390 = vmatmul.mubr.f32.gmra.mxu0 %v1320
    %v1391 = vpop.f32.mrf.mxu0
    %v1392 = vadd.f32 0.0, %v1391
    %v1393 = vpop.f32.mrf.mxu0
    %1394 = vmatprep.mubr.f32.mxu0 0.0
    %1395 = vmatmul.mubr.f32.gmra.mxu0 %v1323
    %v1396 = vpop.f32.mrf.mxu0
    %v1397 = vadd.f32 0.0, %v1396
    %v1398 = vpop.f32.mrf.mxu0
    %1399 = vdwg.mxu0
    %v1400 = vadd.f32 %v756, %v1392
    %v1401 = vadd.f32 %v757, %v1397
    %v1402 = vlaneseq
    %v1403 = vshrl.u32 %v1402, 7
    %v1404 = vsub.s32 2, %v1403
    %v1405 = vrot.slane %v88, %v1404
    %1406 = vmatprep.subr.mxu0 0.0
    %1407 = vmatpush1.msra.mxu0 0.0
    %1408 = vmatprep.subr.mxu0 0.0
    %1409 = vmatpush1.msra.mxu0 0.0
    %1410 = vmatprep.subr.mxu0 0.0
    %1411 = vmatpush1.msra.mxu0 0.0
    %1412 = vmatprep.subr.mxu0 0.0
    %1413 = vmatpush1.msra.mxu0 0.0
    %1414 = vmatprep.subr.mxu0 0.0
    %1415 = vmatpush1.msra.mxu0 0.0
    %1416 = vmatprep.subr.mxu0 0.0
    %1417 = vmatpush1.msra.mxu0 0.0
    %1418 = vmatprep.subr.mxu0 0.0
    %1419 = vmatpush1.msra.mxu0 0.0
    %1420 = vmatprep.subr.mxu0 0.0
    %1421 = vmatpush1.msra.mxu0 0.0
    %1422 = vmatprep.subr.mxu0 0.0
    %1423 = vmatpush1.msra.mxu0 0.0
    %1424 = vmatprep.subr.mxu0 0.0
    %1425 = vmatpush1.msra.mxu0 0.0
    %1426 = vmatprep.subr.mxu0 0.0
    %1427 = vmatpush1.msra.mxu0 0.0
    %1428 = vmatprep.subr.mxu0 0.0
    %1429 = vmatpush1.msra.mxu0 0.0
    %1430 = vmatprep.subr.mxu0 0.0
    %1431 = vmatpush1.msra.mxu0 %v51
    %1432 = vmatprep.subr.mxu0 0.0
    %1433 = vmatpush1.msra.mxu0 %v50
    %1434 = vmatprep.subr.mxu0 0.0
    %1435 = vmatpush1.msra.mxu0 %v49
    %1436 = vmatprep.subr.mxu0 0.0
    %1437 = vmatpush1.msra.mxu0 %v48
    %1438 = vmatprep.subr.mxu0 0.0
    %1439 = vmatpush2.msra.mxu0 0.0
    %1440 = vmatprep.subr.mxu0 0.0
    %1441 = vmatpush2.msra.mxu0 0.0
    %1442 = vmatprep.subr.mxu0 0.0
    %1443 = vmatpush2.msra.mxu0 0.0
    %1444 = vmatprep.subr.mxu0 0.0
    %1445 = vmatpush2.msra.mxu0 0.0
    %1446 = vmatprep.subr.mxu0 0.0
    %1447 = vmatpush2.msra.mxu0 0.0
    %1448 = vmatprep.subr.mxu0 0.0
    %1449 = vmatpush2.msra.mxu0 0.0
    %1450 = vmatprep.subr.mxu0 0.0
    %1451 = vmatpush2.msra.mxu0 0.0
    %1452 = vmatprep.subr.mxu0 0.0
    %1453 = vmatpush2.msra.mxu0 0.0
    %1454 = vmatprep.subr.mxu0 0.0
    %1455 = vmatpush2.msra.mxu0 0.0
    %1456 = vmatprep.subr.mxu0 0.0
    %1457 = vmatpush2.msra.mxu0 0.0
    %1458 = vmatprep.subr.mxu0 0.0
    %1459 = vmatpush2.msra.mxu0 0.0
    %1460 = vmatprep.subr.mxu0 0.0
    %1461 = vmatpush2.msra.mxu0 0.0
    %1462 = vmatprep.subr.mxu0 0.0
    %1463 = vmatpush2.msra.mxu0 0.0
    %1464 = vmatprep.subr.mxu0 0.0
    %1465 = vmatpush2.msra.mxu0 0.0
    %1466 = vmatprep.subr.mxu0 0.0
    %1467 = vmatpush2.msra.mxu0 0.0
    %1468 = vmatprep.subr.mxu0 0.0
    %1469 = vmatpush2.msra.mxu0 0.0
    %1470 = vmatprep.mubr.f32.mxu0 0.0
    %1471 = vmatmul.mubr.f32.gmra.mxu0 %v111
    %v1472 = vpop.f32.mrf.mxu0
    %v1473 = vadd.f32 %v1405, %v1472
    %v1474 = vpop.f32.mrf.mxu0
    %1475 = vmatprep.mubr.f32.mxu0 0.0
    %1476 = vmatmul.mubr.f32.gmra.mxu0 %v114
    %v1477 = vpop.f32.mrf.mxu0
    %v1478 = vadd.f32 %v1405, %v1477
    %v1479 = vpop.f32.mrf.mxu0
    %1480 = vdwg.mxu0
    %v1481 = vlaneseq
    %v1482 = vshrl.u32 %v1481, 7
    %v1483 = vsub.s32 6, %v1482
    %v1484 = vrot.slane %v88, %v1483
    %1485 = vmatprep.subr.mxu0 0.0
    %1486 = vmatpush1.msra.mxu0 0.0
    %1487 = vmatprep.subr.mxu0 0.0
    %1488 = vmatpush1.msra.mxu0 0.0
    %1489 = vmatprep.subr.mxu0 0.0
    %1490 = vmatpush1.msra.mxu0 0.0
    %1491 = vmatprep.subr.mxu0 0.0
    %1492 = vmatpush1.msra.mxu0 0.0
    %1493 = vmatprep.subr.mxu0 0.0
    %1494 = vmatpush1.msra.mxu0 0.0
    %1495 = vmatprep.subr.mxu0 0.0
    %1496 = vmatpush1.msra.mxu0 0.0
    %1497 = vmatprep.subr.mxu0 0.0
    %1498 = vmatpush1.msra.mxu0 0.0
    %1499 = vmatprep.subr.mxu0 0.0
    %1500 = vmatpush1.msra.mxu0 0.0
    %1501 = vmatprep.subr.mxu0 0.0
    %1502 = vmatpush1.msra.mxu0 0.0
    %1503 = vmatprep.subr.mxu0 0.0
    %1504 = vmatpush1.msra.mxu0 0.0
    %1505 = vmatprep.subr.mxu0 0.0
    %1506 = vmatpush1.msra.mxu0 0.0
    %1507 = vmatprep.subr.mxu0 0.0
    %1508 = vmatpush1.msra.mxu0 0.0
    %1509 = vmatprep.subr.mxu0 0.0
    %1510 = vmatpush1.msra.mxu0 %v67
    %1511 = vmatprep.subr.mxu0 0.0
    %1512 = vmatpush1.msra.mxu0 %v66
    %1513 = vmatprep.subr.mxu0 0.0
    %1514 = vmatpush1.msra.mxu0 %v65
    %1515 = vmatprep.subr.mxu0 0.0
    %1516 = vmatpush1.msra.mxu0 %v64
    %1517 = vmatprep.subr.mxu0 0.0
    %1518 = vmatpush2.msra.mxu0 0.0
    %1519 = vmatprep.subr.mxu0 0.0
    %1520 = vmatpush2.msra.mxu0 0.0
    %1521 = vmatprep.subr.mxu0 0.0
    %1522 = vmatpush2.msra.mxu0 0.0
    %1523 = vmatprep.subr.mxu0 0.0
    %1524 = vmatpush2.msra.mxu0 0.0
    %1525 = vmatprep.subr.mxu0 0.0
    %1526 = vmatpush2.msra.mxu0 0.0
    %1527 = vmatprep.subr.mxu0 0.0
    %1528 = vmatpush2.msra.mxu0 0.0
    %1529 = vmatprep.subr.mxu0 0.0
    %1530 = vmatpush2.msra.mxu0 0.0
    %1531 = vmatprep.subr.mxu0 0.0
    %1532 = vmatpush2.msra.mxu0 0.0
    %1533 = vmatprep.subr.mxu0 0.0
    %1534 = vmatpush2.msra.mxu0 0.0
    %1535 = vmatprep.subr.mxu0 0.0
    %1536 = vmatpush2.msra.mxu0 0.0
    %1537 = vmatprep.subr.mxu0 0.0
    %1538 = vmatpush2.msra.mxu0 0.0
    %1539 = vmatprep.subr.mxu0 0.0
    %1540 = vmatpush2.msra.mxu0 0.0
    %1541 = vmatprep.subr.mxu0 0.0
    %1542 = vmatpush2.msra.mxu0 0.0
    %1543 = vmatprep.subr.mxu0 0.0
    %1544 = vmatpush2.msra.mxu0 0.0
    %1545 = vmatprep.subr.mxu0 0.0
    %1546 = vmatpush2.msra.mxu0 0.0
    %1547 = vmatprep.subr.mxu0 0.0
    %1548 = vmatpush2.msra.mxu0 0.0
    %1549 = vmatprep.mubr.f32.mxu0 0.0
    %1550 = vmatmul.mubr.f32.gmra.mxu0 %v111
    %v1551 = vpop.f32.mrf.mxu0
    %v1552 = vadd.f32 %v1484, %v1551
    %v1553 = vpop.f32.mrf.mxu0
    %1554 = vmatprep.mubr.f32.mxu0 0.0
    %1555 = vmatmul.mubr.f32.gmra.mxu0 %v114
    %v1556 = vpop.f32.mrf.mxu0
    %v1557 = vadd.f32 %v1484, %v1556
    %v1558 = vpop.f32.mrf.mxu0
    %1559 = vdwg.mxu0
    %v1560 = vlaneseq
    %v1561 = vshrl.u32 %v1560, 7
    %v1562 = vsub.s32 2, %v1561
    %v1563 = vrot.slane %v89, %v1562
    %1564 = vmatprep.subr.mxu0 0.0
    %1565 = vmatpush1.msra.mxu0 0.0
    %1566 = vmatprep.subr.mxu0 0.0
    %1567 = vmatpush1.msra.mxu0 0.0
    %1568 = vmatprep.subr.mxu0 0.0
    %1569 = vmatpush1.msra.mxu0 0.0
    %1570 = vmatprep.subr.mxu0 0.0
    %1571 = vmatpush1.msra.mxu0 0.0
    %1572 = vmatprep.subr.mxu0 0.0
    %1573 = vmatpush1.msra.mxu0 0.0
    %1574 = vmatprep.subr.mxu0 0.0
    %1575 = vmatpush1.msra.mxu0 0.0
    %1576 = vmatprep.subr.mxu0 0.0
    %1577 = vmatpush1.msra.mxu0 0.0
    %1578 = vmatprep.subr.mxu0 0.0
    %1579 = vmatpush1.msra.mxu0 0.0
    %1580 = vmatprep.subr.mxu0 0.0
    %1581 = vmatpush1.msra.mxu0 0.0
    %1582 = vmatprep.subr.mxu0 0.0
    %1583 = vmatpush1.msra.mxu0 0.0
    %1584 = vmatprep.subr.mxu0 0.0
    %1585 = vmatpush1.msra.mxu0 0.0
    %1586 = vmatprep.subr.mxu0 0.0
    %1587 = vmatpush1.msra.mxu0 0.0
    %1588 = vmatprep.subr.mxu0 0.0
    %1589 = vmatpush1.msra.mxu0 %v83
    %1590 = vmatprep.subr.mxu0 0.0
    %1591 = vmatpush1.msra.mxu0 %v82
    %1592 = vmatprep.subr.mxu0 0.0
    %1593 = vmatpush1.msra.mxu0 %v81
    %1594 = vmatprep.subr.mxu0 0.0
    %1595 = vmatpush1.msra.mxu0 %v80
    %1596 = vmatprep.subr.mxu0 0.0
    %1597 = vmatpush2.msra.mxu0 0.0
    %1598 = vmatprep.subr.mxu0 0.0
    %1599 = vmatpush2.msra.mxu0 0.0
    %1600 = vmatprep.subr.mxu0 0.0
    %1601 = vmatpush2.msra.mxu0 0.0
    %1602 = vmatprep.subr.mxu0 0.0
    %1603 = vmatpush2.msra.mxu0 0.0
    %1604 = vmatprep.subr.mxu0 0.0
    %1605 = vmatpush2.msra.mxu0 0.0
    %1606 = vmatprep.subr.mxu0 0.0
    %1607 = vmatpush2.msra.mxu0 0.0
    %1608 = vmatprep.subr.mxu0 0.0
    %1609 = vmatpush2.msra.mxu0 0.0
    %1610 = vmatprep.subr.mxu0 0.0
    %1611 = vmatpush2.msra.mxu0 0.0
    %1612 = vmatprep.subr.mxu0 0.0
    %1613 = vmatpush2.msra.mxu0 0.0
    %1614 = vmatprep.subr.mxu0 0.0
    %1615 = vmatpush2.msra.mxu0 0.0
    %1616 = vmatprep.subr.mxu0 0.0
    %1617 = vmatpush2.msra.mxu0 0.0
    %1618 = vmatprep.subr.mxu0 0.0
    %1619 = vmatpush2.msra.mxu0 0.0
    %1620 = vmatprep.subr.mxu0 0.0
    %1621 = vmatpush2.msra.mxu0 0.0
    %1622 = vmatprep.subr.mxu0 0.0
    %1623 = vmatpush2.msra.mxu0 0.0
    %1624 = vmatprep.subr.mxu0 0.0
    %1625 = vmatpush2.msra.mxu0 0.0
    %1626 = vmatprep.subr.mxu0 0.0
    %1627 = vmatpush2.msra.mxu0 0.0
    %1628 = vmatprep.mubr.f32.mxu0 0.0
    %1629 = vmatmul.mubr.f32.gmra.mxu0 %v111
    %v1630 = vpop.f32.mrf.mxu0
    %v1631 = vadd.f32 %v1563, %v1630
    %v1632 = vpop.f32.mrf.mxu0
    %1633 = vmatprep.mubr.f32.mxu0 0.0
    %1634 = vmatmul.mubr.f32.gmra.mxu0 %v114
    %v1635 = vpop.f32.mrf.mxu0
    %v1636 = vadd.f32 %v1563, %v1635
    %v1637 = vpop.f32.mrf.mxu0
    %1638 = vdwg.mxu0
    %v1640 = vsel %vm349, %v1473, 0
    %v1643 = vsel %vm349, %v1552, 0
    %1645 = vmatprep.subr.mxu0 0.0
    %1646 = vmatpush1.xpose.msra.mxu0 0.0
    %1647 = vmatprep.subr.mxu0 0.0
    %1648 = vmatpush1.xpose.msra.mxu0 0.0
    %1649 = vmatprep.subr.mxu0 0.0
    %1650 = vmatpush1.xpose.msra.mxu0 0.0
    %1651 = vmatprep.subr.mxu0 0.0
    %1652 = vmatpush1.xpose.msra.mxu0 0.0
    %1653 = vmatprep.subr.mxu0 0.0
    %1654 = vmatpush1.xpose.msra.mxu0 0.0
    %1655 = vmatprep.subr.mxu0 0.0
    %1656 = vmatpush1.xpose.msra.mxu0 0.0
    %1657 = vmatprep.subr.mxu0 0.0
    %1658 = vmatpush1.xpose.msra.mxu0 0.0
    %1659 = vmatprep.subr.mxu0 0.0
    %1660 = vmatpush1.xpose.msra.mxu0 0.0
    %1661 = vmatprep.subr.mxu0 0.0
    %1662 = vmatpush1.xpose.msra.mxu0 0.0
    %1663 = vmatprep.subr.mxu0 0.0
    %1664 = vmatpush1.xpose.msra.mxu0 0.0
    %1665 = vmatprep.subr.mxu0 0.0
    %1666 = vmatpush1.xpose.msra.mxu0 0.0
    %1667 = vmatprep.subr.mxu0 0.0
    %1668 = vmatpush1.xpose.msra.mxu0 0.0
    %1669 = vmatprep.subr.mxu0 0.0
    %1670 = vmatpush1.xpose.msra.mxu0 0.0
    %1671 = vmatprep.subr.mxu0 0.0
    %1672 = vmatpush1.xpose.msra.mxu0 0.0
    %1673 = vmatprep.subr.mxu0 0.0
    %1674 = vmatpush1.xpose.msra.mxu0 0.0
    %1675 = vmatprep.subr.mxu0 0.0
    %1676 = vmatpush1.xpose.msra.mxu0 %v1643
    %1677 = vmatprep.subr.mxu0 0.0
    %1678 = vmatpush2.xpose.msra.mxu0 0.0
    %1679 = vmatprep.subr.mxu0 0.0
    %1680 = vmatpush2.xpose.msra.mxu0 0.0
    %1681 = vmatprep.subr.mxu0 0.0
    %1682 = vmatpush2.xpose.msra.mxu0 0.0
    %1683 = vmatprep.subr.mxu0 0.0
    %1684 = vmatpush2.xpose.msra.mxu0 0.0
    %1685 = vmatprep.subr.mxu0 0.0
    %1686 = vmatpush2.xpose.msra.mxu0 0.0
    %1687 = vmatprep.subr.mxu0 0.0
    %1688 = vmatpush2.xpose.msra.mxu0 0.0
    %1689 = vmatprep.subr.mxu0 0.0
    %1690 = vmatpush2.xpose.msra.mxu0 0.0
    %1691 = vmatprep.subr.mxu0 0.0
    %1692 = vmatpush2.xpose.msra.mxu0 0.0
    %1693 = vmatprep.subr.mxu0 0.0
    %1694 = vmatpush2.xpose.msra.mxu0 0.0
    %1695 = vmatprep.subr.mxu0 0.0
    %1696 = vmatpush2.xpose.msra.mxu0 0.0
    %1697 = vmatprep.subr.mxu0 0.0
    %1698 = vmatpush2.xpose.msra.mxu0 0.0
    %1699 = vmatprep.subr.mxu0 0.0
    %1700 = vmatpush2.xpose.msra.mxu0 0.0
    %1701 = vmatprep.subr.mxu0 0.0
    %1702 = vmatpush2.xpose.msra.mxu0 0.0
    %1703 = vmatprep.subr.mxu0 0.0
    %1704 = vmatpush2.xpose.msra.mxu0 0.0
    %1705 = vmatprep.subr.mxu0 0.0
    %1706 = vmatpush2.xpose.msra.mxu0 0.0
    %1707 = vmatprep.subr.mxu0 0.0
    %1708 = vmatpush2.xpose.msra.mxu0 0.0
    %1709 = vmatprep.mubr.f32.mxu0 0.0
    %1710 = vmatmul.mubr.f32.gmra.mxu0 %v1640
    %v1711 = vpop.f32.mrf.mxu0
    %v1712 = vadd.f32 0.0, %v1711
    %v1713 = vpop.f32.mrf.mxu0
    %1714 = vdwg.mxu0
    %v1716 = vsel %vm349, %v1478, 0
    %v1719 = vsel %vm349, %v1557, 0
    %1721 = vmatprep.subr.mxu0 0.0
    %1722 = vmatpush1.xpose.msra.mxu0 0.0
    %1723 = vmatprep.subr.mxu0 0.0
    %1724 = vmatpush1.xpose.msra.mxu0 0.0
    %1725 = vmatprep.subr.mxu0 0.0
    %1726 = vmatpush1.xpose.msra.mxu0 0.0
    %1727 = vmatprep.subr.mxu0 0.0
    %1728 = vmatpush1.xpose.msra.mxu0 0.0
    %1729 = vmatprep.subr.mxu0 0.0
    %1730 = vmatpush1.xpose.msra.mxu0 0.0
    %1731 = vmatprep.subr.mxu0 0.0
    %1732 = vmatpush1.xpose.msra.mxu0 0.0
    %1733 = vmatprep.subr.mxu0 0.0
    %1734 = vmatpush1.xpose.msra.mxu0 0.0
    %1735 = vmatprep.subr.mxu0 0.0
    %1736 = vmatpush1.xpose.msra.mxu0 0.0
    %1737 = vmatprep.subr.mxu0 0.0
    %1738 = vmatpush1.xpose.msra.mxu0 0.0
    %1739 = vmatprep.subr.mxu0 0.0
    %1740 = vmatpush1.xpose.msra.mxu0 0.0
    %1741 = vmatprep.subr.mxu0 0.0
    %1742 = vmatpush1.xpose.msra.mxu0 0.0
    %1743 = vmatprep.subr.mxu0 0.0
    %1744 = vmatpush1.xpose.msra.mxu0 0.0
    %1745 = vmatprep.subr.mxu0 0.0
    %1746 = vmatpush1.xpose.msra.mxu0 0.0
    %1747 = vmatprep.subr.mxu0 0.0
    %1748 = vmatpush1.xpose.msra.mxu0 0.0
    %1749 = vmatprep.subr.mxu0 0.0
    %1750 = vmatpush1.xpose.msra.mxu0 0.0
    %1751 = vmatprep.subr.mxu0 0.0
    %1752 = vmatpush1.xpose.msra.mxu0 %v1719
    %1753 = vmatprep.subr.mxu0 0.0
    %1754 = vmatpush2.xpose.msra.mxu0 0.0
    %1755 = vmatprep.subr.mxu0 0.0
    %1756 = vmatpush2.xpose.msra.mxu0 0.0
    %1757 = vmatprep.subr.mxu0 0.0
    %1758 = vmatpush2.xpose.msra.mxu0 0.0
    %1759 = vmatprep.subr.mxu0 0.0
    %1760 = vmatpush2.xpose.msra.mxu0 0.0
    %1761 = vmatprep.subr.mxu0 0.0
    %1762 = vmatpush2.xpose.msra.mxu0 0.0
    %1763 = vmatprep.subr.mxu0 0.0
    %1764 = vmatpush2.xpose.msra.mxu0 0.0
    %1765 = vmatprep.subr.mxu0 0.0
    %1766 = vmatpush2.xpose.msra.mxu0 0.0
    %1767 = vmatprep.subr.mxu0 0.0
    %1768 = vmatpush2.xpose.msra.mxu0 0.0
    %1769 = vmatprep.subr.mxu0 0.0
    %1770 = vmatpush2.xpose.msra.mxu0 0.0
    %1771 = vmatprep.subr.mxu0 0.0
    %1772 = vmatpush2.xpose.msra.mxu0 0.0
    %1773 = vmatprep.subr.mxu0 0.0
    %1774 = vmatpush2.xpose.msra.mxu0 0.0
    %1775 = vmatprep.subr.mxu0 0.0
    %1776 = vmatpush2.xpose.msra.mxu0 0.0
    %1777 = vmatprep.subr.mxu0 0.0
    %1778 = vmatpush2.xpose.msra.mxu0 0.0
    %1779 = vmatprep.subr.mxu0 0.0
    %1780 = vmatpush2.xpose.msra.mxu0 0.0
    %1781 = vmatprep.subr.mxu0 0.0
    %1782 = vmatpush2.xpose.msra.mxu0 0.0
    %1783 = vmatprep.subr.mxu0 0.0
    %1784 = vmatpush2.xpose.msra.mxu0 0.0
    %1785 = vmatprep.mubr.f32.mxu0 0.0
    %1786 = vmatmul.mubr.f32.gmra.mxu0 %v1716
    %v1787 = vpop.f32.mrf.mxu0
    %v1788 = vadd.f32 0.0, %v1787
    %v1789 = vpop.f32.mrf.mxu0
    %1790 = vdwg.mxu0
    %v1791 = vmul.f32 %v1712, 0.25
    %v1792 = vmul.f32 %v1788, 0.25
    %v1793 = vadd.f32 %v1791, %v38
    %v1794 = vadd.f32 %v1792, %v39
    %v1795 = vsel %vm506, %v1793, -inf
    %1796 = vmax.xlane.f32.xlu0 %v1795
    %v1797 = vpop.xlane.xlu0 %1796
    %v1798 = vsel %vm506, %v1794, -inf
    %1799 = vmax.xlane.f32.xlu0 %v1798
    %v1800 = vpop.xlane.xlu0 %1799
    %v1801 = vsub.f32 %v1793, %v1797
    %v1802 = vsub.f32 %v1794, %v1800
    %v1803 = vmul.f32 %v1801, 1.442695
    %v1804 = vpow.pop %v1803
    %v1805 = vmul.f32 %v1802, 1.442695
    %v1806 = vpow.pop %v1805
    %v1807 = vsel %vm506, %v1804, 0.0
    %1808 = vadd.xlane.f32.xlu0 %v1807
    %v1809 = vpop.xlane.xlu0 %1808
    %v1810 = vsel %vm506, %v1806, 0.0
    %1811 = vadd.xlane.f32.xlu0 %v1810
    %v1812 = vpop.xlane.xlu0 %1811
    %v1813 = vrcp.pop %v1809
    %v1814 = vrcp.pop %v1812
    %v1815 = vmul.f32 %v1804, %v1813
    %v1816 = vmul.f32 %v1806, %v1814
    %v1818 = vsel %vm506, %v1815, 0
    %1820 = vmatprep.subr.mxu0 0.0
    %1821 = vmatpush1.msra.mxu0 0.0
    %1822 = vmatprep.subr.mxu0 0.0
    %1823 = vmatpush1.msra.mxu0 0.0
    %1824 = vmatprep.subr.mxu0 0.0
    %1825 = vmatpush1.msra.mxu0 0.0
    %1826 = vmatprep.subr.mxu0 0.0
    %1827 = vmatpush1.msra.mxu0 0.0
    %1828 = vmatprep.subr.mxu0 0.0
    %1829 = vmatpush1.msra.mxu0 0.0
    %1830 = vmatprep.subr.mxu0 0.0
    %1831 = vmatpush1.msra.mxu0 0.0
    %1832 = vmatprep.subr.mxu0 0.0
    %1833 = vmatpush1.msra.mxu0 0.0
    %1834 = vmatprep.subr.mxu0 0.0
    %1835 = vmatpush1.msra.mxu0 0.0
    %1836 = vmatprep.subr.mxu0 0.0
    %1837 = vmatpush1.msra.mxu0 0.0
    %1838 = vmatprep.subr.mxu0 0.0
    %1839 = vmatpush1.msra.mxu0 0.0
    %1840 = vmatprep.subr.mxu0 0.0
    %1841 = vmatpush1.msra.mxu0 0.0
    %1842 = vmatprep.subr.mxu0 0.0
    %1843 = vmatpush1.msra.mxu0 0.0
    %1844 = vmatprep.subr.mxu0 0.0
    %1845 = vmatpush1.msra.mxu0 0.0
    %1846 = vmatprep.subr.mxu0 0.0
    %1847 = vmatpush1.msra.mxu0 0.0
    %1848 = vmatprep.subr.mxu0 0.0
    %1849 = vmatpush1.msra.mxu0 0.0
    %1850 = vmatprep.subr.mxu0 0.0
    %1851 = vmatpush1.msra.mxu0 %v1631
    %1852 = vmatprep.subr.mxu0 0.0
    %1853 = vmatpush2.msra.mxu0 0.0
    %1854 = vmatprep.subr.mxu0 0.0
    %1855 = vmatpush2.msra.mxu0 0.0
    %1856 = vmatprep.subr.mxu0 0.0
    %1857 = vmatpush2.msra.mxu0 0.0
    %1858 = vmatprep.subr.mxu0 0.0
    %1859 = vmatpush2.msra.mxu0 0.0
    %1860 = vmatprep.subr.mxu0 0.0
    %1861 = vmatpush2.msra.mxu0 0.0
    %1862 = vmatprep.subr.mxu0 0.0
    %1863 = vmatpush2.msra.mxu0 0.0
    %1864 = vmatprep.subr.mxu0 0.0
    %1865 = vmatpush2.msra.mxu0 0.0
    %1866 = vmatprep.subr.mxu0 0.0
    %1867 = vmatpush2.msra.mxu0 0.0
    %1868 = vmatprep.subr.mxu0 0.0
    %1869 = vmatpush2.msra.mxu0 0.0
    %1870 = vmatprep.subr.mxu0 0.0
    %1871 = vmatpush2.msra.mxu0 0.0
    %1872 = vmatprep.subr.mxu0 0.0
    %1873 = vmatpush2.msra.mxu0 0.0
    %1874 = vmatprep.subr.mxu0 0.0
    %1875 = vmatpush2.msra.mxu0 0.0
    %1876 = vmatprep.subr.mxu0 0.0
    %1877 = vmatpush2.msra.mxu0 0.0
    %1878 = vmatprep.subr.mxu0 0.0
    %1879 = vmatpush2.msra.mxu0 0.0
    %1880 = vmatprep.subr.mxu0 0.0
    %1881 = vmatpush2.msra.mxu0 0.0
    %1882 = vmatprep.subr.mxu0 0.0
    %1883 = vmatpush2.msra.mxu0 0.0
    %1884 = vmatprep.mubr.f32.mxu0 0.0
    %1885 = vmatmul.mubr.f32.gmra.mxu0 %v1818
    %v1886 = vpop.f32.mrf.mxu0
    %v1887 = vadd.f32 0.0, %v1886
    %v1888 = vpop.f32.mrf.mxu0
    %1889 = vdwg.mxu0
    %v1891 = vsel %vm506, %v1816, 0
    %1893 = vmatprep.subr.mxu0 0.0
    %1894 = vmatpush1.msra.mxu0 0.0
    %1895 = vmatprep.subr.mxu0 0.0
    %1896 = vmatpush1.msra.mxu0 0.0
    %1897 = vmatprep.subr.mxu0 0.0
    %1898 = vmatpush1.msra.mxu0 0.0
    %1899 = vmatprep.subr.mxu0 0.0
    %1900 = vmatpush1.msra.mxu0 0.0
    %1901 = vmatprep.subr.mxu0 0.0
    %1902 = vmatpush1.msra.mxu0 0.0
    %1903 = vmatprep.subr.mxu0 0.0
    %1904 = vmatpush1.msra.mxu0 0.0
    %1905 = vmatprep.subr.mxu0 0.0
    %1906 = vmatpush1.msra.mxu0 0.0
    %1907 = vmatprep.subr.mxu0 0.0
    %1908 = vmatpush1.msra.mxu0 0.0
    %1909 = vmatprep.subr.mxu0 0.0
    %1910 = vmatpush1.msra.mxu0 0.0
    %1911 = vmatprep.subr.mxu0 0.0
    %1912 = vmatpush1.msra.mxu0 0.0
    %1913 = vmatprep.subr.mxu0 0.0
    %1914 = vmatpush1.msra.mxu0 0.0
    %1915 = vmatprep.subr.mxu0 0.0
    %1916 = vmatpush1.msra.mxu0 0.0
    %1917 = vmatprep.subr.mxu0 0.0
    %1918 = vmatpush1.msra.mxu0 0.0
    %1919 = vmatprep.subr.mxu0 0.0
    %1920 = vmatpush1.msra.mxu0 0.0
    %1921 = vmatprep.subr.mxu0 0.0
    %1922 = vmatpush1.msra.mxu0 0.0
    %1923 = vmatprep.subr.mxu0 0.0
    %1924 = vmatpush1.msra.mxu0 %v1636
    %1925 = vmatprep.subr.mxu0 0.0
    %1926 = vmatpush2.msra.mxu0 0.0
    %1927 = vmatprep.subr.mxu0 0.0
    %1928 = vmatpush2.msra.mxu0 0.0
    %1929 = vmatprep.subr.mxu0 0.0
    %1930 = vmatpush2.msra.mxu0 0.0
    %1931 = vmatprep.subr.mxu0 0.0
    %1932 = vmatpush2.msra.mxu0 0.0
    %1933 = vmatprep.subr.mxu0 0.0
    %1934 = vmatpush2.msra.mxu0 0.0
    %1935 = vmatprep.subr.mxu0 0.0
    %1936 = vmatpush2.msra.mxu0 0.0
    %1937 = vmatprep.subr.mxu0 0.0
    %1938 = vmatpush2.msra.mxu0 0.0
    %1939 = vmatprep.subr.mxu0 0.0
    %1940 = vmatpush2.msra.mxu0 0.0
    %1941 = vmatprep.subr.mxu0 0.0
    %1942 = vmatpush2.msra.mxu0 0.0
    %1943 = vmatprep.subr.mxu0 0.0
    %1944 = vmatpush2.msra.mxu0 0.0
    %1945 = vmatprep.subr.mxu0 0.0
    %1946 = vmatpush2.msra.mxu0 0.0
    %1947 = vmatprep.subr.mxu0 0.0
    %1948 = vmatpush2.msra.mxu0 0.0
    %1949 = vmatprep.subr.mxu0 0.0
    %1950 = vmatpush2.msra.mxu0 0.0
    %1951 = vmatprep.subr.mxu0 0.0
    %1952 = vmatpush2.msra.mxu0 0.0
    %1953 = vmatprep.subr.mxu0 0.0
    %1954 = vmatpush2.msra.mxu0 0.0
    %1955 = vmatprep.subr.mxu0 0.0
    %1956 = vmatpush2.msra.mxu0 0.0
    %1957 = vmatprep.mubr.f32.mxu0 0.0
    %1958 = vmatmul.mubr.f32.gmra.mxu0 %v1891
    %v1959 = vpop.f32.mrf.mxu0
    %v1960 = vadd.f32 0.0, %v1959
    %v1961 = vpop.f32.mrf.mxu0
    %1962 = vdwg.mxu0
    %v1964 = vsel %vm349, %v1887, 0
    %v1967 = vsel %vm349, %v1960, 0
    %1969 = vmatprep.subr.mxu0 0.0
    %1970 = vmatpush1.msra.mxu0 0.0
    %1971 = vmatprep.subr.mxu0 0.0
    %1972 = vmatpush1.msra.mxu0 0.0
    %1973 = vmatprep.subr.mxu0 0.0
    %1974 = vmatpush1.msra.mxu0 0.0
    %1975 = vmatprep.subr.mxu0 0.0
    %1976 = vmatpush1.msra.mxu0 0.0
    %1977 = vmatprep.subr.mxu0 0.0
    %1978 = vmatpush1.msra.mxu0 0.0
    %1979 = vmatprep.subr.mxu0 0.0
    %1980 = vmatpush1.msra.mxu0 0.0
    %1981 = vmatprep.subr.mxu0 0.0
    %1982 = vmatpush1.msra.mxu0 0.0
    %1983 = vmatprep.subr.mxu0 0.0
    %1984 = vmatpush1.msra.mxu0 0.0
    %1985 = vmatprep.subr.mxu0 0.0
    %1986 = vmatpush1.msra.mxu0 0.0
    %1987 = vmatprep.subr.mxu0 0.0
    %1988 = vmatpush1.msra.mxu0 0.0
    %1989 = vmatprep.subr.mxu0 0.0
    %1990 = vmatpush1.msra.mxu0 0.0
    %1991 = vmatprep.subr.mxu0 0.0
    %1992 = vmatpush1.msra.mxu0 0.0
    %1993 = vmatprep.subr.mxu0 0.0
    %1994 = vmatpush1.msra.mxu0 0.0
    %1995 = vmatprep.subr.mxu0 0.0
    %1996 = vmatpush1.msra.mxu0 0.0
    %1997 = vmatprep.subr.mxu0 0.0
    %1998 = vmatpush1.msra.mxu0 %v95
    %1999 = vmatprep.subr.mxu0 0.0
    %2000 = vmatpush1.msra.mxu0 %v94
    %2001 = vmatprep.subr.mxu0 0.0
    %2002 = vmatpush2.msra.mxu0 0.0
    %2003 = vmatprep.subr.mxu0 0.0
    %2004 = vmatpush2.msra.mxu0 0.0
    %2005 = vmatprep.subr.mxu0 0.0
    %2006 = vmatpush2.msra.mxu0 0.0
    %2007 = vmatprep.subr.mxu0 0.0
    %2008 = vmatpush2.msra.mxu0 0.0
    %2009 = vmatprep.subr.mxu0 0.0
    %2010 = vmatpush2.msra.mxu0 0.0
    %2011 = vmatprep.subr.mxu0 0.0
    %2012 = vmatpush2.msra.mxu0 0.0
    %2013 = vmatprep.subr.mxu0 0.0
    %2014 = vmatpush2.msra.mxu0 0.0
    %2015 = vmatprep.subr.mxu0 0.0
    %2016 = vmatpush2.msra.mxu0 0.0
    %2017 = vmatprep.subr.mxu0 0.0
    %2018 = vmatpush2.msra.mxu0 0.0
    %2019 = vmatprep.subr.mxu0 0.0
    %2020 = vmatpush2.msra.mxu0 0.0
    %2021 = vmatprep.subr.mxu0 0.0
    %2022 = vmatpush2.msra.mxu0 0.0
    %2023 = vmatprep.subr.mxu0 0.0
    %2024 = vmatpush2.msra.mxu0 0.0
    %2025 = vmatprep.subr.mxu0 0.0
    %2026 = vmatpush2.msra.mxu0 0.0
    %2027 = vmatprep.subr.mxu0 0.0
    %2028 = vmatpush2.msra.mxu0 0.0
    %2029 = vmatprep.subr.mxu0 0.0
    %2030 = vmatpush2.msra.mxu0 0.0
    %2031 = vmatprep.subr.mxu0 0.0
    %2032 = vmatpush2.msra.mxu0 0.0
    %2033 = vmatprep.mubr.f32.mxu0 0.0
    %2034 = vmatmul.mubr.f32.gmra.mxu0 %v1964
    %v2035 = vpop.f32.mrf.mxu0
    %v2036 = vadd.f32 0.0, %v2035
    %v2037 = vpop.f32.mrf.mxu0
    %2038 = vmatprep.mubr.f32.mxu0 0.0
    %2039 = vmatmul.mubr.f32.gmra.mxu0 %v1967
    %v2040 = vpop.f32.mrf.mxu0
    %v2041 = vadd.f32 0.0, %v2040
    %v2042 = vpop.f32.mrf.mxu0
    %2043 = vdwg.mxu0
    %v2044 = vadd.f32 %v1400, %v2036
    %v2045 = vadd.f32 %v1401, %v2041
    %v2046 = vlaneseq
    %v2047 = vshrl.u32 %v2046, 7
    %v2048 = vsub.s32 3, %v2047
    %v2049 = vrot.slane %v88, %v2048
    %2050 = vmatprep.subr.mxu0 0.0
    %2051 = vmatpush1.msra.mxu0 0.0
    %2052 = vmatprep.subr.mxu0 0.0
    %2053 = vmatpush1.msra.mxu0 0.0
    %2054 = vmatprep.subr.mxu0 0.0
    %2055 = vmatpush1.msra.mxu0 0.0
    %2056 = vmatprep.subr.mxu0 0.0
    %2057 = vmatpush1.msra.mxu0 0.0
    %2058 = vmatprep.subr.mxu0 0.0
    %2059 = vmatpush1.msra.mxu0 0.0
    %2060 = vmatprep.subr.mxu0 0.0
    %2061 = vmatpush1.msra.mxu0 0.0
    %2062 = vmatprep.subr.mxu0 0.0
    %2063 = vmatpush1.msra.mxu0 0.0
    %2064 = vmatprep.subr.mxu0 0.0
    %2065 = vmatpush1.msra.mxu0 0.0
    %2066 = vmatprep.subr.mxu0 0.0
    %2067 = vmatpush1.msra.mxu0 0.0
    %2068 = vmatprep.subr.mxu0 0.0
    %2069 = vmatpush1.msra.mxu0 0.0
    %2070 = vmatprep.subr.mxu0 0.0
    %2071 = vmatpush1.msra.mxu0 0.0
    %2072 = vmatprep.subr.mxu0 0.0
    %2073 = vmatpush1.msra.mxu0 0.0
    %2074 = vmatprep.subr.mxu0 0.0
    %2075 = vmatpush1.msra.mxu0 %v55
    %2076 = vmatprep.subr.mxu0 0.0
    %2077 = vmatpush1.msra.mxu0 %v54
    %2078 = vmatprep.subr.mxu0 0.0
    %2079 = vmatpush1.msra.mxu0 %v53
    %2080 = vmatprep.subr.mxu0 0.0
    %2081 = vmatpush1.msra.mxu0 %v52
    %2082 = vmatprep.subr.mxu0 0.0
    %2083 = vmatpush2.msra.mxu0 0.0
    %2084 = vmatprep.subr.mxu0 0.0
    %2085 = vmatpush2.msra.mxu0 0.0
    %2086 = vmatprep.subr.mxu0 0.0
    %2087 = vmatpush2.msra.mxu0 0.0
    %2088 = vmatprep.subr.mxu0 0.0
    %2089 = vmatpush2.msra.mxu0 0.0
    %2090 = vmatprep.subr.mxu0 0.0
    %2091 = vmatpush2.msra.mxu0 0.0
    %2092 = vmatprep.subr.mxu0 0.0
    %2093 = vmatpush2.msra.mxu0 0.0
    %2094 = vmatprep.subr.mxu0 0.0
    %2095 = vmatpush2.msra.mxu0 0.0
    %2096 = vmatprep.subr.mxu0 0.0
    %2097 = vmatpush2.msra.mxu0 0.0
    %2098 = vmatprep.subr.mxu0 0.0
    %2099 = vmatpush2.msra.mxu0 0.0
    %2100 = vmatprep.subr.mxu0 0.0
    %2101 = vmatpush2.msra.mxu0 0.0
    %2102 = vmatprep.subr.mxu0 0.0
    %2103 = vmatpush2.msra.mxu0 0.0
    %2104 = vmatprep.subr.mxu0 0.0
    %2105 = vmatpush2.msra.mxu0 0.0
    %2106 = vmatprep.subr.mxu0 0.0
    %2107 = vmatpush2.msra.mxu0 0.0
    %2108 = vmatprep.subr.mxu0 0.0
    %2109 = vmatpush2.msra.mxu0 0.0
    %2110 = vmatprep.subr.mxu0 0.0
    %2111 = vmatpush2.msra.mxu0 0.0
    %2112 = vmatprep.subr.mxu0 0.0
    %2113 = vmatpush2.msra.mxu0 0.0
    %2114 = vmatprep.mubr.f32.mxu0 0.0
    %2115 = vmatmul.mubr.f32.gmra.mxu0 %v111
    %v2116 = vpop.f32.mrf.mxu0
    %v2117 = vadd.f32 %v2049, %v2116
    %v2118 = vpop.f32.mrf.mxu0
    %2119 = vmatprep.mubr.f32.mxu0 0.0
    %2120 = vmatmul.mubr.f32.gmra.mxu0 %v114
    %v2121 = vpop.f32.mrf.mxu0
    %v2122 = vadd.f32 %v2049, %v2121
    %v2123 = vpop.f32.mrf.mxu0
    %2124 = vdwg.mxu0
    %v2125 = vlaneseq
    %v2126 = vshrl.u32 %v2125, 7
    %v2127 = vsub.s32 7, %v2126
    %v2128 = vrot.slane %v88, %v2127
    %2129 = vmatprep.subr.mxu0 0.0
    %2130 = vmatpush1.msra.mxu0 0.0
    %2131 = vmatprep.subr.mxu0 0.0
    %2132 = vmatpush1.msra.mxu0 0.0
    %2133 = vmatprep.subr.mxu0 0.0
    %2134 = vmatpush1.msra.mxu0 0.0
    %2135 = vmatprep.subr.mxu0 0.0
    %2136 = vmatpush1.msra.mxu0 0.0
    %2137 = vmatprep.subr.mxu0 0.0
    %2138 = vmatpush1.msra.mxu0 0.0
    %2139 = vmatprep.subr.mxu0 0.0
    %2140 = vmatpush1.msra.mxu0 0.0
    %2141 = vmatprep.subr.mxu0 0.0
    %2142 = vmatpush1.msra.mxu0 0.0
    %2143 = vmatprep.subr.mxu0 0.0
    %2144 = vmatpush1.msra.mxu0 0.0
    %2145 = vmatprep.subr.mxu0 0.0
    %2146 = vmatpush1.msra.mxu0 0.0
    %2147 = vmatprep.subr.mxu0 0.0
    %2148 = vmatpush1.msra.mxu0 0.0
    %2149 = vmatprep.subr.mxu0 0.0
    %2150 = vmatpush1.msra.mxu0 0.0
    %2151 = vmatprep.subr.mxu0 0.0
    %2152 = vmatpush1.msra.mxu0 0.0
    %2153 = vmatprep.subr.mxu0 0.0
    %2154 = vmatpush1.msra.mxu0 %v71
    %2155 = vmatprep.subr.mxu0 0.0
    %2156 = vmatpush1.msra.mxu0 %v70
    %2157 = vmatprep.subr.mxu0 0.0
    %2158 = vmatpush1.msra.mxu0 %v69
    %2159 = vmatprep.subr.mxu0 0.0
    %2160 = vmatpush1.msra.mxu0 %v68
    %2161 = vmatprep.subr.mxu0 0.0
    %2162 = vmatpush2.msra.mxu0 0.0
    %2163 = vmatprep.subr.mxu0 0.0
    %2164 = vmatpush2.msra.mxu0 0.0
    %2165 = vmatprep.subr.mxu0 0.0
    %2166 = vmatpush2.msra.mxu0 0.0
    %2167 = vmatprep.subr.mxu0 0.0
    %2168 = vmatpush2.msra.mxu0 0.0
    %2169 = vmatprep.subr.mxu0 0.0
    %2170 = vmatpush2.msra.mxu0 0.0
    %2171 = vmatprep.subr.mxu0 0.0
    %2172 = vmatpush2.msra.mxu0 0.0
    %2173 = vmatprep.subr.mxu0 0.0
    %2174 = vmatpush2.msra.mxu0 0.0
    %2175 = vmatprep.subr.mxu0 0.0
    %2176 = vmatpush2.msra.mxu0 0.0
    %2177 = vmatprep.subr.mxu0 0.0
    %2178 = vmatpush2.msra.mxu0 0.0
    %2179 = vmatprep.subr.mxu0 0.0
    %2180 = vmatpush2.msra.mxu0 0.0
    %2181 = vmatprep.subr.mxu0 0.0
    %2182 = vmatpush2.msra.mxu0 0.0
    %2183 = vmatprep.subr.mxu0 0.0
    %2184 = vmatpush2.msra.mxu0 0.0
    %2185 = vmatprep.subr.mxu0 0.0
    %2186 = vmatpush2.msra.mxu0 0.0
    %2187 = vmatprep.subr.mxu0 0.0
    %2188 = vmatpush2.msra.mxu0 0.0
    %2189 = vmatprep.subr.mxu0 0.0
    %2190 = vmatpush2.msra.mxu0 0.0
    %2191 = vmatprep.subr.mxu0 0.0
    %2192 = vmatpush2.msra.mxu0 0.0
    %2193 = vmatprep.mubr.f32.mxu0 0.0
    %2194 = vmatmul.mubr.f32.gmra.mxu0 %v111
    %v2195 = vpop.f32.mrf.mxu0
    %v2196 = vadd.f32 %v2128, %v2195
    %v2197 = vpop.f32.mrf.mxu0
    %2198 = vmatprep.mubr.f32.mxu0 0.0
    %2199 = vmatmul.mubr.f32.gmra.mxu0 %v114
    %v2200 = vpop.f32.mrf.mxu0
    %v2201 = vadd.f32 %v2128, %v2200
    %v2202 = vpop.f32.mrf.mxu0
    %2203 = vdwg.mxu0
    %v2204 = vlaneseq
    %v2205 = vshrl.u32 %v2204, 7
    %v2206 = vsub.s32 3, %v2205
    %v2207 = vrot.slane %v89, %v2206
    %2208 = vmatprep.subr.mxu0 0.0
    %2209 = vmatpush1.msra.mxu0 0.0
    %2210 = vmatprep.subr.mxu0 0.0
    %2211 = vmatpush1.msra.mxu0 0.0
    %2212 = vmatprep.subr.mxu0 0.0
    %2213 = vmatpush1.msra.mxu0 0.0
    %2214 = vmatprep.subr.mxu0 0.0
    %2215 = vmatpush1.msra.mxu0 0.0
    %2216 = vmatprep.subr.mxu0 0.0
    %2217 = vmatpush1.msra.mxu0 0.0
    %2218 = vmatprep.subr.mxu0 0.0
    %2219 = vmatpush1.msra.mxu0 0.0
    %2220 = vmatprep.subr.mxu0 0.0
    %2221 = vmatpush1.msra.mxu0 0.0
    %2222 = vmatprep.subr.mxu0 0.0
    %2223 = vmatpush1.msra.mxu0 0.0
    %2224 = vmatprep.subr.mxu0 0.0
    %2225 = vmatpush1.msra.mxu0 0.0
    %2226 = vmatprep.subr.mxu0 0.0
    %2227 = vmatpush1.msra.mxu0 0.0
    %2228 = vmatprep.subr.mxu0 0.0
    %2229 = vmatpush1.msra.mxu0 0.0
    %2230 = vmatprep.subr.mxu0 0.0
    %2231 = vmatpush1.msra.mxu0 0.0
    %2232 = vmatprep.subr.mxu0 0.0
    %2233 = vmatpush1.msra.mxu0 %v87
    %2234 = vmatprep.subr.mxu0 0.0
    %2235 = vmatpush1.msra.mxu0 %v86
    %2236 = vmatprep.subr.mxu0 0.0
    %2237 = vmatpush1.msra.mxu0 %v85
    %2238 = vmatprep.subr.mxu0 0.0
    %2239 = vmatpush1.msra.mxu0 %v84
    %2240 = vmatprep.subr.mxu0 0.0
    %2241 = vmatpush2.msra.mxu0 0.0
    %2242 = vmatprep.subr.mxu0 0.0
    %2243 = vmatpush2.msra.mxu0 0.0
    %2244 = vmatprep.subr.mxu0 0.0
    %2245 = vmatpush2.msra.mxu0 0.0
    %2246 = vmatprep.subr.mxu0 0.0
    %2247 = vmatpush2.msra.mxu0 0.0
    %2248 = vmatprep.subr.mxu0 0.0
    %2249 = vmatpush2.msra.mxu0 0.0
    %2250 = vmatprep.subr.mxu0 0.0
    %2251 = vmatpush2.msra.mxu0 0.0
    %2252 = vmatprep.subr.mxu0 0.0
    %2253 = vmatpush2.msra.mxu0 0.0
    %2254 = vmatprep.subr.mxu0 0.0
    %2255 = vmatpush2.msra.mxu0 0.0
    %2256 = vmatprep.subr.mxu0 0.0
    %2257 = vmatpush2.msra.mxu0 0.0
    %2258 = vmatprep.subr.mxu0 0.0
    %2259 = vmatpush2.msra.mxu0 0.0
    %2260 = vmatprep.subr.mxu0 0.0
    %2261 = vmatpush2.msra.mxu0 0.0
    %2262 = vmatprep.subr.mxu0 0.0
    %2263 = vmatpush2.msra.mxu0 0.0
    %2264 = vmatprep.subr.mxu0 0.0
    %2265 = vmatpush2.msra.mxu0 0.0
    %2266 = vmatprep.subr.mxu0 0.0
    %2267 = vmatpush2.msra.mxu0 0.0
    %2268 = vmatprep.subr.mxu0 0.0
    %2269 = vmatpush2.msra.mxu0 0.0
    %2270 = vmatprep.subr.mxu0 0.0
    %2271 = vmatpush2.msra.mxu0 0.0
    %2272 = vmatprep.mubr.f32.mxu0 0.0
    %2273 = vmatmul.mubr.f32.gmra.mxu0 %v111
    %v2274 = vpop.f32.mrf.mxu0
    %v2275 = vadd.f32 %v2207, %v2274
    %v2276 = vpop.f32.mrf.mxu0
    %2277 = vmatprep.mubr.f32.mxu0 0.0
    %2278 = vmatmul.mubr.f32.gmra.mxu0 %v114
    %v2279 = vpop.f32.mrf.mxu0
    %v2280 = vadd.f32 %v2207, %v2279
    %v2281 = vpop.f32.mrf.mxu0
    %2282 = vdwg.mxu0
    %v2284 = vsel %vm349, %v2117, 0
    %v2287 = vsel %vm349, %v2196, 0
    %2289 = vmatprep.subr.mxu0 0.0
    %2290 = vmatpush1.xpose.msra.mxu0 0.0
    %2291 = vmatprep.subr.mxu0 0.0
    %2292 = vmatpush1.xpose.msra.mxu0 0.0
    %2293 = vmatprep.subr.mxu0 0.0
    %2294 = vmatpush1.xpose.msra.mxu0 0.0
    %2295 = vmatprep.subr.mxu0 0.0
    %2296 = vmatpush1.xpose.msra.mxu0 0.0
    %2297 = vmatprep.subr.mxu0 0.0
    %2298 = vmatpush1.xpose.msra.mxu0 0.0
    %2299 = vmatprep.subr.mxu0 0.0
    %2300 = vmatpush1.xpose.msra.mxu0 0.0
    %2301 = vmatprep.subr.mxu0 0.0
    %2302 = vmatpush1.xpose.msra.mxu0 0.0
    %2303 = vmatprep.subr.mxu0 0.0
    %2304 = vmatpush1.xpose.msra.mxu0 0.0
    %2305 = vmatprep.subr.mxu0 0.0
    %2306 = vmatpush1.xpose.msra.mxu0 0.0
    %2307 = vmatprep.subr.mxu0 0.0
    %2308 = vmatpush1.xpose.msra.mxu0 0.0
    %2309 = vmatprep.subr.mxu0 0.0
    %2310 = vmatpush1.xpose.msra.mxu0 0.0
    %2311 = vmatprep.subr.mxu0 0.0
    %2312 = vmatpush1.xpose.msra.mxu0 0.0
    %2313 = vmatprep.subr.mxu0 0.0
    %2314 = vmatpush1.xpose.msra.mxu0 0.0
    %2315 = vmatprep.subr.mxu0 0.0
    %2316 = vmatpush1.xpose.msra.mxu0 0.0
    %2317 = vmatprep.subr.mxu0 0.0
    %2318 = vmatpush1.xpose.msra.mxu0 0.0
    %2319 = vmatprep.subr.mxu0 0.0
    %2320 = vmatpush1.xpose.msra.mxu0 %v2287
    %2321 = vmatprep.subr.mxu0 0.0
    %2322 = vmatpush2.xpose.msra.mxu0 0.0
    %2323 = vmatprep.subr.mxu0 0.0
    %2324 = vmatpush2.xpose.msra.mxu0 0.0
    %2325 = vmatprep.subr.mxu0 0.0
    %2326 = vmatpush2.xpose.msra.mxu0 0.0
    %2327 = vmatprep.subr.mxu0 0.0
    %2328 = vmatpush2.xpose.msra.mxu0 0.0
    %2329 = vmatprep.subr.mxu0 0.0
    %2330 = vmatpush2.xpose.msra.mxu0 0.0
    %2331 = vmatprep.subr.mxu0 0.0
    %2332 = vmatpush2.xpose.msra.mxu0 0.0
    %2333 = vmatprep.subr.mxu0 0.0
    %2334 = vmatpush2.xpose.msra.mxu0 0.0
    %2335 = vmatprep.subr.mxu0 0.0
    %2336 = vmatpush2.xpose.msra.mxu0 0.0
    %2337 = vmatprep.subr.mxu0 0.0
    %2338 = vmatpush2.xpose.msra.mxu0 0.0
    %2339 = vmatprep.subr.mxu0 0.0
    %2340 = vmatpush2.xpose.msra.mxu0 0.0
    %2341 = vmatprep.subr.mxu0 0.0
    %2342 = vmatpush2.xpose.msra.mxu0 0.0
    %2343 = vmatprep.subr.mxu0 0.0
    %2344 = vmatpush2.xpose.msra.mxu0 0.0
    %2345 = vmatprep.subr.mxu0 0.0
    %2346 = vmatpush2.xpose.msra.mxu0 0.0
    %2347 = vmatprep.subr.mxu0 0.0
    %2348 = vmatpush2.xpose.msra.mxu0 0.0
    %2349 = vmatprep.subr.mxu0 0.0
    %2350 = vmatpush2.xpose.msra.mxu0 0.0
    %2351 = vmatprep.subr.mxu0 0.0
    %2352 = vmatpush2.xpose.msra.mxu0 0.0
    %2353 = vmatprep.mubr.f32.mxu0 0.0
    %2354 = vmatmul.mubr.f32.gmra.mxu0 %v2284
    %v2355 = vpop.f32.mrf.mxu0
    %v2356 = vadd.f32 0.0, %v2355
    %v2357 = vpop.f32.mrf.mxu0
    %2358 = vdwg.mxu0
    %v2360 = vsel %vm349, %v2122, 0
    %v2363 = vsel %vm349, %v2201, 0
    %2365 = vmatprep.subr.mxu0 0.0
    %2366 = vmatpush1.xpose.msra.mxu0 0.0
    %2367 = vmatprep.subr.mxu0 0.0
    %2368 = vmatpush1.xpose.msra.mxu0 0.0
    %2369 = vmatprep.subr.mxu0 0.0
    %2370 = vmatpush1.xpose.msra.mxu0 0.0
    %2371 = vmatprep.subr.mxu0 0.0
    %2372 = vmatpush1.xpose.msra.mxu0 0.0
    %2373 = vmatprep.subr.mxu0 0.0
    %2374 = vmatpush1.xpose.msra.mxu0 0.0
    %2375 = vmatprep.subr.mxu0 0.0
    %2376 = vmatpush1.xpose.msra.mxu0 0.0
    %2377 = vmatprep.subr.mxu0 0.0
    %2378 = vmatpush1.xpose.msra.mxu0 0.0
    %2379 = vmatprep.subr.mxu0 0.0
    %2380 = vmatpush1.xpose.msra.mxu0 0.0
    %2381 = vmatprep.subr.mxu0 0.0
    %2382 = vmatpush1.xpose.msra.mxu0 0.0
    %2383 = vmatprep.subr.mxu0 0.0
    %2384 = vmatpush1.xpose.msra.mxu0 0.0
    %2385 = vmatprep.subr.mxu0 0.0
    %2386 = vmatpush1.xpose.msra.mxu0 0.0
    %2387 = vmatprep.subr.mxu0 0.0
    %2388 = vmatpush1.xpose.msra.mxu0 0.0
    %2389 = vmatprep.subr.mxu0 0.0
    %2390 = vmatpush1.xpose.msra.mxu0 0.0
    %2391 = vmatprep.subr.mxu0 0.0
    %2392 = vmatpush1.xpose.msra.mxu0 0.0
    %2393 = vmatprep.subr.mxu0 0.0
    %2394 = vmatpush1.xpose.msra.mxu0 0.0
    %2395 = vmatprep.subr.mxu0 0.0
    %2396 = vmatpush1.xpose.msra.mxu0 %v2363
    %2397 = vmatprep.subr.mxu0 0.0
    %2398 = vmatpush2.xpose.msra.mxu0 0.0
    %2399 = vmatprep.subr.mxu0 0.0
    %2400 = vmatpush2.xpose.msra.mxu0 0.0
    %2401 = vmatprep.subr.mxu0 0.0
    %2402 = vmatpush2.xpose.msra.mxu0 0.0
    %2403 = vmatprep.subr.mxu0 0.0
    %2404 = vmatpush2.xpose.msra.mxu0 0.0
    %2405 = vmatprep.subr.mxu0 0.0
    %2406 = vmatpush2.xpose.msra.mxu0 0.0
    %2407 = vmatprep.subr.mxu0 0.0
    %2408 = vmatpush2.xpose.msra.mxu0 0.0
    %2409 = vmatprep.subr.mxu0 0.0
    %2410 = vmatpush2.xpose.msra.mxu0 0.0
    %2411 = vmatprep.subr.mxu0 0.0
    %2412 = vmatpush2.xpose.msra.mxu0 0.0
    %2413 = vmatprep.subr.mxu0 0.0
    %2414 = vmatpush2.xpose.msra.mxu0 0.0
    %2415 = vmatprep.subr.mxu0 0.0
    %2416 = vmatpush2.xpose.msra.mxu0 0.0
    %2417 = vmatprep.subr.mxu0 0.0
    %2418 = vmatpush2.xpose.msra.mxu0 0.0
    %2419 = vmatprep.subr.mxu0 0.0
    %2420 = vmatpush2.xpose.msra.mxu0 0.0
    %2421 = vmatprep.subr.mxu0 0.0
    %2422 = vmatpush2.xpose.msra.mxu0 0.0
    %2423 = vmatprep.subr.mxu0 0.0
    %2424 = vmatpush2.xpose.msra.mxu0 0.0
    %2425 = vmatprep.subr.mxu0 0.0
    %2426 = vmatpush2.xpose.msra.mxu0 0.0
    %2427 = vmatprep.subr.mxu0 0.0
    %2428 = vmatpush2.xpose.msra.mxu0 0.0
    %2429 = vmatprep.mubr.f32.mxu0 0.0
    %2430 = vmatmul.mubr.f32.gmra.mxu0 %v2360
    %v2431 = vpop.f32.mrf.mxu0
    %v2432 = vadd.f32 0.0, %v2431
    %v2433 = vpop.f32.mrf.mxu0
    %2434 = vdwg.mxu0
    %v2435 = vmul.f32 %v2356, 0.25
    %v2436 = vmul.f32 %v2432, 0.25
    %v2437 = vadd.f32 %v2435, %v38
    %v2438 = vadd.f32 %v2436, %v39
    %v2439 = vsel %vm506, %v2437, -inf
    %2440 = vmax.xlane.f32.xlu0 %v2439
    %v2441 = vpop.xlane.xlu0 %2440
    %v2442 = vsel %vm506, %v2438, -inf
    %2443 = vmax.xlane.f32.xlu0 %v2442
    %v2444 = vpop.xlane.xlu0 %2443
    %v2445 = vsub.f32 %v2437, %v2441
    %v2446 = vsub.f32 %v2438, %v2444
    %v2447 = vmul.f32 %v2445, 1.442695
    %v2448 = vpow.pop %v2447
    %v2449 = vmul.f32 %v2446, 1.442695
    %v2450 = vpow.pop %v2449
    %v2451 = vsel %vm506, %v2448, 0.0
    %2452 = vadd.xlane.f32.xlu0 %v2451
    %v2453 = vpop.xlane.xlu0 %2452
    %v2454 = vsel %vm506, %v2450, 0.0
    %2455 = vadd.xlane.f32.xlu0 %v2454
    %v2456 = vpop.xlane.xlu0 %2455
    %v2457 = vrcp.pop %v2453
    %v2458 = vrcp.pop %v2456
    %v2459 = vmul.f32 %v2448, %v2457
    %v2460 = vmul.f32 %v2450, %v2458
    %v2462 = vsel %vm506, %v2459, 0
    %2464 = vmatprep.subr.mxu0 0.0
    %2465 = vmatpush1.msra.mxu0 0.0
    %2466 = vmatprep.subr.mxu0 0.0
    %2467 = vmatpush1.msra.mxu0 0.0
    %2468 = vmatprep.subr.mxu0 0.0
    %2469 = vmatpush1.msra.mxu0 0.0
    %2470 = vmatprep.subr.mxu0 0.0
    %2471 = vmatpush1.msra.mxu0 0.0
    %2472 = vmatprep.subr.mxu0 0.0
    %2473 = vmatpush1.msra.mxu0 0.0
    %2474 = vmatprep.subr.mxu0 0.0
    %2475 = vmatpush1.msra.mxu0 0.0
    %2476 = vmatprep.subr.mxu0 0.0
    %2477 = vmatpush1.msra.mxu0 0.0
    %2478 = vmatprep.subr.mxu0 0.0
    %2479 = vmatpush1.msra.mxu0 0.0
    %2480 = vmatprep.subr.mxu0 0.0
    %2481 = vmatpush1.msra.mxu0 0.0
    %2482 = vmatprep.subr.mxu0 0.0
    %2483 = vmatpush1.msra.mxu0 0.0
    %2484 = vmatprep.subr.mxu0 0.0
    %2485 = vmatpush1.msra.mxu0 0.0
    %2486 = vmatprep.subr.mxu0 0.0
    %2487 = vmatpush1.msra.mxu0 0.0
    %2488 = vmatprep.subr.mxu0 0.0
    %2489 = vmatpush1.msra.mxu0 0.0
    %2490 = vmatprep.subr.mxu0 0.0
    %2491 = vmatpush1.msra.mxu0 0.0
    %2492 = vmatprep.subr.mxu0 0.0
    %2493 = vmatpush1.msra.mxu0 0.0
    %2494 = vmatprep.subr.mxu0 0.0
    %2495 = vmatpush1.msra.mxu0 %v2275
    %2496 = vmatprep.subr.mxu0 0.0
    %2497 = vmatpush2.msra.mxu0 0.0
    %2498 = vmatprep.subr.mxu0 0.0
    %2499 = vmatpush2.msra.mxu0 0.0
    %2500 = vmatprep.subr.mxu0 0.0
    %2501 = vmatpush2.msra.mxu0 0.0
    %2502 = vmatprep.subr.mxu0 0.0
    %2503 = vmatpush2.msra.mxu0 0.0
    %2504 = vmatprep.subr.mxu0 0.0
    %2505 = vmatpush2.msra.mxu0 0.0
    %2506 = vmatprep.subr.mxu0 0.0
    %2507 = vmatpush2.msra.mxu0 0.0
    %2508 = vmatprep.subr.mxu0 0.0
    %2509 = vmatpush2.msra.mxu0 0.0
    %2510 = vmatprep.subr.mxu0 0.0
    %2511 = vmatpush2.msra.mxu0 0.0
    %2512 = vmatprep.subr.mxu0 0.0
    %2513 = vmatpush2.msra.mxu0 0.0
    %2514 = vmatprep.subr.mxu0 0.0
    %2515 = vmatpush2.msra.mxu0 0.0
    %2516 = vmatprep.subr.mxu0 0.0
    %2517 = vmatpush2.msra.mxu0 0.0
    %2518 = vmatprep.subr.mxu0 0.0
    %2519 = vmatpush2.msra.mxu0 0.0
    %2520 = vmatprep.subr.mxu0 0.0
    %2521 = vmatpush2.msra.mxu0 0.0
    %2522 = vmatprep.subr.mxu0 0.0
    %2523 = vmatpush2.msra.mxu0 0.0
    %2524 = vmatprep.subr.mxu0 0.0
    %2525 = vmatpush2.msra.mxu0 0.0
    %2526 = vmatprep.subr.mxu0 0.0
    %2527 = vmatpush2.msra.mxu0 0.0
    %2528 = vmatprep.mubr.f32.mxu0 0.0
    %2529 = vmatmul.mubr.f32.gmra.mxu0 %v2462
    %v2530 = vpop.f32.mrf.mxu0
    %v2531 = vadd.f32 0.0, %v2530
    %v2532 = vpop.f32.mrf.mxu0
    %2533 = vdwg.mxu0
    %v2535 = vsel %vm506, %v2460, 0
    %2537 = vmatprep.subr.mxu0 0.0
    %2538 = vmatpush1.msra.mxu0 0.0
    %2539 = vmatprep.subr.mxu0 0.0
    %2540 = vmatpush1.msra.mxu0 0.0
    %2541 = vmatprep.subr.mxu0 0.0
    %2542 = vmatpush1.msra.mxu0 0.0
    %2543 = vmatprep.subr.mxu0 0.0
    %2544 = vmatpush1.msra.mxu0 0.0
    %2545 = vmatprep.subr.mxu0 0.0
    %2546 = vmatpush1.msra.mxu0 0.0
    %2547 = vmatprep.subr.mxu0 0.0
    %2548 = vmatpush1.msra.mxu0 0.0
    %2549 = vmatprep.subr.mxu0 0.0
    %2550 = vmatpush1.msra.mxu0 0.0
    %2551 = vmatprep.subr.mxu0 0.0
    %2552 = vmatpush1.msra.mxu0 0.0
    %2553 = vmatprep.subr.mxu0 0.0
    %2554 = vmatpush1.msra.mxu0 0.0
    %2555 = vmatprep.subr.mxu0 0.0
    %2556 = vmatpush1.msra.mxu0 0.0
    %2557 = vmatprep.subr.mxu0 0.0
    %2558 = vmatpush1.msra.mxu0 0.0
    %2559 = vmatprep.subr.mxu0 0.0
    %2560 = vmatpush1.msra.mxu0 0.0
    %2561 = vmatprep.subr.mxu0 0.0
    %2562 = vmatpush1.msra.mxu0 0.0
    %2563 = vmatprep.subr.mxu0 0.0
    %2564 = vmatpush1.msra.mxu0 0.0
    %2565 = vmatprep.subr.mxu0 0.0
    %2566 = vmatpush1.msra.mxu0 0.0
    %2567 = vmatprep.subr.mxu0 0.0
    %2568 = vmatpush1.msra.mxu0 %v2280
    %2569 = vmatprep.subr.mxu0 0.0
    %2570 = vmatpush2.msra.mxu0 0.0
    %2571 = vmatprep.subr.mxu0 0.0
    %2572 = vmatpush2.msra.mxu0 0.0
    %2573 = vmatprep.subr.mxu0 0.0
    %2574 = vmatpush2.msra.mxu0 0.0
    %2575 = vmatprep.subr.mxu0 0.0
    %2576 = vmatpush2.msra.mxu0 0.0
    %2577 = vmatprep.subr.mxu0 0.0
    %2578 = vmatpush2.msra.mxu0 0.0
    %2579 = vmatprep.subr.mxu0 0.0
    %2580 = vmatpush2.msra.mxu0 0.0
    %2581 = vmatprep.subr.mxu0 0.0
    %2582 = vmatpush2.msra.mxu0 0.0
    %2583 = vmatprep.subr.mxu0 0.0
    %2584 = vmatpush2.msra.mxu0 0.0
    %2585 = vmatprep.subr.mxu0 0.0
    %2586 = vmatpush2.msra.mxu0 0.0
    %2587 = vmatprep.subr.mxu0 0.0
    %2588 = vmatpush2.msra.mxu0 0.0
    %2589 = vmatprep.subr.mxu0 0.0
    %2590 = vmatpush2.msra.mxu0 0.0
    %2591 = vmatprep.subr.mxu0 0.0
    %2592 = vmatpush2.msra.mxu0 0.0
    %2593 = vmatprep.subr.mxu0 0.0
    %2594 = vmatpush2.msra.mxu0 0.0
    %2595 = vmatprep.subr.mxu0 0.0
    %2596 = vmatpush2.msra.mxu0 0.0
    %2597 = vmatprep.subr.mxu0 0.0
    %2598 = vmatpush2.msra.mxu0 0.0
    %2599 = vmatprep.subr.mxu0 0.0
    %2600 = vmatpush2.msra.mxu0 0.0
    %2601 = vmatprep.mubr.f32.mxu0 0.0
    %2602 = vmatmul.mubr.f32.gmra.mxu0 %v2535
    %v2603 = vpop.f32.mrf.mxu0
    %v2604 = vadd.f32 0.0, %v2603
    %v2605 = vpop.f32.mrf.mxu0
    %2606 = vdwg.mxu0
    %v2608 = vsel %vm349, %v2531, 0
    %v2611 = vsel %vm349, %v2604, 0
    %2613 = vmatprep.subr.mxu0 0.0
    %2614 = vmatpush1.msra.mxu0 0.0
    %2615 = vmatprep.subr.mxu0 0.0
    %2616 = vmatpush1.msra.mxu0 0.0
    %2617 = vmatprep.subr.mxu0 0.0
    %2618 = vmatpush1.msra.mxu0 0.0
    %2619 = vmatprep.subr.mxu0 0.0
    %2620 = vmatpush1.msra.mxu0 0.0
    %2621 = vmatprep.subr.mxu0 0.0
    %2622 = vmatpush1.msra.mxu0 0.0
    %2623 = vmatprep.subr.mxu0 0.0
    %2624 = vmatpush1.msra.mxu0 0.0
    %2625 = vmatprep.subr.mxu0 0.0
    %2626 = vmatpush1.msra.mxu0 0.0
    %2627 = vmatprep.subr.mxu0 0.0
    %2628 = vmatpush1.msra.mxu0 0.0
    %2629 = vmatprep.subr.mxu0 0.0
    %2630 = vmatpush1.msra.mxu0 0.0
    %2631 = vmatprep.subr.mxu0 0.0
    %2632 = vmatpush1.msra.mxu0 0.0
    %2633 = vmatprep.subr.mxu0 0.0
    %2634 = vmatpush1.msra.mxu0 0.0
    %2635 = vmatprep.subr.mxu0 0.0
    %2636 = vmatpush1.msra.mxu0 0.0
    %2637 = vmatprep.subr.mxu0 0.0
    %2638 = vmatpush1.msra.mxu0 0.0
    %2639 = vmatprep.subr.mxu0 0.0
    %2640 = vmatpush1.msra.mxu0 0.0
    %2641 = vmatprep.subr.mxu0 0.0
    %2642 = vmatpush1.msra.mxu0 %v97
    %2643 = vmatprep.subr.mxu0 0.0
    %2644 = vmatpush1.msra.mxu0 %v96
    %2645 = vmatprep.subr.mxu0 0.0
    %2646 = vmatpush2.msra.mxu0 0.0
    %2647 = vmatprep.subr.mxu0 0.0
    %2648 = vmatpush2.msra.mxu0 0.0
    %2649 = vmatprep.subr.mxu0 0.0
    %2650 = vmatpush2.msra.mxu0 0.0
    %2651 = vmatprep.subr.mxu0 0.0
    %2652 = vmatpush2.msra.mxu0 0.0
    %2653 = vmatprep.subr.mxu0 0.0
    %2654 = vmatpush2.msra.mxu0 0.0
    %2655 = vmatprep.subr.mxu0 0.0
    %2656 = vmatpush2.msra.mxu0 0.0
    %2657 = vmatprep.subr.mxu0 0.0
    %2658 = vmatpush2.msra.mxu0 0.0
    %2659 = vmatprep.subr.mxu0 0.0
    %2660 = vmatpush2.msra.mxu0 0.0
    %2661 = vmatprep.subr.mxu0 0.0
    %2662 = vmatpush2.msra.mxu0 0.0
    %2663 = vmatprep.subr.mxu0 0.0
    %2664 = vmatpush2.msra.mxu0 0.0
    %2665 = vmatprep.subr.mxu0 0.0
    %2666 = vmatpush2.msra.mxu0 0.0
    %2667 = vmatprep.subr.mxu0 0.0
    %2668 = vmatpush2.msra.mxu0 0.0
    %2669 = vmatprep.subr.mxu0 0.0
    %2670 = vmatpush2.msra.mxu0 0.0
    %2671 = vmatprep.subr.mxu0 0.0
    %2672 = vmatpush2.msra.mxu0 0.0
    %2673 = vmatprep.subr.mxu0 0.0
    %2674 = vmatpush2.msra.mxu0 0.0
    %2675 = vmatprep.subr.mxu0 0.0
    %2676 = vmatpush2.msra.mxu0 0.0
    %2677 = vmatprep.mubr.f32.mxu0 0.0
    %2678 = vmatmul.mubr.f32.gmra.mxu0 %v2608
    %v2679 = vpop.f32.mrf.mxu0
    %v2680 = vadd.f32 0.0, %v2679
    %v2681 = vpop.f32.mrf.mxu0
    %2682 = vmatprep.mubr.f32.mxu0 0.0
    %2683 = vmatmul.mubr.f32.gmra.mxu0 %v2611
    %v2684 = vpop.f32.mrf.mxu0
    %v2685 = vadd.f32 0.0, %v2684
    %v2686 = vpop.f32.mrf.mxu0
    %2687 = vdwg.mxu0
    %v2688 = vadd.f32 %v2044, %v2680
    %v2689 = vadd.f32 %v2045, %v2685
    %2690 = vst.msk [vmem:[#allocation4] sm:$0xff] %vm506, %v527
    %2691 = vst.msk [vmem:[#allocation4 + $0x8] sm:$0xff] %vm506, %v1171
    %2692 = vst.msk [vmem:[#allocation4 + $0x10] sm:$0xff] %vm506, %v1815
    %2693 = vst.msk [vmem:[#allocation4 + $0x18] sm:$0xff] %vm506, %v2459
    %2694 = vst.msk [vmem:[#allocation4 + $0x20] sm:$0xff] %vm506, %v528
    %2695 = vst.msk [vmem:[#allocation4 + $0x28] sm:$0xff] %vm506, %v1172
    %2696 = vst.msk [vmem:[#allocation4 + $0x30] sm:$0xff] %vm506, %v1816
    %2697 = vst.msk [vmem:[#allocation4 + $0x38] sm:$0xff] %vm506, %v2460
    %v2698 = vsel %vm109, %v2688, 0.0
    %2699 = vadd.xlane.f32.xlu0 %v2698
    %v2700 = vpop.xlane.xlu0 %2699
    %v2701 = vsel %vm109, %v2689, 0.0
    %2702 = vadd.xlane.f32.xlu0 %v2701
    %v2703 = vpop.xlane.xlu0 %2702
    %v2704 = vrcp.pop 32.0
    %v2705 = vmul.f32 %v2700, %v2704
    %v2706 = vmul.f32 %v2703, %v2704
    %v2707 = vsub.f32 %v2688, %v2705
    %v2708 = vsub.f32 %v2689, %v2706
    %v2709 = vmul.f32 %v2707, %v2707
    %v2710 = vmul.f32 %v2708, %v2708
    %v2711 = vsel %vm109, %v2709, 0.0
    %2712 = vadd.xlane.f32.xlu0 %v2711
    %v2713 = vpop.xlane.xlu0 %2712
    %v2714 = vsel %vm109, %v2710, 0.0
    %2715 = vadd.xlane.f32.xlu0 %v2714
    %v2716 = vpop.xlane.xlu0 %2715
    %v2717 = vmul.f32 %v2713, %v2704
    %v2718 = vmul.f32 %v2716, %v2704
    %v2719 = vadd.f32 %v2717, 1e-05
    %v2720 = vadd.f32 %v2718, 1e-05
    %v2721 = vrsqrt.pop %v2719
    %v2722 = vrsqrt.pop %v2720
    %v2723 = vmul.f32 %v2707, %v2721
    %v2724 = vmul.f32 %v2708, %v2722
    %v2725 = vlaneseq
    %v2726 = vshrl.u32 %v2725, 7
    %v2727 = vsub.s32 1, %v2726
    %v2728 = vrot.slane %v98, %v2727
    %v2729 = vmul.f32 %v2723, %v2728
    %v2730 = vmul.f32 %v2724, %v2728
    %v2731 = vlaneseq
    %v2732 = vshrl.u32 %v2731, 7
    %v2733 = vsub.s32 2, %v2732
    %v2734 = vrot.slane %v98, %v2733
    %v2735 = vadd.f32 %v2729, %v2734
    %v2736 = vadd.f32 %v2730, %v2734
    %v2737 = vld [vmem:[%s5] sm:$0xff]
    %v2738 = vld [vmem:[%s5 + $0x8] sm:$0xff]
    %v2739 = vld [vmem:[%s5 + $0x10] sm:$0xff]
    %v2740 = vld [vmem:[%s5 + $0x18] sm:$0xff]
    %v2741 = vld [vmem:[%s6] sm:$0x1]
    %v2743 = vlaneseq
    %v2744 = vshrl.u32 %v2743, 7
    %v2745 = vsub.s32 0, %v2744
    %v2746 = vrot.slane %v2741, %v2745
    %v2749 = vsel %vm109, %v2735, 0
    %v2752 = vsel %vm109, %v2736, 0
    %2754 = vmatprep.subr.mxu0 0.0
    %2755 = vmatpush1.msra.mxu0 0.0
    %2756 = vmatprep.subr.mxu0 0.0
    %2757 = vmatpush1.msra.mxu0 0.0
    %2758 = vmatprep.subr.mxu0 0.0
    %2759 = vmatpush1.msra.mxu0 0.0
    %2760 = vmatprep.subr.mxu0 0.0
    %2761 = vmatpush1.msra.mxu0 0.0
    %2762 = vmatprep.subr.mxu0 0.0
    %2763 = vmatpush1.msra.mxu0 0.0
    %2764 = vmatprep.subr.mxu0 0.0
    %2765 = vmatpush1.msra.mxu0 0.0
    %2766 = vmatprep.subr.mxu0 0.0
    %2767 = vmatpush1.msra.mxu0 0.0
    %2768 = vmatprep.subr.mxu0 0.0
    %2769 = vmatpush1.msra.mxu0 0.0
    %2770 = vmatprep.subr.mxu0 0.0
    %2771 = vmatpush1.msra.mxu0 0.0
    %2772 = vmatprep.subr.mxu0 0.0
    %2773 = vmatpush1.msra.mxu0 0.0
    %2774 = vmatprep.subr.mxu0 0.0
    %2775 = vmatpush1.msra.mxu0 0.0
    %2776 = vmatprep.subr.mxu0 0.0
    %2777 = vmatpush1.msra.mxu0 0.0
    %2778 = vmatprep.subr.mxu0 0.0
    %2779 = vmatpush1.msra.mxu0 %v2740
    %2780 = vmatprep.subr.mxu0 0.0
    %2781 = vmatpush1.msra.mxu0 %v2739
    %2782 = vmatprep.subr.mxu0 0.0
    %2783 = vmatpush1.msra.mxu0 %v2738
    %2784 = vmatprep.subr.mxu0 0.0
    %2785 = vmatpush1.msra.mxu0 %v2737
    %2786 = vmatprep.subr.mxu0 0.0
    %2787 = vmatpush2.msra.mxu0 0.0
    %2788 = vmatprep.subr.mxu0 0.0
    %2789 = vmatpush2.msra.mxu0 0.0
    %2790 = vmatprep.subr.mxu0 0.0
    %2791 = vmatpush2.msra.mxu0 0.0
    %2792 = vmatprep.subr.mxu0 0.0
    %2793 = vmatpush2.msra.mxu0 0.0
    %2794 = vmatprep.subr.mxu0 0.0
    %2795 = vmatpush2.msra.mxu0 0.0
    %2796 = vmatprep.subr.mxu0 0.0
    %2797 = vmatpush2.msra.mxu0 0.0
    %2798 = vmatprep.subr.mxu0 0.0
    %2799 = vmatpush2.msra.mxu0 0.0
    %2800 = vmatprep.subr.mxu0 0.0
    %2801 = vmatpush2.msra.mxu0 0.0
    %2802 = vmatprep.subr.mxu0 0.0
    %2803 = vmatpush2.msra.mxu0 0.0
    %2804 = vmatprep.subr.mxu0 0.0
    %2805 = vmatpush2.msra.mxu0 0.0
    %2806 = vmatprep.subr.mxu0 0.0
    %2807 = vmatpush2.msra.mxu0 0.0
    %2808 = vmatprep.subr.mxu0 0.0
    %2809 = vmatpush2.msra.mxu0 0.0
    %2810 = vmatprep.subr.mxu0 0.0
    %2811 = vmatpush2.msra.mxu0 0.0
    %2812 = vmatprep.subr.mxu0 0.0
    %2813 = vmatpush2.msra.mxu0 0.0
    %2814 = vmatprep.subr.mxu0 0.0
    %2815 = vmatpush2.msra.mxu0 0.0
    %2816 = vmatprep.subr.mxu0 0.0
    %2817 = vmatpush2.msra.mxu0 0.0
    %2818 = vmatprep.mubr.f32.mxu0 0.0
    %2819 = vmatmul.mubr.f32.gmra.mxu0 %v2749
    %v2820 = vpop.f32.mrf.mxu0
    %v2821 = vadd.f32 %v2746, %v2820
    %v2822 = vpop.f32.mrf.mxu0
    %2823 = vmatprep.mubr.f32.mxu0 0.0
    %2824 = vmatmul.mubr.f32.gmra.mxu0 %v2752
    %v2825 = vpop.f32.mrf.mxu0
    %v2826 = vadd.f32 %v2746, %v2825
    %v2827 = vpop.f32.mrf.mxu0
    %2828 = vdwg.mxu0
    %v2829 = vmax.f32 %v2821, 0.0
    %v2830 = vmax.f32 %v2826, 0.0
    %v2831 = vld [vmem:[%s7] sm:$0xff]
    %v2832 = vld [vmem:[%s7 + $0x8] sm:$0xff]
    %v2833 = vld [vmem:[%s7 + $0x10] sm:$0xff]
    %v2834 = vld [vmem:[%s7 + $0x18] sm:$0xff]
    %v2835 = vld [vmem:[%s7 + $0x20] sm:$0xff]
    %v2836 = vld [vmem:[%s7 + $0x28] sm:$0xff]
    %v2837 = vld [vmem:[%s7 + $0x30] sm:$0xff]
    %v2838 = vld [vmem:[%s7 + $0x38] sm:$0xff]
    %v2839 = vlaneseq
    %v2840 = vshrl.u32 %v2839, 7
    %v2841 = vsub.s32 3, %v2840
    %v2842 = vrot.slane %v98, %v2841
    %vm2843 = vcmask 523264
    %v2845 = vsel %vm2843, %v2829, 0
    %v2848 = vsel %vm2843, %v2830, 0
    %2850 = vmatprep.subr.mxu0 0.0
    %2851 = vmatpush1.msra.mxu0 0.0
    %2852 = vmatprep.subr.mxu0 0.0
    %2853 = vmatpush1.msra.mxu0 0.0
    %2854 = vmatprep.subr.mxu0 0.0
    %2855 = vmatpush1.msra.mxu0 0.0
    %2856 = vmatprep.subr.mxu0 0.0
    %2857 = vmatpush1.msra.mxu0 0.0
    %2858 = vmatprep.subr.mxu0 0.0
    %2859 = vmatpush1.msra.mxu0 0.0
    %2860 = vmatprep.subr.mxu0 0.0
    %2861 = vmatpush1.msra.mxu0 0.0
    %2862 = vmatprep.subr.mxu0 0.0
    %2863 = vmatpush1.msra.mxu0 0.0
    %2864 = vmatprep.subr.mxu0 0.0
    %2865 = vmatpush1.msra.mxu0 0.0
    %2866 = vmatprep.subr.mxu0 0.0
    %2867 = vmatpush1.msra.mxu0 %v2838
    %2868 = vmatprep.subr.mxu0 0.0
    %2869 = vmatpush1.msra.mxu0 %v2837
    %2870 = vmatprep.subr.mxu0 0.0
    %2871 = vmatpush1.msra.mxu0 %v2836
    %2872 = vmatprep.subr.mxu0 0.0
    %2873 = vmatpush1.msra.mxu0 %v2835
    %2874 = vmatprep.subr.mxu0 0.0
    %2875 = vmatpush1.msra.mxu0 %v2834
    %2876 = vmatprep.subr.mxu0 0.0
    %2877 = vmatpush1.msra.mxu0 %v2833
    %2878 = vmatprep.subr.mxu0 0.0
    %2879 = vmatpush1.msra.mxu0 %v2832
    %2880 = vmatprep.subr.mxu0 0.0
    %2881 = vmatpush1.msra.mxu0 %v2831
    %2882 = vmatprep.subr.mxu0 0.0
    %2883 = vmatpush2.msra.mxu0 0.0
    %2884 = vmatprep.subr.mxu0 0.0
    %2885 = vmatpush2.msra.mxu0 0.0
    %2886 = vmatprep.subr.mxu0 0.0
    %2887 = vmatpush2.msra.mxu0 0.0
    %2888 = vmatprep.subr.mxu0 0.0
    %2889 = vmatpush2.msra.mxu0 0.0
    %2890 = vmatprep.subr.mxu0 0.0
    %2891 = vmatpush2.msra.mxu0 0.0
    %2892 = vmatprep.subr.mxu0 0.0
    %2893 = vmatpush2.msra.mxu0 0.0
    %2894 = vmatprep.subr.mxu0 0.0
    %2895 = vmatpush2.msra.mxu0 0.0
    %2896 = vmatprep.subr.mxu0 0.0
    %2897 = vmatpush2.msra.mxu0 0.0
    %2898 = vmatprep.subr.mxu0 0.0
    %2899 = vmatpush2.msra.mxu0 0.0
    %2900 = vmatprep.subr.mxu0 0.0
    %2901 = vmatpush2.msra.mxu0 0.0
    %2902 = vmatprep.subr.mxu0 0.0
    %2903 = vmatpush2.msra.mxu0 0.0
    %2904 = vmatprep.subr.mxu0 0.0
    %2905 = vmatpush2.msra.mxu0 0.0
    %2906 = vmatprep.subr.mxu0 0.0
    %2907 = vmatpush2.msra.mxu0 0.0
    %2908 = vmatprep.subr.mxu0 0.0
    %2909 = vmatpush2.msra.mxu0 0.0
    %2910 = vmatprep.subr.mxu0 0.0
    %2911 = vmatpush2.msra.mxu0 0.0
    %2912 = vmatprep.subr.mxu0 0.0
    %2913 = vmatpush2.msra.mxu0 0.0
    %2914 = vmatprep.mubr.f32.mxu0 0.0
    %2915 = vmatmul.mubr.f32.gmra.mxu0 %v2845
    %v2916 = vpop.f32.mrf.mxu0
    %v2917 = vadd.f32 %v2842, %v2916
    %v2918 = vpop.f32.mrf.mxu0
    %2919 = vmatprep.mubr.f32.mxu0 0.0
    %2920 = vmatmul.mubr.f32.gmra.mxu0 %v2848
    %v2921 = vpop.f32.mrf.mxu0
    %v2922 = vadd.f32 %v2842, %v2921
    %v2923 = vpop.f32.mrf.mxu0
    %2924 = vdwg.mxu0
    %2925 = vst.msk [vmem:[#allocation2] sm:$0xff] %vm109, %v2917
    %2926 = vst.msk [vmem:[#allocation2 + $0x8] sm:$0xff] %vm109, %v2922
    // Predicated region
    $region38: #{tpu_custom_call.1} parent=1 // pred_check
      _
    $region39: #{tpu_custom_call.1} parent=1 // pred_check_branch
      %2928 = sbr.rel (0) target = $region41
    $region40: #{tpu_custom_call.1} parent=1 // pred_region
      %s2930 = ssub.s32 256, 256
      %2931 = vsyncadd [#allocation3], %s2930
      %s2932 = sshll.u32 [#allocation2], 4
      %s2933 = int_to_ptr.vmem [resolvable:$true] %s2932
      %2938 = dma.vmem_to_hbm [thread:$0]  %s2933, 256, %s9, [#allocation3], 128, 128, 8
    $region41: #{tpu_custom_call.1} parent=1 // pred_fallthru
      _
    // Predicated region
    $region42: #{tpu_custom_call.1} parent=1 // pred_check
      _
    $region43: #{tpu_custom_call.1} parent=1 // pred_check_branch
      %2940 = sbr.rel (0) target = $region45
    $region44: #{tpu_custom_call.1} parent=1 // pred_region
      %s2942 = ssub.s32 1024, 1024
      %2943 = vsyncadd [#allocation5], %s2942
      %s2944 = sshll.u32 [#allocation4], 4
      %s2945 = int_to_ptr.vmem [resolvable:$true] %s2944
      %2950 = dma.vmem_to_hbm [thread:$0]  %s2945, 1024, %s10, [#allocation5], 128, 128, 8
    $region45: #{tpu_custom_call.1} parent=1 // pred_fallthru
      _
    // Predicated region
    $region46: #{tpu_custom_call.1} parent=1 // pred_check
      _
    $region47: #{tpu_custom_call.1} parent=1 // pred_check_branch
      %2952 = sbr.rel (0) target = $region49
    $region48: #{tpu_custom_call.1} parent=1 // pred_region
      %2953 = dma.done [#allocation3], 256
    $region49: #{tpu_custom_call.1} parent=1 // pred_fallthru
      _
    // Predicated region
    $region50: #{tpu_custom_call.1} parent=1 // pred_check
      _
    $region51: #{tpu_custom_call.1} parent=1 // pred_check_branch
      %2955 = sbr.rel (0) target = $region53
    $region52: #{tpu_custom_call.1} parent=1 // pred_region
      %2956 = dma.done [#allocation5], 1024
    $region53: #{tpu_custom_call.1} parent=1 // pred_fallthru
      _
    %2957 = vsyncpa [#allocation3], 1
    %2958 = vsyncpa [#allocation5], 1

</llo_original>
